<compile_context>
chip_gen: v7x
topology: tpu7x:2x2x1
jax: 0.10.0
libtpu: 0.0.40
codegen_flags: <defaults>
</compile_context>

<pallas_src>
import math
import functools

import jax
import jax.numpy as jnp
from jax.experimental import pallas as pl
from jax.experimental.pallas import tpu as pltpu

# ----------------------------- model config ---------------------------------
VOCAB = 100
HIDDEN = 32
NUM_HEADS = 2
HEAD_DIM = HIDDEN // NUM_HEADS
INTERMEDIATE = 64
NUM_LAYERS = 2
MAX_SEQ = 8                 # power of two (block-diag mask uses shifts)
NUM_CLASSES = 3
PAD_CLASSES = 128           # lane-dense internal logits slab
LN_EPS = 1e-12
NEG_INF = -1e9

_LAYER_PARAM_ORDER = (
    "wq", "bq", "wk", "bk", "wv", "bv", "wo", "bo",
    "ln1_g", "ln1_b", "w1", "b1", "w2", "b2", "ln2_g", "ln2_b",
)
_BF16_WEIGHTS = {"wq", "wk", "wv", "wo", "w1", "w2"}


# ----------------------------- kernel helpers --------------------------------
def _ln(x, gamma, beta):
    mu = jnp.mean(x, axis=-1, keepdims=True)
    var = jnp.mean((x - mu) ** 2, axis=-1, keepdims=True)
    return (x - mu) * jax.lax.rsqrt(var + LN_EPS) * gamma + beta


def _softmax(s):
    m = jnp.max(s, axis=-1, keepdims=True)
    e = jnp.exp(s - m)
    return e * pl.reciprocal(jnp.sum(e, axis=-1, keepdims=True), approx=True)


def _mm(a, b):
    # bf16 MXU inputs, f32 accumulation.  Weights are pre-cast to bf16 on the
    # host, so .astype on them is a no-op; activation casts happen once here.
    return jnp.dot(a.astype(jnp.bfloat16), b.astype(jnp.bfloat16),
                   preferred_element_type=jnp.float32)


# ----------------------------- fused Pallas kernel ---------------------------
def _fused_forward_kernel(*refs, num_layers, num_heads, head_dim,
                          batch, seq, with_loss):
    if with_loss:
        ids_ref, labels_ref = refs[0], refs[1]
        tensor_refs = refs[2:-2]
        logits_ref, loss_ref = refs[-2], refs[-1]
    else:
        ids_ref, labels_ref = refs[0], None
        tensor_refs = refs[1:-1]
        logits_ref, loss_ref = refs[-1], None

    (mask_ref, word_ref, pos_ref, emb_g_ref, emb_b_ref,
     wq_ref, bq_ref, wk_ref, bk_ref, wv_ref, bv_ref, wo_ref, bo_ref,
     ln1g_ref, ln1b_ref, w1_ref, b1_ref, w2_ref, b2_ref, ln2g_ref, ln2b_ref,
     dense_w_ref, dense_b_ref, cls_w_ref, cls_b_ref) = tensor_refs

    n = batch * seq

    # ---- fused embedding: SMEM id -> VMEM table row gather, + pos(+type), LN.
    tok = jnp.concatenate([word_ref[ids_ref[t]] for t in range(n)], axis=0)  # (n,H)
    pos = jnp.concatenate([pos_ref[...]] * batch, axis=0)                    # (n,H)
    h = _ln(tok + pos, emb_g_ref[...], emb_b_ref[...])

    # ---- block-diagonal causal + key-padding additive bias, built in-kernel.
    seq_shift = seq.bit_length() - 1          # seq is a power of two (asserted)
    tok_r = jax.lax.broadcasted_iota(jnp.int32, (n, 1), 0)
    tok_c = jax.lax.broadcasted_iota(jnp.int32, (1, n), 1)
    allowed = jnp.logical_and(
        jnp.logical_and((tok_r >> seq_shift) == (tok_c >> seq_shift),   # same batch
                        tok_c <= tok_r),                                 # causal
        mask_ref[...] > 0)                                               # key padding
    bias = jnp.where(allowed, 0.0, NEG_INF)                              # (n,n) f32

    # ---- encoder layers (static unroll; all weights VMEM-resident) ----------
    for l in range(num_layers):
        h_bf = h.astype(jnp.bfloat16)          # single activation cast per layer
        attn = None
        for hd in range(num_heads):            # static, tiny head count
            cs = slice(hd * head_dim, (hd + 1) * head_dim)
            # per-head projections directly from statically sliced weight Refs
            q = _mm(h_bf, wq_ref[l, :, cs]) + bq_ref[l, :, cs]   # scale pre-folded
            k = _mm(h_bf, wk_ref[l, :, cs]) + bk_ref[l, :, cs]
            v = _mm(h_bf, wv_ref[l, :, cs]) + bv_ref[l, :, cs]
            # q @ k^T by contracting last dims (no explicit .T on values).
            # TODO(synk): verify with pl.lower_as_mlir that no vxpose is emitted.
            s = jax.lax.dot_general(
                q.astype(jnp.bfloat16), k.astype(jnp.bfloat16),
                dimension_numbers=(((1,), (1,)), ((), ())),
                preferred_element_type=jnp.float32) + bias
            p = _softmax(s)
            ctx = _mm(p, v)
            # per-head f32 accumulation through sliced wo rows (no lane concat)
            contrib = _mm(ctx, wo_ref[l, cs, :])
            attn = contrib if attn is None else attn + contrib
        attn = attn + bo_ref[l]
        h1 = _ln(h + attn, ln1g_ref[l], ln1b_ref[l])

        # TODO(synk): HF BERT uses exact (erf) GELU; tanh-approx GELU used here.
        ff = jax.nn.gelu(_mm(h1, w1_ref[l]) + b1_ref[l], approximate=True)
        ff = _mm(ff, w2_ref[l]) + b2_ref[l]
        h = _ln(h1 + ff, ln2g_ref[l], ln2b_ref[l])

    # ---- pooled head: rows 0, S, 2S, ... -------------------------------------
    # TODO(synk): switch to a strided/reshape row gather if batch grows (negligible at B=2).
    pooled = jnp.concatenate(
        [h[b * seq:b * seq + 1, :] for b in range(batch)], axis=0)
    act = jnp.tanh(_mm(pooled, dense_w_ref[...]) + dense_b_ref[...])
    # dropout = identity (eval mode)
    logits_pad = _mm(act, cls_w_ref[...]) + cls_b_ref[...]     # (B,128) slab, f32
    logits_ref[...] = logits_pad[:, :NUM_CLASSES]              # only (B,C) leaves

    # ---- fused CrossEntropyLoss (mean over batch) over the real classes ------
    if with_loss:
        lane = jax.lax.broadcasted_iota(jnp.int32, (batch, PAD_CLASSES), 1)
        valid = lane < NUM_CLASSES
        m = jnp.max(jnp.where(valid, logits_pad, -1e30), axis=-1, keepdims=True)
        e = jnp.where(valid, jnp.exp(logits_pad - m), 0.0)
        lse = m + jnp.log(jnp.sum(e, axis=-1, keepdims=True))
        logp = logits_pad - lse
        picked = jnp.zeros((1, 1), jnp.float32)
        for b in range(batch):
            sel = jnp.where(lane[b:b + 1, :] == labels_ref[b],
                            logp[b:b + 1, :], 0.0)
            picked = picked + jnp.sum(sel, axis=-1, keepdims=True)
        loss_ref[...] = -picked * (1.0 / batch)


# ----------------------------- pallas_call wrapper ----------------------------
def _full_spec(shape):
    # Whole-array block; index_map absorbs (grid idx, *scalar-prefetch refs).
    return pl.BlockSpec(shape, lambda *_, _nd=len(shape): (0,) * _nd)


def fused_forward_pallas(ids_flat, mask_row, packed, batch, seq, labels=None):
    with_loss = labels is not None
    kernel = functools.partial(
        _fused_forward_kernel, num_layers=NUM_LAYERS, num_heads=NUM_HEADS,
        head_dim=HEAD_DIM, batch=batch, seq=seq, with_loss=with_loss)

    tensor_inputs = (
        mask_row, packed["word_emb"], packed["pos_emb"],
        packed["emb_ln_g"], packed["emb_ln_b"],
        *[packed[name] for name in _LAYER_PARAM_ORDER],
        packed["dense_w"], packed["dense_b"],
        packed["cls_w_pad"], packed["cls_b_pad"])

    scalar_args = (ids_flat, labels) if with_loss else (ids_flat,)

    out_shape = [jax.ShapeDtypeStruct((batch, NUM_CLASSES), jnp.float32)]
    out_specs = [_full_spec((batch, NUM_CLASSES))]
    if with_loss:
        out_shape.append(jax.ShapeDtypeStruct((1, 1), jnp.float32))
        out_specs.append(_full_spec((1, 1)))

    # Advisory cost estimate so XLA can schedule the tiny glue around the call.
    n = batch * seq
    flops = NUM_LAYERS * (8 * n * HIDDEN * HIDDEN
                          + 4 * NUM_HEADS * n * n * HEAD_DIM
                          + 4 * n * HIDDEN * INTERMEDIATE)
    flops += 2 * batch * HIDDEN * (HIDDEN + PAD_CLASSES)
    transcendentals = (NUM_LAYERS * (NUM_HEADS * n * n + n * INTERMEDIATE)
                       + batch * (HIDDEN + PAD_CLASSES))
    bytes_accessed = (sum(int(a.size) * a.dtype.itemsize for a in tensor_inputs)
                      + (n + batch) * 4 + batch * NUM_CLASSES * 4 + 4)

    grid_spec = pltpu.PrefetchScalarGridSpec(
        num_scalar_prefetch=len(scalar_args),
        grid=(1,),
        in_specs=[_full_spec(a.shape) for a in tensor_inputs],
        out_specs=tuple(out_specs),
    )

    outs = pl.pallas_call(
        kernel,
        grid_spec=grid_spec,
        out_shape=tuple(out_shape),
        compiler_params=pltpu.CompilerParams(
            dimension_semantics=("arbitrary",)),
        cost_estimate=pl.CostEstimate(
            flops=int(flops), transcendentals=int(transcendentals),
            bytes_accessed=int(bytes_accessed)),
    )(*scalar_args, *tensor_inputs)

    if with_loss:
        logits, loss = outs
        return logits, loss
    (logits,) = outs
    return logits, None


# ----------------------------- parameters ------------------------------------
def init_params(key):
    def dense(k, fan_in, fan_out):
        return 0.02 * jax.random.normal(k, (fan_in, fan_out), jnp.float32)

    keys = iter(jax.random.split(key, 8 + NUM_LAYERS * 8))
    params = {
        "word_emb": 0.02 * jax.random.normal(next(keys), (VOCAB, HIDDEN), jnp.float32),
        "pos_emb": 0.02 * jax.random.normal(next(keys), (MAX_SEQ, HIDDEN), jnp.float32),
        "type_emb": 0.02 * jax.random.normal(next(keys), (2, HIDDEN), jnp.float32),
        "emb_ln_g": jnp.ones((1, HIDDEN), jnp.float32),
        "emb_ln_b": jnp.zeros((1, HIDDEN), jnp.float32),
        "layers": [],
        "dense_w": dense(next(keys), HIDDEN, HIDDEN),
        "dense_b": jnp.zeros((1, HIDDEN), jnp.float32),
        "cls_w": dense(next(keys), HIDDEN, NUM_CLASSES),
        "cls_b": jnp.zeros((1, NUM_CLASSES), jnp.float32),
    }
    for _ in range(NUM_LAYERS):
        layer = {
            "wq": dense(next(keys), HIDDEN, HIDDEN), "bq": jnp.zeros((1, HIDDEN), jnp.float32),
            "wk": dense(next(keys), HIDDEN, HIDDEN), "bk": jnp.zeros((1, HIDDEN), jnp.float32),
            "wv": dense(next(keys), HIDDEN, HIDDEN), "bv": jnp.zeros((1, HIDDEN), jnp.float32),
            "wo": dense(next(keys), HIDDEN, HIDDEN), "bo": jnp.zeros((1, HIDDEN), jnp.float32),
            "ln1_g": jnp.ones((1, HIDDEN), jnp.float32), "ln1_b": jnp.zeros((1, HIDDEN), jnp.float32),
            "w1": dense(next(keys), HIDDEN, INTERMEDIATE), "b1": jnp.zeros((1, INTERMEDIATE), jnp.float32),
            "w2": dense(next(keys), INTERMEDIATE, HIDDEN), "b2": jnp.zeros((1, HIDDEN), jnp.float32),
            "ln2_g": jnp.ones((1, HIDDEN), jnp.float32), "ln2_b": jnp.zeros((1, HIDDEN), jnp.float32),
        }
        params["layers"].append(layer)
    return params


def pack_params(params):
    """One-time host-side weight prep: stacking, bf16 pre-cast of matmul
    weights, 1/sqrt(d) folding into wq/bq, token-type-0 row folded into the
    positional table, padded lane-dense classifier, 3-D embedding table for
    dynamic leading-dim row gather inside the kernel."""
    scale = 1.0 / math.sqrt(HEAD_DIM)
    packed = {
        "word_emb": params["word_emb"].reshape(VOCAB, 1, HIDDEN),
        # token_type_ids are all zero in the reference usage -> fold type row.
        "pos_emb": params["pos_emb"] + params["type_emb"][0][None, :],
        "emb_ln_g": params["emb_ln_g"],
        "emb_ln_b": params["emb_ln_b"],
        "dense_w": params["dense_w"].astype(jnp.bfloat16),
        "dense_b": params["dense_b"],
        "cls_w_pad": jnp.zeros((HIDDEN, PAD_CLASSES), jnp.float32)
                        .at[:, :NUM_CLASSES].set(params["cls_w"]).astype(jnp.bfloat16),
        "cls_b_pad": jnp.zeros((1, PAD_CLASSES), jnp.float32)
                        .at[:, :NUM_CLASSES].set(params["cls_b"]),
    }
    for name in _LAYER_PARAM_ORDER:
        arr = jnp.stack([layer[name] for layer in params["layers"]])
        if name in ("wq", "bq"):
            arr = arr * scale                       # fold 1/sqrt(head_dim) once
        if name in _BF16_WEIGHTS:
            arr = arr.astype(jnp.bfloat16)
        packed[name] = arr
    return packed


# ----------------------------- forward (glue) ---------------------------------
def vefk_transformer_forward(packed, input_ids, attention_mask, labels=None):
    B, S = input_ids.shape
    assert S == MAX_SEQ and (S & (S - 1)) == 0, "seq must equal MAX_SEQ (power of two)"

    ids_flat = input_ids.reshape(B * S).astype(jnp.int32)       # -> SMEM (prefetch)
    mask_row = attention_mask.reshape(1, B * S).astype(jnp.int32)
    lab = None if labels is None else labels.astype(jnp.int32)  # -> SMEM (prefetch)

    logits, loss = fused_forward_pallas(ids_flat, mask_row, packed, B, S, lab)
    if labels is not None:
        return {"loss": loss[0, 0], "logits": logits}
    return {"logits": logits}


# ----------------------------- main -------------------------------------------
if __name__ == "__main__":
    key = jax.random.PRNGKey(0)
    pkey, ikey = jax.random.split(key)

    params = init_params(pkey)
    packed = pack_params(params)       # one-time host-side weight prep

    B, S = 2, MAX_SEQ
    input_ids = jax.random.randint(ikey, (B, S), 0, VOCAB, dtype=jnp.int32)
    attention_mask = jnp.array(
        [[1, 1, 1, 1, 1, 1, 1, 1],
         [1, 1, 1, 1, 1, 0, 0, 0]], dtype=jnp.int32)
    labels = jnp.array([0, 2], dtype=jnp.int32)

    fwd = jax.jit(vefk_transformer_forward)
    out = fwd(packed, input_ids, attention_mask, labels)
    jax.block_until_ready(out)

    assert out["logits"].shape == (B, NUM_CLASSES)
    assert out["loss"].shape == ()
    assert bool(jnp.all(jnp.isfinite(out["logits"])))
    assert bool(jnp.isfinite(out["loss"]))
    print("KERNEL_OK")
</pallas_src>

<mosaic_0001>
module attributes {stable_mosaic.version = 11 : i64} {
  func.func @_fused_forward_kernel(%arg0: i32, %arg1: memref<16xi32, #tpu.memory_space<smem>>, %arg2: memref<2xi32, #tpu.memory_space<smem>>, %arg3: memref<1x16xi32, #tpu.memory_space<vmem>>, %arg4: memref<100x1x32xf32, #tpu.memory_space<vmem>>, %arg5: memref<8x32xf32, #tpu.memory_space<vmem>>, %arg6: memref<1x32xf32, #tpu.memory_space<vmem>>, %arg7: memref<1x32xf32, #tpu.memory_space<vmem>>, %arg8: memref<2x32x32xbf16, #tpu.memory_space<vmem>>, %arg9: memref<2x1x32xf32, #tpu.memory_space<vmem>>, %arg10: memref<2x32x32xbf16, #tpu.memory_space<vmem>>, %arg11: memref<2x1x32xf32, #tpu.memory_space<vmem>>, %arg12: memref<2x32x32xbf16, #tpu.memory_space<vmem>>, %arg13: memref<2x1x32xf32, #tpu.memory_space<vmem>>, %arg14: memref<2x32x32xbf16, #tpu.memory_space<vmem>>, %arg15: memref<2x1x32xf32, #tpu.memory_space<vmem>>, %arg16: memref<2x1x32xf32, #tpu.memory_space<vmem>>, %arg17: memref<2x1x32xf32, #tpu.memory_space<vmem>>, %arg18: memref<2x32x64xbf16, #tpu.memory_space<vmem>>, %arg19: memref<2x1x64xf32, #tpu.memory_space<vmem>>, %arg20: memref<2x64x32xbf16, #tpu.memory_space<vmem>>, %arg21: memref<2x1x32xf32, #tpu.memory_space<vmem>>, %arg22: memref<2x1x32xf32, #tpu.memory_space<vmem>>, %arg23: memref<2x1x32xf32, #tpu.memory_space<vmem>>, %arg24: memref<32x32xbf16, #tpu.memory_space<vmem>>, %arg25: memref<1x32xf32, #tpu.memory_space<vmem>>, %arg26: memref<32x128xbf16, #tpu.memory_space<vmem>>, %arg27: memref<1x128xf32, #tpu.memory_space<vmem>>, %arg28: memref<2x3xf32, #tpu.memory_space<vmem>>, %arg29: memref<1x1xf32, #tpu.memory_space<vmem>>) attributes {dimension_semantics = [#tpu.dimension_semantics<arbitrary>], iteration_bounds = array<i64: 1>, scalar_prefetch = 2 : i64, scratch_operands = 0 : i64, tpu.core_type = #tpu.core_type<tc>, window_params = [{pipeline_mode = #tpu.pipeline_mode<synchronous>, transform_indices = @transform_0, window_bounds = array<i64: 1, 16>}, {pipeline_mode = #tpu.pipeline_mode<synchronous>, transform_indices = @transform_1, window_bounds = array<i64: 100, 1, 32>}, {pipeline_mode = #tpu.pipeline_mode<synchronous>, transform_indices = @transform_2, window_bounds = array<i64: 8, 32>}, {pipeline_mode = #tpu.pipeline_mode<synchronous>, transform_indices = @transform_3, window_bounds = array<i64: 1, 32>}, {pipeline_mode = #tpu.pipeline_mode<synchronous>, transform_indices = @transform_4, window_bounds = array<i64: 1, 32>}, {pipeline_mode = #tpu.pipeline_mode<synchronous>, transform_indices = @transform_5, window_bounds = array<i64: 2, 32, 32>}, {pipeline_mode = #tpu.pipeline_mode<synchronous>, transform_indices = @transform_6, window_bounds = array<i64: 2, 1, 32>}, {pipeline_mode = #tpu.pipeline_mode<synchronous>, transform_indices = @transform_7, window_bounds = array<i64: 2, 32, 32>}, {pipeline_mode = #tpu.pipeline_mode<synchronous>, transform_indices = @transform_8, window_bounds = array<i64: 2, 1, 32>}, {pipeline_mode = #tpu.pipeline_mode<synchronous>, transform_indices = @transform_9, window_bounds = array<i64: 2, 32, 32>}, {pipeline_mode = #tpu.pipeline_mode<synchronous>, transform_indices = @transform_10, window_bounds = array<i64: 2, 1, 32>}, {pipeline_mode = #tpu.pipeline_mode<synchronous>, transform_indices = @transform_11, window_bounds = array<i64: 2, 32, 32>}, {pipeline_mode = #tpu.pipeline_mode<synchronous>, transform_indices = @transform_12, window_bounds = array<i64: 2, 1, 32>}, {pipeline_mode = #tpu.pipeline_mode<synchronous>, transform_indices = @transform_13, window_bounds = array<i64: 2, 1, 32>}, {pipeline_mode = #tpu.pipeline_mode<synchronous>, transform_indices = @transform_14, window_bounds = array<i64: 2, 1, 32>}, {pipeline_mode = #tpu.pipeline_mode<synchronous>, transform_indices = @transform_15, window_bounds = array<i64: 2, 32, 64>}, {pipeline_mode = #tpu.pipeline_mode<synchronous>, transform_indices = @transform_16, window_bounds = array<i64: 2, 1, 64>}, {pipeline_mode = #tpu.pipeline_mode<synchronous>, transform_indices = @transform_17, window_bounds = array<i64: 2, 64, 32>}, {pipeline_mode = #tpu.pipeline_mode<synchronous>, transform_indices = @transform_18, window_bounds = array<i64: 2, 1, 32>}, {pipeline_mode = #tpu.pipeline_mode<synchronous>, transform_indices = @transform_19, window_bounds = array<i64: 2, 1, 32>}, {pipeline_mode = #tpu.pipeline_mode<synchronous>, transform_indices = @transform_20, window_bounds = array<i64: 2, 1, 32>}, {pipeline_mode = #tpu.pipeline_mode<synchronous>, transform_indices = @transform_21, window_bounds = array<i64: 32, 32>}, {pipeline_mode = #tpu.pipeline_mode<synchronous>, transform_indices = @transform_22, window_bounds = array<i64: 1, 32>}, {pipeline_mode = #tpu.pipeline_mode<synchronous>, transform_indices = @transform_23, window_bounds = array<i64: 32, 128>}, {pipeline_mode = #tpu.pipeline_mode<synchronous>, transform_indices = @transform_24, window_bounds = array<i64: 1, 128>}, {pipeline_mode = #tpu.pipeline_mode<synchronous>, transform_indices = @transform_25, window_bounds = array<i64: 2, 3>}, {pipeline_mode = #tpu.pipeline_mode<synchronous>, transform_indices = @transform_26, window_bounds = array<i64: 1, 1>}]} {
    %c0 = arith.constant 0 : index
    %0 = memref.load %arg1[%c0] : memref<16xi32, #tpu.memory_space<smem>>
    %1 = arith.index_cast %0 : i32 to index
    %c0_0 = arith.constant 0 : index
    %c0_1 = arith.constant 0 : index
    %2 = vector.load %arg4[%1, %c0_0, %c0_1] : memref<100x1x32xf32, #tpu.memory_space<vmem>>, vector<1x1x32xf32>
    %3 = vector.shape_cast %2 : vector<1x1x32xf32> to vector<1x32xf32>
    %c1 = arith.constant 1 : index
    %4 = memref.load %arg1[%c1] : memref<16xi32, #tpu.memory_space<smem>>
    %5 = arith.index_cast %4 : i32 to index
    %c0_2 = arith.constant 0 : index
    %c0_3 = arith.constant 0 : index
    %6 = vector.load %arg4[%5, %c0_2, %c0_3] : memref<100x1x32xf32, #tpu.memory_space<vmem>>, vector<1x1x32xf32>
    %7 = vector.shape_cast %6 : vector<1x1x32xf32> to vector<1x32xf32>
    %c2 = arith.constant 2 : index
    %8 = memref.load %arg1[%c2] : memref<16xi32, #tpu.memory_space<smem>>
    %9 = arith.index_cast %8 : i32 to index
    %c0_4 = arith.constant 0 : index
    %c0_5 = arith.constant 0 : index
    %10 = vector.load %arg4[%9, %c0_4, %c0_5] : memref<100x1x32xf32, #tpu.memory_space<vmem>>, vector<1x1x32xf32>
    %11 = vector.shape_cast %10 : vector<1x1x32xf32> to vector<1x32xf32>
    %c3 = arith.constant 3 : index
    %12 = memref.load %arg1[%c3] : memref<16xi32, #tpu.memory_space<smem>>
    %13 = arith.index_cast %12 : i32 to index
    %c0_6 = arith.constant 0 : index
    %c0_7 = arith.constant 0 : index
    %14 = vector.load %arg4[%13, %c0_6, %c0_7] : memref<100x1x32xf32, #tpu.memory_space<vmem>>, vector<1x1x32xf32>
    %15 = vector.shape_cast %14 : vector<1x1x32xf32> to vector<1x32xf32>
    %c4 = arith.constant 4 : index
    %16 = memref.load %arg1[%c4] : memref<16xi32, #tpu.memory_space<smem>>
    %17 = arith.index_cast %16 : i32 to index
    %c0_8 = arith.constant 0 : index
    %c0_9 = arith.constant 0 : index
    %18 = vector.load %arg4[%17, %c0_8, %c0_9] : memref<100x1x32xf32, #tpu.memory_space<vmem>>, vector<1x1x32xf32>
    %19 = vector.shape_cast %18 : vector<1x1x32xf32> to vector<1x32xf32>
    %c5 = arith.constant 5 : index
    %20 = memref.load %arg1[%c5] : memref<16xi32, #tpu.memory_space<smem>>
    %21 = arith.index_cast %20 : i32 to index
    %c0_10 = arith.constant 0 : index
    %c0_11 = arith.constant 0 : index
    %22 = vector.load %arg4[%21, %c0_10, %c0_11] : memref<100x1x32xf32, #tpu.memory_space<vmem>>, vector<1x1x32xf32>
    %23 = vector.shape_cast %22 : vector<1x1x32xf32> to vector<1x32xf32>
    %c6 = arith.constant 6 : index
    %24 = memref.load %arg1[%c6] : memref<16xi32, #tpu.memory_space<smem>>
    %25 = arith.index_cast %24 : i32 to index
    %c0_12 = arith.constant 0 : index
    %c0_13 = arith.constant 0 : index
    %26 = vector.load %arg4[%25, %c0_12, %c0_13] : memref<100x1x32xf32, #tpu.memory_space<vmem>>, vector<1x1x32xf32>
    %27 = vector.shape_cast %26 : vector<1x1x32xf32> to vector<1x32xf32>
    %c7 = arith.constant 7 : index
    %28 = memref.load %arg1[%c7] : memref<16xi32, #tpu.memory_space<smem>>
    %29 = arith.index_cast %28 : i32 to index
    %c0_14 = arith.constant 0 : index
    %c0_15 = arith.constant 0 : index
    %30 = vector.load %arg4[%29, %c0_14, %c0_15] : memref<100x1x32xf32, #tpu.memory_space<vmem>>, vector<1x1x32xf32>
    %31 = vector.shape_cast %30 : vector<1x1x32xf32> to vector<1x32xf32>
    %c8 = arith.constant 8 : index
    %32 = memref.load %arg1[%c8] : memref<16xi32, #tpu.memory_space<smem>>
    %33 = arith.index_cast %32 : i32 to index
    %c0_16 = arith.constant 0 : index
    %c0_17 = arith.constant 0 : index
    %34 = vector.load %arg4[%33, %c0_16, %c0_17] : memref<100x1x32xf32, #tpu.memory_space<vmem>>, vector<1x1x32xf32>
    %35 = vector.shape_cast %34 : vector<1x1x32xf32> to vector<1x32xf32>
    %c9 = arith.constant 9 : index
    %36 = memref.load %arg1[%c9] : memref<16xi32, #tpu.memory_space<smem>>
    %37 = arith.index_cast %36 : i32 to index
    %c0_18 = arith.constant 0 : index
    %c0_19 = arith.constant 0 : index
    %38 = vector.load %arg4[%37, %c0_18, %c0_19] : memref<100x1x32xf32, #tpu.memory_space<vmem>>, vector<1x1x32xf32>
    %39 = vector.shape_cast %38 : vector<1x1x32xf32> to vector<1x32xf32>
    %c10 = arith.constant 10 : index
    %40 = memref.load %arg1[%c10] : memref<16xi32, #tpu.memory_space<smem>>
    %41 = arith.index_cast %40 : i32 to index
    %c0_20 = arith.constant 0 : index
    %c0_21 = arith.constant 0 : index
    %42 = vector.load %arg4[%41, %c0_20, %c0_21] : memref<100x1x32xf32, #tpu.memory_space<vmem>>, vector<1x1x32xf32>
    %43 = vector.shape_cast %42 : vector<1x1x32xf32> to vector<1x32xf32>
    %c11 = arith.constant 11 : index
    %44 = memref.load %arg1[%c11] : memref<16xi32, #tpu.memory_space<smem>>
    %45 = arith.index_cast %44 : i32 to index
    %c0_22 = arith.constant 0 : index
    %c0_23 = arith.constant 0 : index
    %46 = vector.load %arg4[%45, %c0_22, %c0_23] : memref<100x1x32xf32, #tpu.memory_space<vmem>>, vector<1x1x32xf32>
    %47 = vector.shape_cast %46 : vector<1x1x32xf32> to vector<1x32xf32>
    %c12 = arith.constant 12 : index
    %48 = memref.load %arg1[%c12] : memref<16xi32, #tpu.memory_space<smem>>
    %49 = arith.index_cast %48 : i32 to index
    %c0_24 = arith.constant 0 : index
    %c0_25 = arith.constant 0 : index
    %50 = vector.load %arg4[%49, %c0_24, %c0_25] : memref<100x1x32xf32, #tpu.memory_space<vmem>>, vector<1x1x32xf32>
    %51 = vector.shape_cast %50 : vector<1x1x32xf32> to vector<1x32xf32>
    %c13 = arith.constant 13 : index
    %52 = memref.load %arg1[%c13] : memref<16xi32, #tpu.memory_space<smem>>
    %53 = arith.index_cast %52 : i32 to index
    %c0_26 = arith.constant 0 : index
    %c0_27 = arith.constant 0 : index
    %54 = vector.load %arg4[%53, %c0_26, %c0_27] : memref<100x1x32xf32, #tpu.memory_space<vmem>>, vector<1x1x32xf32>
    %55 = vector.shape_cast %54 : vector<1x1x32xf32> to vector<1x32xf32>
    %c14 = arith.constant 14 : index
    %56 = memref.load %arg1[%c14] : memref<16xi32, #tpu.memory_space<smem>>
    %57 = arith.index_cast %56 : i32 to index
    %c0_28 = arith.constant 0 : index
    %c0_29 = arith.constant 0 : index
    %58 = vector.load %arg4[%57, %c0_28, %c0_29] : memref<100x1x32xf32, #tpu.memory_space<vmem>>, vector<1x1x32xf32>
    %59 = vector.shape_cast %58 : vector<1x1x32xf32> to vector<1x32xf32>
    %c15 = arith.constant 15 : index
    %60 = memref.load %arg1[%c15] : memref<16xi32, #tpu.memory_space<smem>>
    %61 = arith.index_cast %60 : i32 to index
    %c0_30 = arith.constant 0 : index
    %c0_31 = arith.constant 0 : index
    %62 = vector.load %arg4[%61, %c0_30, %c0_31] : memref<100x1x32xf32, #tpu.memory_space<vmem>>, vector<1x1x32xf32>
    %63 = vector.shape_cast %62 : vector<1x1x32xf32> to vector<1x32xf32>
    %64 = tpu.concatenate %3, %7, %11, %15, %19, %23, %27, %31, %35, %39, %43, %47, %51, %55, %59, %63 in 0 : vector<1x32xf32>, vector<1x32xf32>, vector<1x32xf32>, vector<1x32xf32>, vector<1x32xf32>, vector<1x32xf32>, vector<1x32xf32>, vector<1x32xf32>, vector<1x32xf32>, vector<1x32xf32>, vector<1x32xf32>, vector<1x32xf32>, vector<1x32xf32>, vector<1x32xf32>, vector<1x32xf32>, vector<1x32xf32> -> vector<16x32xf32>
    %c0_32 = arith.constant 0 : index
    %c0_33 = arith.constant 0 : index
    %65 = vector.load %arg5[%c0_32, %c0_33] : memref<8x32xf32, #tpu.memory_space<vmem>>, vector<8x32xf32>
    %66 = tpu.concatenate %65, %65 in 0 : vector<8x32xf32>, vector<8x32xf32> -> vector<16x32xf32>
    %67 = arith.addf %64, %66 : vector<16x32xf32>
    %c0_34 = arith.constant 0 : index
    %c0_35 = arith.constant 0 : index
    %68 = vector.load %arg6[%c0_34, %c0_35] : memref<1x32xf32, #tpu.memory_space<vmem>>, vector<1x32xf32>
    %c0_36 = arith.constant 0 : index
    %c0_37 = arith.constant 0 : index
    %69 = vector.load %arg7[%c0_36, %c0_37] : memref<1x32xf32, #tpu.memory_space<vmem>>, vector<1x32xf32>
    %cst = arith.constant dense<0.000000e+00> : vector<16xf32>
    %70 = vector.multi_reduction <add>, %67, %cst [1] : vector<16x32xf32> to vector<16xf32>
    %71 = vector.shape_cast %70 : vector<16xf32> to vector<16x1xf32>
    %cst_38 = arith.constant 3.200000e+01 : f32
    %72 = vector.broadcast %cst_38 : f32 to vector<16x1xf32>
    %73 = arith.divf %71, %72 : vector<16x1xf32>
    %74 = vector.broadcast %73 : vector<16x1xf32> to vector<16x32xf32>
    %75 = arith.subf %67, %74 : vector<16x32xf32>
    %76 = arith.mulf %75, %75 : vector<16x32xf32>
    %cst_39 = arith.constant dense<0.000000e+00> : vector<16xf32>
    %77 = vector.multi_reduction <add>, %76, %cst_39 [1] : vector<16x32xf32> to vector<16xf32>
    %78 = vector.shape_cast %77 : vector<16xf32> to vector<16x1xf32>
    %cst_40 = arith.constant 3.200000e+01 : f32
    %79 = vector.broadcast %cst_40 : f32 to vector<16x1xf32>
    %80 = arith.divf %78, %79 : vector<16x1xf32>
    %81 = vector.broadcast %73 : vector<16x1xf32> to vector<16x32xf32>
    %82 = arith.subf %67, %81 : vector<16x32xf32>
    %cst_41 = arith.constant 9.99999996E-13 : f32
    %83 = vector.broadcast %cst_41 : f32 to vector<16x1xf32>
    %84 = arith.addf %80, %83 : vector<16x1xf32>
    %85 = math.rsqrt %84 : vector<16x1xf32>
    %86 = vector.broadcast %85 : vector<16x1xf32> to vector<16x32xf32>
    %87 = arith.mulf %82, %86 : vector<16x32xf32>
    %88 = vector.broadcast %68 : vector<1x32xf32> to vector<16x32xf32>
    %89 = arith.mulf %87, %88 : vector<16x32xf32>
    %90 = vector.broadcast %69 : vector<1x32xf32> to vector<16x32xf32>
    %91 = arith.addf %89, %90 : vector<16x32xf32>
    %92 = tpu.iota {dimensions = array<i32: 0>} : vector<16x1xi32>
    %93 = tpu.iota {dimensions = array<i32: 1>} : vector<1x16xi32>
    %c3_i32 = arith.constant 3 : i32
    %94 = vector.broadcast %c3_i32 : i32 to vector<16x1xi32>
    %95 = arith.shrsi %92, %94 : vector<16x1xi32>
    %c3_i32_42 = arith.constant 3 : i32
    %96 = vector.broadcast %c3_i32_42 : i32 to vector<1x16xi32>
    %97 = arith.shrsi %93, %96 : vector<1x16xi32>
    %98 = vector.broadcast %95 : vector<16x1xi32> to vector<16x16xi32>
    %99 = vector.broadcast %97 : vector<1x16xi32> to vector<16x16xi32>
    %100 = arith.cmpi eq, %98, %99 : vector<16x16xi32>
    %101 = vector.broadcast %93 : vector<1x16xi32> to vector<16x16xi32>
    %102 = vector.broadcast %92 : vector<16x1xi32> to vector<16x16xi32>
    %103 = arith.cmpi sle, %101, %102 : vector<16x16xi32>
    %104 = arith.andi %100, %103 : vector<16x16xi1>
    %c0_43 = arith.constant 0 : index
    %c0_44 = arith.constant 0 : index
    %105 = vector.load %arg3[%c0_43, %c0_44] : memref<1x16xi32, #tpu.memory_space<vmem>>, vector<1x16xi32>
    %c0_i32 = arith.constant 0 : i32
    %106 = vector.broadcast %c0_i32 : i32 to vector<1x16xi32>
    %107 = arith.cmpi sgt, %105, %106 : vector<1x16xi32>
    %108 = vector.broadcast %107 : vector<1x16xi1> to vector<16x16xi1>
    %109 = arith.andi %104, %108 : vector<16x16xi1>
    %cst_45 = arith.constant 0.000000e+00 : f32
    %cst_46 = arith.constant -1.000000e+09 : f32
    %110 = vector.broadcast %cst_45 : f32 to vector<16x16xf32>
    %111 = vector.broadcast %cst_46 : f32 to vector<16x16xf32>
    %112 = arith.select %109, %110, %111 : vector<16x16xi1>, vector<16x16xf32>
    %113 = arith.truncf %91 : vector<16x32xf32> to vector<16x32xbf16>
    %c0_47 = arith.constant 0 : index
    %c0_48 = arith.constant 0 : index
    %c0_49 = arith.constant 0 : index
    %114 = vector.load %arg8[%c0_47, %c0_48, %c0_49] : memref<2x32x32xbf16, #tpu.memory_space<vmem>>, vector<1x32x16xbf16>
    %115 = vector.shape_cast %114 : vector<1x32x16xbf16> to vector<32x16xbf16>
    %cst_50 = arith.constant dense<0.000000e+00> : vector<16x16xf32>
    %116 = tpu.matmul %113, %115, %cst_50 {dimension_numbers = #tpu.dot_dimension_numbers<[1], [0], [0], [1], [0, 0, 1, 1], [], []>} : vector<16x32xbf16>, vector<32x16xbf16>, vector<16x16xf32> -> vector<16x16xf32>
    %c0_51 = arith.constant 0 : index
    %c0_52 = arith.constant 0 : index
    %c0_53 = arith.constant 0 : index
    %117 = vector.load %arg9[%c0_51, %c0_52, %c0_53] : memref<2x1x32xf32, #tpu.memory_space<vmem>>, vector<1x1x16xf32>
    %118 = vector.shape_cast %117 : vector<1x1x16xf32> to vector<1x16xf32>
    %119 = vector.broadcast %118 : vector<1x16xf32> to vector<16x16xf32>
    %120 = arith.addf %116, %119 : vector<16x16xf32>
    %c0_54 = arith.constant 0 : index
    %c0_55 = arith.constant 0 : index
    %c0_56 = arith.constant 0 : index
    %121 = vector.load %arg10[%c0_54, %c0_55, %c0_56] : memref<2x32x32xbf16, #tpu.memory_space<vmem>>, vector<1x32x16xbf16>
    %122 = vector.shape_cast %121 : vector<1x32x16xbf16> to vector<32x16xbf16>
    %cst_57 = arith.constant dense<0.000000e+00> : vector<16x16xf32>
    %123 = tpu.matmul %113, %122, %cst_57 {dimension_numbers = #tpu.dot_dimension_numbers<[1], [0], [0], [1], [0, 0, 1, 1], [], []>} : vector<16x32xbf16>, vector<32x16xbf16>, vector<16x16xf32> -> vector<16x16xf32>
    %c0_58 = arith.constant 0 : index
    %c0_59 = arith.constant 0 : index
    %c0_60 = arith.constant 0 : index
    %124 = vector.load %arg11[%c0_58, %c0_59, %c0_60] : memref<2x1x32xf32, #tpu.memory_space<vmem>>, vector<1x1x16xf32>
    %125 = vector.shape_cast %124 : vector<1x1x16xf32> to vector<1x16xf32>
    %126 = vector.broadcast %125 : vector<1x16xf32> to vector<16x16xf32>
    %127 = arith.addf %123, %126 : vector<16x16xf32>
    %c0_61 = arith.constant 0 : index
    %c0_62 = arith.constant 0 : index
    %c0_63 = arith.constant 0 : index
    %128 = vector.load %arg12[%c0_61, %c0_62, %c0_63] : memref<2x32x32xbf16, #tpu.memory_space<vmem>>, vector<1x32x16xbf16>
    %129 = vector.shape_cast %128 : vector<1x32x16xbf16> to vector<32x16xbf16>
    %cst_64 = arith.constant dense<0.000000e+00> : vector<16x16xf32>
    %130 = tpu.matmul %113, %129, %cst_64 {dimension_numbers = #tpu.dot_dimension_numbers<[1], [0], [0], [1], [0, 0, 1, 1], [], []>} : vector<16x32xbf16>, vector<32x16xbf16>, vector<16x16xf32> -> vector<16x16xf32>
    %c0_65 = arith.constant 0 : index
    %c0_66 = arith.constant 0 : index
    %c0_67 = arith.constant 0 : index
    %131 = vector.load %arg13[%c0_65, %c0_66, %c0_67] : memref<2x1x32xf32, #tpu.memory_space<vmem>>, vector<1x1x16xf32>
    %132 = vector.shape_cast %131 : vector<1x1x16xf32> to vector<1x16xf32>
    %133 = vector.broadcast %132 : vector<1x16xf32> to vector<16x16xf32>
    %134 = arith.addf %130, %133 : vector<16x16xf32>
    %135 = arith.truncf %120 : vector<16x16xf32> to vector<16x16xbf16>
    %136 = arith.truncf %127 : vector<16x16xf32> to vector<16x16xbf16>
    %cst_68 = arith.constant dense<0.000000e+00> : vector<16x16xf32>
    %137 = tpu.matmul %135, %136, %cst_68 {dimension_numbers = #tpu.dot_dimension_numbers<[1], [1], [0], [0], [0, 0, 1, 0], [], []>} : vector<16x16xbf16>, vector<16x16xbf16>, vector<16x16xf32> -> vector<16x16xf32>
    %138 = arith.addf %137, %112 : vector<16x16xf32>
    %cst_69 = arith.constant dense<0xFF800000> : vector<16xf32>
    %139 = vector.multi_reduction <maximumf>, %138, %cst_69 [1] : vector<16x16xf32> to vector<16xf32>
    %140 = vector.shape_cast %139 : vector<16xf32> to vector<16x1xf32>
    %141 = vector.broadcast %140 : vector<16x1xf32> to vector<16x16xf32>
    %142 = arith.subf %138, %141 : vector<16x16xf32>
    %143 = math.exp %142 : vector<16x16xf32>
    %cst_70 = arith.constant dense<0.000000e+00> : vector<16xf32>
    %144 = vector.multi_reduction <add>, %143, %cst_70 [1] : vector<16x16xf32> to vector<16xf32>
    %145 = vector.shape_cast %144 : vector<16xf32> to vector<16x1xf32>
    %146 = tpu.reciprocal %145 {approx = true} : vector<16x1xf32> -> vector<16x1xf32>
    %147 = vector.broadcast %146 : vector<16x1xf32> to vector<16x16xf32>
    %148 = arith.mulf %143, %147 : vector<16x16xf32>
    %149 = arith.truncf %148 : vector<16x16xf32> to vector<16x16xbf16>
    %150 = arith.truncf %134 : vector<16x16xf32> to vector<16x16xbf16>
    %cst_71 = arith.constant dense<0.000000e+00> : vector<16x16xf32>
    %151 = tpu.matmul %149, %150, %cst_71 {dimension_numbers = #tpu.dot_dimension_numbers<[1], [0], [0], [1], [0, 0, 1, 1], [], []>} : vector<16x16xbf16>, vector<16x16xbf16>, vector<16x16xf32> -> vector<16x16xf32>
    %c0_72 = arith.constant 0 : index
    %c0_73 = arith.constant 0 : index
    %c0_74 = arith.constant 0 : index
    %152 = vector.load %arg14[%c0_72, %c0_73, %c0_74] : memref<2x32x32xbf16, #tpu.memory_space<vmem>>, vector<1x16x32xbf16>
    %153 = vector.shape_cast %152 : vector<1x16x32xbf16> to vector<16x32xbf16>
    %154 = arith.truncf %151 : vector<16x16xf32> to vector<16x16xbf16>
    %cst_75 = arith.constant dense<0.000000e+00> : vector<16x32xf32>
    %155 = tpu.matmul %154, %153, %cst_75 {dimension_numbers = #tpu.dot_dimension_numbers<[1], [0], [0], [1], [0, 0, 1, 1], [], []>} : vector<16x16xbf16>, vector<16x32xbf16>, vector<16x32xf32> -> vector<16x32xf32>
    %c0_76 = arith.constant 0 : index
    %c0_77 = arith.constant 0 : index
    %c16 = arith.constant 16 : index
    %156 = vector.load %arg8[%c0_76, %c0_77, %c16] : memref<2x32x32xbf16, #tpu.memory_space<vmem>>, vector<1x32x16xbf16>
    %157 = vector.shape_cast %156 : vector<1x32x16xbf16> to vector<32x16xbf16>
    %cst_78 = arith.constant dense<0.000000e+00> : vector<16x16xf32>
    %158 = tpu.matmul %113, %157, %cst_78 {dimension_numbers = #tpu.dot_dimension_numbers<[1], [0], [0], [1], [0, 0, 1, 1], [], []>} : vector<16x32xbf16>, vector<32x16xbf16>, vector<16x16xf32> -> vector<16x16xf32>
    %c0_79 = arith.constant 0 : index
    %c0_80 = arith.constant 0 : index
    %c16_81 = arith.constant 16 : index
    %159 = vector.load %arg9[%c0_79, %c0_80, %c16_81] : memref<2x1x32xf32, #tpu.memory_space<vmem>>, vector<1x1x16xf32>
    %160 = vector.shape_cast %159 : vector<1x1x16xf32> to vector<1x16xf32>
    %161 = vector.broadcast %160 : vector<1x16xf32> to vector<16x16xf32>
    %162 = arith.addf %158, %161 : vector<16x16xf32>
    %c0_82 = arith.constant 0 : index
    %c0_83 = arith.constant 0 : index
    %c16_84 = arith.constant 16 : index
    %163 = vector.load %arg10[%c0_82, %c0_83, %c16_84] : memref<2x32x32xbf16, #tpu.memory_space<vmem>>, vector<1x32x16xbf16>
    %164 = vector.shape_cast %163 : vector<1x32x16xbf16> to vector<32x16xbf16>
    %cst_85 = arith.constant dense<0.000000e+00> : vector<16x16xf32>
    %165 = tpu.matmul %113, %164, %cst_85 {dimension_numbers = #tpu.dot_dimension_numbers<[1], [0], [0], [1], [0, 0, 1, 1], [], []>} : vector<16x32xbf16>, vector<32x16xbf16>, vector<16x16xf32> -> vector<16x16xf32>
    %c0_86 = arith.constant 0 : index
    %c0_87 = arith.constant 0 : index
    %c16_88 = arith.constant 16 : index
    %166 = vector.load %arg11[%c0_86, %c0_87, %c16_88] : memref<2x1x32xf32, #tpu.memory_space<vmem>>, vector<1x1x16xf32>
    %167 = vector.shape_cast %166 : vector<1x1x16xf32> to vector<1x16xf32>
    %168 = vector.broadcast %167 : vector<1x16xf32> to vector<16x16xf32>
    %169 = arith.addf %165, %168 : vector<16x16xf32>
    %c0_89 = arith.constant 0 : index
    %c0_90 = arith.constant 0 : index
    %c16_91 = arith.constant 16 : index
    %170 = vector.load %arg12[%c0_89, %c0_90, %c16_91] : memref<2x32x32xbf16, #tpu.memory_space<vmem>>, vector<1x32x16xbf16>
    %171 = vector.shape_cast %170 : vector<1x32x16xbf16> to vector<32x16xbf16>
    %cst_92 = arith.constant dense<0.000000e+00> : vector<16x16xf32>
    %172 = tpu.matmul %113, %171, %cst_92 {dimension_numbers = #tpu.dot_dimension_numbers<[1], [0], [0], [1], [0, 0, 1, 1], [], []>} : vector<16x32xbf16>, vector<32x16xbf16>, vector<16x16xf32> -> vector<16x16xf32>
    %c0_93 = arith.constant 0 : index
    %c0_94 = arith.constant 0 : index
    %c16_95 = arith.constant 16 : index
    %173 = vector.load %arg13[%c0_93, %c0_94, %c16_95] : memref<2x1x32xf32, #tpu.memory_space<vmem>>, vector<1x1x16xf32>
    %174 = vector.shape_cast %173 : vector<1x1x16xf32> to vector<1x16xf32>
    %175 = vector.broadcast %174 : vector<1x16xf32> to vector<16x16xf32>
    %176 = arith.addf %172, %175 : vector<16x16xf32>
    %177 = arith.truncf %162 : vector<16x16xf32> to vector<16x16xbf16>
    %178 = arith.truncf %169 : vector<16x16xf32> to vector<16x16xbf16>
    %cst_96 = arith.constant dense<0.000000e+00> : vector<16x16xf32>
    %179 = tpu.matmul %177, %178, %cst_96 {dimension_numbers = #tpu.dot_dimension_numbers<[1], [1], [0], [0], [0, 0, 1, 0], [], []>} : vector<16x16xbf16>, vector<16x16xbf16>, vector<16x16xf32> -> vector<16x16xf32>
    %180 = arith.addf %179, %112 : vector<16x16xf32>
    %cst_97 = arith.constant dense<0xFF800000> : vector<16xf32>
    %181 = vector.multi_reduction <maximumf>, %180, %cst_97 [1] : vector<16x16xf32> to vector<16xf32>
    %182 = vector.shape_cast %181 : vector<16xf32> to vector<16x1xf32>
    %183 = vector.broadcast %182 : vector<16x1xf32> to vector<16x16xf32>
    %184 = arith.subf %180, %183 : vector<16x16xf32>
    %185 = math.exp %184 : vector<16x16xf32>
    %cst_98 = arith.constant dense<0.000000e+00> : vector<16xf32>
    %186 = vector.multi_reduction <add>, %185, %cst_98 [1] : vector<16x16xf32> to vector<16xf32>
    %187 = vector.shape_cast %186 : vector<16xf32> to vector<16x1xf32>
    %188 = tpu.reciprocal %187 {approx = true} : vector<16x1xf32> -> vector<16x1xf32>
    %189 = vector.broadcast %188 : vector<16x1xf32> to vector<16x16xf32>
    %190 = arith.mulf %185, %189 : vector<16x16xf32>
    %191 = arith.truncf %190 : vector<16x16xf32> to vector<16x16xbf16>
    %192 = arith.truncf %176 : vector<16x16xf32> to vector<16x16xbf16>
    %cst_99 = arith.constant dense<0.000000e+00> : vector<16x16xf32>
    %193 = tpu.matmul %191, %192, %cst_99 {dimension_numbers = #tpu.dot_dimension_numbers<[1], [0], [0], [1], [0, 0, 1, 1], [], []>} : vector<16x16xbf16>, vector<16x16xbf16>, vector<16x16xf32> -> vector<16x16xf32>
    %c0_100 = arith.constant 0 : index
    %c16_101 = arith.constant 16 : index
    %c0_102 = arith.constant 0 : index
    %194 = vector.load %arg14[%c0_100, %c16_101, %c0_102] : memref<2x32x32xbf16, #tpu.memory_space<vmem>>, vector<1x16x32xbf16>
    %195 = vector.shape_cast %194 : vector<1x16x32xbf16> to vector<16x32xbf16>
    %196 = arith.truncf %193 : vector<16x16xf32> to vector<16x16xbf16>
    %cst_103 = arith.constant dense<0.000000e+00> : vector<16x32xf32>
    %197 = tpu.matmul %196, %195, %cst_103 {dimension_numbers = #tpu.dot_dimension_numbers<[1], [0], [0], [1], [0, 0, 1, 1], [], []>} : vector<16x16xbf16>, vector<16x32xbf16>, vector<16x32xf32> -> vector<16x32xf32>
    %198 = arith.addf %155, %197 : vector<16x32xf32>
    %c0_104 = arith.constant 0 : index
    %c0_105 = arith.constant 0 : index
    %c0_106 = arith.constant 0 : index
    %199 = vector.load %arg15[%c0_104, %c0_105, %c0_106] : memref<2x1x32xf32, #tpu.memory_space<vmem>>, vector<1x1x32xf32>
    %200 = vector.shape_cast %199 : vector<1x1x32xf32> to vector<1x32xf32>
    %201 = vector.broadcast %200 : vector<1x32xf32> to vector<16x32xf32>
    %202 = arith.addf %198, %201 : vector<16x32xf32>
    %203 = arith.addf %91, %202 : vector<16x32xf32>
    %c0_107 = arith.constant 0 : index
    %c0_108 = arith.constant 0 : index
    %c0_109 = arith.constant 0 : index
    %204 = vector.load %arg16[%c0_107, %c0_108, %c0_109] : memref<2x1x32xf32, #tpu.memory_space<vmem>>, vector<1x1x32xf32>
    %205 = vector.shape_cast %204 : vector<1x1x32xf32> to vector<1x32xf32>
    %c0_110 = arith.constant 0 : index
    %c0_111 = arith.constant 0 : index
    %c0_112 = arith.constant 0 : index
    %206 = vector.load %arg17[%c0_110, %c0_111, %c0_112] : memref<2x1x32xf32, #tpu.memory_space<vmem>>, vector<1x1x32xf32>
    %207 = vector.shape_cast %206 : vector<1x1x32xf32> to vector<1x32xf32>
    %cst_113 = arith.constant dense<0.000000e+00> : vector<16xf32>
    %208 = vector.multi_reduction <add>, %203, %cst_113 [1] : vector<16x32xf32> to vector<16xf32>
    %209 = vector.shape_cast %208 : vector<16xf32> to vector<16x1xf32>
    %cst_114 = arith.constant 3.200000e+01 : f32
    %210 = vector.broadcast %cst_114 : f32 to vector<16x1xf32>
    %211 = arith.divf %209, %210 : vector<16x1xf32>
    %212 = vector.broadcast %211 : vector<16x1xf32> to vector<16x32xf32>
    %213 = arith.subf %203, %212 : vector<16x32xf32>
    %214 = arith.mulf %213, %213 : vector<16x32xf32>
    %cst_115 = arith.constant dense<0.000000e+00> : vector<16xf32>
    %215 = vector.multi_reduction <add>, %214, %cst_115 [1] : vector<16x32xf32> to vector<16xf32>
    %216 = vector.shape_cast %215 : vector<16xf32> to vector<16x1xf32>
    %cst_116 = arith.constant 3.200000e+01 : f32
    %217 = vector.broadcast %cst_116 : f32 to vector<16x1xf32>
    %218 = arith.divf %216, %217 : vector<16x1xf32>
    %219 = vector.broadcast %211 : vector<16x1xf32> to vector<16x32xf32>
    %220 = arith.subf %203, %219 : vector<16x32xf32>
    %cst_117 = arith.constant 9.99999996E-13 : f32
    %221 = vector.broadcast %cst_117 : f32 to vector<16x1xf32>
    %222 = arith.addf %218, %221 : vector<16x1xf32>
    %223 = math.rsqrt %222 : vector<16x1xf32>
    %224 = vector.broadcast %223 : vector<16x1xf32> to vector<16x32xf32>
    %225 = arith.mulf %220, %224 : vector<16x32xf32>
    %226 = vector.broadcast %205 : vector<1x32xf32> to vector<16x32xf32>
    %227 = arith.mulf %225, %226 : vector<16x32xf32>
    %228 = vector.broadcast %207 : vector<1x32xf32> to vector<16x32xf32>
    %229 = arith.addf %227, %228 : vector<16x32xf32>
    %c0_118 = arith.constant 0 : index
    %c0_119 = arith.constant 0 : index
    %c0_120 = arith.constant 0 : index
    %230 = vector.load %arg18[%c0_118, %c0_119, %c0_120] : memref<2x32x64xbf16, #tpu.memory_space<vmem>>, vector<1x32x64xbf16>
    %231 = vector.shape_cast %230 : vector<1x32x64xbf16> to vector<32x64xbf16>
    %232 = arith.truncf %229 : vector<16x32xf32> to vector<16x32xbf16>
    %cst_121 = arith.constant dense<0.000000e+00> : vector<16x64xf32>
    %233 = tpu.matmul %232, %231, %cst_121 {dimension_numbers = #tpu.dot_dimension_numbers<[1], [0], [0], [1], [0, 0, 1, 1], [], []>} : vector<16x32xbf16>, vector<32x64xbf16>, vector<16x64xf32> -> vector<16x64xf32>
    %c0_122 = arith.constant 0 : index
    %c0_123 = arith.constant 0 : index
    %c0_124 = arith.constant 0 : index
    %234 = vector.load %arg19[%c0_122, %c0_123, %c0_124] : memref<2x1x64xf32, #tpu.memory_space<vmem>>, vector<1x1x64xf32>
    %235 = vector.shape_cast %234 : vector<1x1x64xf32> to vector<1x64xf32>
    %236 = vector.broadcast %235 : vector<1x64xf32> to vector<16x64xf32>
    %237 = arith.addf %233, %236 : vector<16x64xf32>
    %238 = arith.mulf %237, %237 : vector<16x64xf32>
    %239 = arith.mulf %237, %238 : vector<16x64xf32>
    %cst_125 = arith.constant 4.471500e-02 : f32
    %240 = vector.broadcast %cst_125 : f32 to vector<16x64xf32>
    %241 = arith.mulf %240, %239 : vector<16x64xf32>
    %242 = arith.addf %237, %241 : vector<16x64xf32>
    %cst_126 = arith.constant 0.797884583 : f32
    %243 = vector.broadcast %cst_126 : f32 to vector<16x64xf32>
    %244 = arith.mulf %243, %242 : vector<16x64xf32>
    %245 = math.tanh %244 : vector<16x64xf32>
    %cst_127 = arith.constant 1.000000e+00 : f32
    %246 = vector.broadcast %cst_127 : f32 to vector<16x64xf32>
    %247 = arith.addf %246, %245 : vector<16x64xf32>
    %cst_128 = arith.constant 5.000000e-01 : f32
    %248 = vector.broadcast %cst_128 : f32 to vector<16x64xf32>
    %249 = arith.mulf %248, %247 : vector<16x64xf32>
    %250 = arith.mulf %237, %249 : vector<16x64xf32>
    %c0_129 = arith.constant 0 : index
    %c0_130 = arith.constant 0 : index
    %c0_131 = arith.constant 0 : index
    %251 = vector.load %arg20[%c0_129, %c0_130, %c0_131] : memref<2x64x32xbf16, #tpu.memory_space<vmem>>, vector<1x64x32xbf16>
    %252 = vector.shape_cast %251 : vector<1x64x32xbf16> to vector<64x32xbf16>
    %253 = arith.truncf %250 : vector<16x64xf32> to vector<16x64xbf16>
    %cst_132 = arith.constant dense<0.000000e+00> : vector<16x32xf32>
    %254 = tpu.matmul %253, %252, %cst_132 {dimension_numbers = #tpu.dot_dimension_numbers<[1], [0], [0], [1], [0, 0, 1, 1], [], []>} : vector<16x64xbf16>, vector<64x32xbf16>, vector<16x32xf32> -> vector<16x32xf32>
    %c0_133 = arith.constant 0 : index
    %c0_134 = arith.constant 0 : index
    %c0_135 = arith.constant 0 : index
    %255 = vector.load %arg21[%c0_133, %c0_134, %c0_135] : memref<2x1x32xf32, #tpu.memory_space<vmem>>, vector<1x1x32xf32>
    %256 = vector.shape_cast %255 : vector<1x1x32xf32> to vector<1x32xf32>
    %257 = vector.broadcast %256 : vector<1x32xf32> to vector<16x32xf32>
    %258 = arith.addf %254, %257 : vector<16x32xf32>
    %259 = arith.addf %229, %258 : vector<16x32xf32>
    %c0_136 = arith.constant 0 : index
    %c0_137 = arith.constant 0 : index
    %c0_138 = arith.constant 0 : index
    %260 = vector.load %arg22[%c0_136, %c0_137, %c0_138] : memref<2x1x32xf32, #tpu.memory_space<vmem>>, vector<1x1x32xf32>
    %261 = vector.shape_cast %260 : vector<1x1x32xf32> to vector<1x32xf32>
    %c0_139 = arith.constant 0 : index
    %c0_140 = arith.constant 0 : index
    %c0_141 = arith.constant 0 : index
    %262 = vector.load %arg23[%c0_139, %c0_140, %c0_141] : memref<2x1x32xf32, #tpu.memory_space<vmem>>, vector<1x1x32xf32>
    %263 = vector.shape_cast %262 : vector<1x1x32xf32> to vector<1x32xf32>
    %cst_142 = arith.constant dense<0.000000e+00> : vector<16xf32>
    %264 = vector.multi_reduction <add>, %259, %cst_142 [1] : vector<16x32xf32> to vector<16xf32>
    %265 = vector.shape_cast %264 : vector<16xf32> to vector<16x1xf32>
    %cst_143 = arith.constant 3.200000e+01 : f32
    %266 = vector.broadcast %cst_143 : f32 to vector<16x1xf32>
    %267 = arith.divf %265, %266 : vector<16x1xf32>
    %268 = vector.broadcast %267 : vector<16x1xf32> to vector<16x32xf32>
    %269 = arith.subf %259, %268 : vector<16x32xf32>
    %270 = arith.mulf %269, %269 : vector<16x32xf32>
    %cst_144 = arith.constant dense<0.000000e+00> : vector<16xf32>
    %271 = vector.multi_reduction <add>, %270, %cst_144 [1] : vector<16x32xf32> to vector<16xf32>
    %272 = vector.shape_cast %271 : vector<16xf32> to vector<16x1xf32>
    %cst_145 = arith.constant 3.200000e+01 : f32
    %273 = vector.broadcast %cst_145 : f32 to vector<16x1xf32>
    %274 = arith.divf %272, %273 : vector<16x1xf32>
    %275 = vector.broadcast %267 : vector<16x1xf32> to vector<16x32xf32>
    %276 = arith.subf %259, %275 : vector<16x32xf32>
    %cst_146 = arith.constant 9.99999996E-13 : f32
    %277 = vector.broadcast %cst_146 : f32 to vector<16x1xf32>
    %278 = arith.addf %274, %277 : vector<16x1xf32>
    %279 = math.rsqrt %278 : vector<16x1xf32>
    %280 = vector.broadcast %279 : vector<16x1xf32> to vector<16x32xf32>
    %281 = arith.mulf %276, %280 : vector<16x32xf32>
    %282 = vector.broadcast %261 : vector<1x32xf32> to vector<16x32xf32>
    %283 = arith.mulf %281, %282 : vector<16x32xf32>
    %284 = vector.broadcast %263 : vector<1x32xf32> to vector<16x32xf32>
    %285 = arith.addf %283, %284 : vector<16x32xf32>
    %286 = arith.truncf %285 : vector<16x32xf32> to vector<16x32xbf16>
    %c1_147 = arith.constant 1 : index
    %c0_148 = arith.constant 0 : index
    %c0_149 = arith.constant 0 : index
    %287 = vector.load %arg8[%c1_147, %c0_148, %c0_149] : memref<2x32x32xbf16, #tpu.memory_space<vmem>>, vector<1x32x16xbf16>
    %288 = vector.shape_cast %287 : vector<1x32x16xbf16> to vector<32x16xbf16>
    %cst_150 = arith.constant dense<0.000000e+00> : vector<16x16xf32>
    %289 = tpu.matmul %286, %288, %cst_150 {dimension_numbers = #tpu.dot_dimension_numbers<[1], [0], [0], [1], [0, 0, 1, 1], [], []>} : vector<16x32xbf16>, vector<32x16xbf16>, vector<16x16xf32> -> vector<16x16xf32>
    %c1_151 = arith.constant 1 : index
    %c0_152 = arith.constant 0 : index
    %c0_153 = arith.constant 0 : index
    %290 = vector.load %arg9[%c1_151, %c0_152, %c0_153] : memref<2x1x32xf32, #tpu.memory_space<vmem>>, vector<1x1x16xf32>
    %291 = vector.shape_cast %290 : vector<1x1x16xf32> to vector<1x16xf32>
    %292 = vector.broadcast %291 : vector<1x16xf32> to vector<16x16xf32>
    %293 = arith.addf %289, %292 : vector<16x16xf32>
    %c1_154 = arith.constant 1 : index
    %c0_155 = arith.constant 0 : index
    %c0_156 = arith.constant 0 : index
    %294 = vector.load %arg10[%c1_154, %c0_155, %c0_156] : memref<2x32x32xbf16, #tpu.memory_space<vmem>>, vector<1x32x16xbf16>
    %295 = vector.shape_cast %294 : vector<1x32x16xbf16> to vector<32x16xbf16>
    %cst_157 = arith.constant dense<0.000000e+00> : vector<16x16xf32>
    %296 = tpu.matmul %286, %295, %cst_157 {dimension_numbers = #tpu.dot_dimension_numbers<[1], [0], [0], [1], [0, 0, 1, 1], [], []>} : vector<16x32xbf16>, vector<32x16xbf16>, vector<16x16xf32> -> vector<16x16xf32>
    %c1_158 = arith.constant 1 : index
    %c0_159 = arith.constant 0 : index
    %c0_160 = arith.constant 0 : index
    %297 = vector.load %arg11[%c1_158, %c0_159, %c0_160] : memref<2x1x32xf32, #tpu.memory_space<vmem>>, vector<1x1x16xf32>
    %298 = vector.shape_cast %297 : vector<1x1x16xf32> to vector<1x16xf32>
    %299 = vector.broadcast %298 : vector<1x16xf32> to vector<16x16xf32>
    %300 = arith.addf %296, %299 : vector<16x16xf32>
    %c1_161 = arith.constant 1 : index
    %c0_162 = arith.constant 0 : index
    %c0_163 = arith.constant 0 : index
    %301 = vector.load %arg12[%c1_161, %c0_162, %c0_163] : memref<2x32x32xbf16, #tpu.memory_space<vmem>>, vector<1x32x16xbf16>
    %302 = vector.shape_cast %301 : vector<1x32x16xbf16> to vector<32x16xbf16>
    %cst_164 = arith.constant dense<0.000000e+00> : vector<16x16xf32>
    %303 = tpu.matmul %286, %302, %cst_164 {dimension_numbers = #tpu.dot_dimension_numbers<[1], [0], [0], [1], [0, 0, 1, 1], [], []>} : vector<16x32xbf16>, vector<32x16xbf16>, vector<16x16xf32> -> vector<16x16xf32>
    %c1_165 = arith.constant 1 : index
    %c0_166 = arith.constant 0 : index
    %c0_167 = arith.constant 0 : index
    %304 = vector.load %arg13[%c1_165, %c0_166, %c0_167] : memref<2x1x32xf32, #tpu.memory_space<vmem>>, vector<1x1x16xf32>
    %305 = vector.shape_cast %304 : vector<1x1x16xf32> to vector<1x16xf32>
    %306 = vector.broadcast %305 : vector<1x16xf32> to vector<16x16xf32>
    %307 = arith.addf %303, %306 : vector<16x16xf32>
    %308 = arith.truncf %293 : vector<16x16xf32> to vector<16x16xbf16>
    %309 = arith.truncf %300 : vector<16x16xf32> to vector<16x16xbf16>
    %cst_168 = arith.constant dense<0.000000e+00> : vector<16x16xf32>
    %310 = tpu.matmul %308, %309, %cst_168 {dimension_numbers = #tpu.dot_dimension_numbers<[1], [1], [0], [0], [0, 0, 1, 0], [], []>} : vector<16x16xbf16>, vector<16x16xbf16>, vector<16x16xf32> -> vector<16x16xf32>
    %311 = arith.addf %310, %112 : vector<16x16xf32>
    %cst_169 = arith.constant dense<0xFF800000> : vector<16xf32>
    %312 = vector.multi_reduction <maximumf>, %311, %cst_169 [1] : vector<16x16xf32> to vector<16xf32>
    %313 = vector.shape_cast %312 : vector<16xf32> to vector<16x1xf32>
    %314 = vector.broadcast %313 : vector<16x1xf32> to vector<16x16xf32>
    %315 = arith.subf %311, %314 : vector<16x16xf32>
    %316 = math.exp %315 : vector<16x16xf32>
    %cst_170 = arith.constant dense<0.000000e+00> : vector<16xf32>
    %317 = vector.multi_reduction <add>, %316, %cst_170 [1] : vector<16x16xf32> to vector<16xf32>
    %318 = vector.shape_cast %317 : vector<16xf32> to vector<16x1xf32>
    %319 = tpu.reciprocal %318 {approx = true} : vector<16x1xf32> -> vector<16x1xf32>
    %320 = vector.broadcast %319 : vector<16x1xf32> to vector<16x16xf32>
    %321 = arith.mulf %316, %320 : vector<16x16xf32>
    %322 = arith.truncf %321 : vector<16x16xf32> to vector<16x16xbf16>
    %323 = arith.truncf %307 : vector<16x16xf32> to vector<16x16xbf16>
    %cst_171 = arith.constant dense<0.000000e+00> : vector<16x16xf32>
    %324 = tpu.matmul %322, %323, %cst_171 {dimension_numbers = #tpu.dot_dimension_numbers<[1], [0], [0], [1], [0, 0, 1, 1], [], []>} : vector<16x16xbf16>, vector<16x16xbf16>, vector<16x16xf32> -> vector<16x16xf32>
    %c1_172 = arith.constant 1 : index
    %c0_173 = arith.constant 0 : index
    %c0_174 = arith.constant 0 : index
    %325 = vector.load %arg14[%c1_172, %c0_173, %c0_174] : memref<2x32x32xbf16, #tpu.memory_space<vmem>>, vector<1x16x32xbf16>
    %326 = vector.shape_cast %325 : vector<1x16x32xbf16> to vector<16x32xbf16>
    %327 = arith.truncf %324 : vector<16x16xf32> to vector<16x16xbf16>
    %cst_175 = arith.constant dense<0.000000e+00> : vector<16x32xf32>
    %328 = tpu.matmul %327, %326, %cst_175 {dimension_numbers = #tpu.dot_dimension_numbers<[1], [0], [0], [1], [0, 0, 1, 1], [], []>} : vector<16x16xbf16>, vector<16x32xbf16>, vector<16x32xf32> -> vector<16x32xf32>
    %c1_176 = arith.constant 1 : index
    %c0_177 = arith.constant 0 : index
    %c16_178 = arith.constant 16 : index
    %329 = vector.load %arg8[%c1_176, %c0_177, %c16_178] : memref<2x32x32xbf16, #tpu.memory_space<vmem>>, vector<1x32x16xbf16>
    %330 = vector.shape_cast %329 : vector<1x32x16xbf16> to vector<32x16xbf16>
    %cst_179 = arith.constant dense<0.000000e+00> : vector<16x16xf32>
    %331 = tpu.matmul %286, %330, %cst_179 {dimension_numbers = #tpu.dot_dimension_numbers<[1], [0], [0], [1], [0, 0, 1, 1], [], []>} : vector<16x32xbf16>, vector<32x16xbf16>, vector<16x16xf32> -> vector<16x16xf32>
    %c1_180 = arith.constant 1 : index
    %c0_181 = arith.constant 0 : index
    %c16_182 = arith.constant 16 : index
    %332 = vector.load %arg9[%c1_180, %c0_181, %c16_182] : memref<2x1x32xf32, #tpu.memory_space<vmem>>, vector<1x1x16xf32>
    %333 = vector.shape_cast %332 : vector<1x1x16xf32> to vector<1x16xf32>
    %334 = vector.broadcast %333 : vector<1x16xf32> to vector<16x16xf32>
    %335 = arith.addf %331, %334 : vector<16x16xf32>
    %c1_183 = arith.constant 1 : index
    %c0_184 = arith.constant 0 : index
    %c16_185 = arith.constant 16 : index
    %336 = vector.load %arg10[%c1_183, %c0_184, %c16_185] : memref<2x32x32xbf16, #tpu.memory_space<vmem>>, vector<1x32x16xbf16>
    %337 = vector.shape_cast %336 : vector<1x32x16xbf16> to vector<32x16xbf16>
    %cst_186 = arith.constant dense<0.000000e+00> : vector<16x16xf32>
    %338 = tpu.matmul %286, %337, %cst_186 {dimension_numbers = #tpu.dot_dimension_numbers<[1], [0], [0], [1], [0, 0, 1, 1], [], []>} : vector<16x32xbf16>, vector<32x16xbf16>, vector<16x16xf32> -> vector<16x16xf32>
    %c1_187 = arith.constant 1 : index
    %c0_188 = arith.constant 0 : index
    %c16_189 = arith.constant 16 : index
    %339 = vector.load %arg11[%c1_187, %c0_188, %c16_189] : memref<2x1x32xf32, #tpu.memory_space<vmem>>, vector<1x1x16xf32>
    %340 = vector.shape_cast %339 : vector<1x1x16xf32> to vector<1x16xf32>
    %341 = vector.broadcast %340 : vector<1x16xf32> to vector<16x16xf32>
    %342 = arith.addf %338, %341 : vector<16x16xf32>
    %c1_190 = arith.constant 1 : index
    %c0_191 = arith.constant 0 : index
    %c16_192 = arith.constant 16 : index
    %343 = vector.load %arg12[%c1_190, %c0_191, %c16_192] : memref<2x32x32xbf16, #tpu.memory_space<vmem>>, vector<1x32x16xbf16>
    %344 = vector.shape_cast %343 : vector<1x32x16xbf16> to vector<32x16xbf16>
    %cst_193 = arith.constant dense<0.000000e+00> : vector<16x16xf32>
    %345 = tpu.matmul %286, %344, %cst_193 {dimension_numbers = #tpu.dot_dimension_numbers<[1], [0], [0], [1], [0, 0, 1, 1], [], []>} : vector<16x32xbf16>, vector<32x16xbf16>, vector<16x16xf32> -> vector<16x16xf32>
    %c1_194 = arith.constant 1 : index
    %c0_195 = arith.constant 0 : index
    %c16_196 = arith.constant 16 : index
    %346 = vector.load %arg13[%c1_194, %c0_195, %c16_196] : memref<2x1x32xf32, #tpu.memory_space<vmem>>, vector<1x1x16xf32>
    %347 = vector.shape_cast %346 : vector<1x1x16xf32> to vector<1x16xf32>
    %348 = vector.broadcast %347 : vector<1x16xf32> to vector<16x16xf32>
    %349 = arith.addf %345, %348 : vector<16x16xf32>
    %350 = arith.truncf %335 : vector<16x16xf32> to vector<16x16xbf16>
    %351 = arith.truncf %342 : vector<16x16xf32> to vector<16x16xbf16>
    %cst_197 = arith.constant dense<0.000000e+00> : vector<16x16xf32>
    %352 = tpu.matmul %350, %351, %cst_197 {dimension_numbers = #tpu.dot_dimension_numbers<[1], [1], [0], [0], [0, 0, 1, 0], [], []>} : vector<16x16xbf16>, vector<16x16xbf16>, vector<16x16xf32> -> vector<16x16xf32>
    %353 = arith.addf %352, %112 : vector<16x16xf32>
    %cst_198 = arith.constant dense<0xFF800000> : vector<16xf32>
    %354 = vector.multi_reduction <maximumf>, %353, %cst_198 [1] : vector<16x16xf32> to vector<16xf32>
    %355 = vector.shape_cast %354 : vector<16xf32> to vector<16x1xf32>
    %356 = vector.broadcast %355 : vector<16x1xf32> to vector<16x16xf32>
    %357 = arith.subf %353, %356 : vector<16x16xf32>
    %358 = math.exp %357 : vector<16x16xf32>
    %cst_199 = arith.constant dense<0.000000e+00> : vector<16xf32>
    %359 = vector.multi_reduction <add>, %358, %cst_199 [1] : vector<16x16xf32> to vector<16xf32>
    %360 = vector.shape_cast %359 : vector<16xf32> to vector<16x1xf32>
    %361 = tpu.reciprocal %360 {approx = true} : vector<16x1xf32> -> vector<16x1xf32>
    %362 = vector.broadcast %361 : vector<16x1xf32> to vector<16x16xf32>
    %363 = arith.mulf %358, %362 : vector<16x16xf32>
    %364 = arith.truncf %363 : vector<16x16xf32> to vector<16x16xbf16>
    %365 = arith.truncf %349 : vector<16x16xf32> to vector<16x16xbf16>
    %cst_200 = arith.constant dense<0.000000e+00> : vector<16x16xf32>
    %366 = tpu.matmul %364, %365, %cst_200 {dimension_numbers = #tpu.dot_dimension_numbers<[1], [0], [0], [1], [0, 0, 1, 1], [], []>} : vector<16x16xbf16>, vector<16x16xbf16>, vector<16x16xf32> -> vector<16x16xf32>
    %c1_201 = arith.constant 1 : index
    %c16_202 = arith.constant 16 : index
    %c0_203 = arith.constant 0 : index
    %367 = vector.load %arg14[%c1_201, %c16_202, %c0_203] : memref<2x32x32xbf16, #tpu.memory_space<vmem>>, vector<1x16x32xbf16>
    %368 = vector.shape_cast %367 : vector<1x16x32xbf16> to vector<16x32xbf16>
    %369 = arith.truncf %366 : vector<16x16xf32> to vector<16x16xbf16>
    %cst_204 = arith.constant dense<0.000000e+00> : vector<16x32xf32>
    %370 = tpu.matmul %369, %368, %cst_204 {dimension_numbers = #tpu.dot_dimension_numbers<[1], [0], [0], [1], [0, 0, 1, 1], [], []>} : vector<16x16xbf16>, vector<16x32xbf16>, vector<16x32xf32> -> vector<16x32xf32>
    %371 = arith.addf %328, %370 : vector<16x32xf32>
    %c1_205 = arith.constant 1 : index
    %c0_206 = arith.constant 0 : index
    %c0_207 = arith.constant 0 : index
    %372 = vector.load %arg15[%c1_205, %c0_206, %c0_207] : memref<2x1x32xf32, #tpu.memory_space<vmem>>, vector<1x1x32xf32>
    %373 = vector.shape_cast %372 : vector<1x1x32xf32> to vector<1x32xf32>
    %374 = vector.broadcast %373 : vector<1x32xf32> to vector<16x32xf32>
    %375 = arith.addf %371, %374 : vector<16x32xf32>
    %376 = arith.addf %285, %375 : vector<16x32xf32>
    %c1_208 = arith.constant 1 : index
    %c0_209 = arith.constant 0 : index
    %c0_210 = arith.constant 0 : index
    %377 = vector.load %arg16[%c1_208, %c0_209, %c0_210] : memref<2x1x32xf32, #tpu.memory_space<vmem>>, vector<1x1x32xf32>
    %378 = vector.shape_cast %377 : vector<1x1x32xf32> to vector<1x32xf32>
    %c1_211 = arith.constant 1 : index
    %c0_212 = arith.constant 0 : index
    %c0_213 = arith.constant 0 : index
    %379 = vector.load %arg17[%c1_211, %c0_212, %c0_213] : memref<2x1x32xf32, #tpu.memory_space<vmem>>, vector<1x1x32xf32>
    %380 = vector.shape_cast %379 : vector<1x1x32xf32> to vector<1x32xf32>
    %cst_214 = arith.constant dense<0.000000e+00> : vector<16xf32>
    %381 = vector.multi_reduction <add>, %376, %cst_214 [1] : vector<16x32xf32> to vector<16xf32>
    %382 = vector.shape_cast %381 : vector<16xf32> to vector<16x1xf32>
    %cst_215 = arith.constant 3.200000e+01 : f32
    %383 = vector.broadcast %cst_215 : f32 to vector<16x1xf32>
    %384 = arith.divf %382, %383 : vector<16x1xf32>
    %385 = vector.broadcast %384 : vector<16x1xf32> to vector<16x32xf32>
    %386 = arith.subf %376, %385 : vector<16x32xf32>
    %387 = arith.mulf %386, %386 : vector<16x32xf32>
    %cst_216 = arith.constant dense<0.000000e+00> : vector<16xf32>
    %388 = vector.multi_reduction <add>, %387, %cst_216 [1] : vector<16x32xf32> to vector<16xf32>
    %389 = vector.shape_cast %388 : vector<16xf32> to vector<16x1xf32>
    %cst_217 = arith.constant 3.200000e+01 : f32
    %390 = vector.broadcast %cst_217 : f32 to vector<16x1xf32>
    %391 = arith.divf %389, %390 : vector<16x1xf32>
    %392 = vector.broadcast %384 : vector<16x1xf32> to vector<16x32xf32>
    %393 = arith.subf %376, %392 : vector<16x32xf32>
    %cst_218 = arith.constant 9.99999996E-13 : f32
    %394 = vector.broadcast %cst_218 : f32 to vector<16x1xf32>
    %395 = arith.addf %391, %394 : vector<16x1xf32>
    %396 = math.rsqrt %395 : vector<16x1xf32>
    %397 = vector.broadcast %396 : vector<16x1xf32> to vector<16x32xf32>
    %398 = arith.mulf %393, %397 : vector<16x32xf32>
    %399 = vector.broadcast %378 : vector<1x32xf32> to vector<16x32xf32>
    %400 = arith.mulf %398, %399 : vector<16x32xf32>
    %401 = vector.broadcast %380 : vector<1x32xf32> to vector<16x32xf32>
    %402 = arith.addf %400, %401 : vector<16x32xf32>
    %c1_219 = arith.constant 1 : index
    %c0_220 = arith.constant 0 : index
    %c0_221 = arith.constant 0 : index
    %403 = vector.load %arg18[%c1_219, %c0_220, %c0_221] : memref<2x32x64xbf16, #tpu.memory_space<vmem>>, vector<1x32x64xbf16>
    %404 = vector.shape_cast %403 : vector<1x32x64xbf16> to vector<32x64xbf16>
    %405 = arith.truncf %402 : vector<16x32xf32> to vector<16x32xbf16>
    %cst_222 = arith.constant dense<0.000000e+00> : vector<16x64xf32>
    %406 = tpu.matmul %405, %404, %cst_222 {dimension_numbers = #tpu.dot_dimension_numbers<[1], [0], [0], [1], [0, 0, 1, 1], [], []>} : vector<16x32xbf16>, vector<32x64xbf16>, vector<16x64xf32> -> vector<16x64xf32>
    %c1_223 = arith.constant 1 : index
    %c0_224 = arith.constant 0 : index
    %c0_225 = arith.constant 0 : index
    %407 = vector.load %arg19[%c1_223, %c0_224, %c0_225] : memref<2x1x64xf32, #tpu.memory_space<vmem>>, vector<1x1x64xf32>
    %408 = vector.shape_cast %407 : vector<1x1x64xf32> to vector<1x64xf32>
    %409 = vector.broadcast %408 : vector<1x64xf32> to vector<16x64xf32>
    %410 = arith.addf %406, %409 : vector<16x64xf32>
    %411 = arith.mulf %410, %410 : vector<16x64xf32>
    %412 = arith.mulf %410, %411 : vector<16x64xf32>
    %cst_226 = arith.constant 4.471500e-02 : f32
    %413 = vector.broadcast %cst_226 : f32 to vector<16x64xf32>
    %414 = arith.mulf %413, %412 : vector<16x64xf32>
    %415 = arith.addf %410, %414 : vector<16x64xf32>
    %cst_227 = arith.constant 0.797884583 : f32
    %416 = vector.broadcast %cst_227 : f32 to vector<16x64xf32>
    %417 = arith.mulf %416, %415 : vector<16x64xf32>
    %418 = math.tanh %417 : vector<16x64xf32>
    %cst_228 = arith.constant 1.000000e+00 : f32
    %419 = vector.broadcast %cst_228 : f32 to vector<16x64xf32>
    %420 = arith.addf %419, %418 : vector<16x64xf32>
    %cst_229 = arith.constant 5.000000e-01 : f32
    %421 = vector.broadcast %cst_229 : f32 to vector<16x64xf32>
    %422 = arith.mulf %421, %420 : vector<16x64xf32>
    %423 = arith.mulf %410, %422 : vector<16x64xf32>
    %c1_230 = arith.constant 1 : index
    %c0_231 = arith.constant 0 : index
    %c0_232 = arith.constant 0 : index
    %424 = vector.load %arg20[%c1_230, %c0_231, %c0_232] : memref<2x64x32xbf16, #tpu.memory_space<vmem>>, vector<1x64x32xbf16>
    %425 = vector.shape_cast %424 : vector<1x64x32xbf16> to vector<64x32xbf16>
    %426 = arith.truncf %423 : vector<16x64xf32> to vector<16x64xbf16>
    %cst_233 = arith.constant dense<0.000000e+00> : vector<16x32xf32>
    %427 = tpu.matmul %426, %425, %cst_233 {dimension_numbers = #tpu.dot_dimension_numbers<[1], [0], [0], [1], [0, 0, 1, 1], [], []>} : vector<16x64xbf16>, vector<64x32xbf16>, vector<16x32xf32> -> vector<16x32xf32>
    %c1_234 = arith.constant 1 : index
    %c0_235 = arith.constant 0 : index
    %c0_236 = arith.constant 0 : index
    %428 = vector.load %arg21[%c1_234, %c0_235, %c0_236] : memref<2x1x32xf32, #tpu.memory_space<vmem>>, vector<1x1x32xf32>
    %429 = vector.shape_cast %428 : vector<1x1x32xf32> to vector<1x32xf32>
    %430 = vector.broadcast %429 : vector<1x32xf32> to vector<16x32xf32>
    %431 = arith.addf %427, %430 : vector<16x32xf32>
    %432 = arith.addf %402, %431 : vector<16x32xf32>
    %c1_237 = arith.constant 1 : index
    %c0_238 = arith.constant 0 : index
    %c0_239 = arith.constant 0 : index
    %433 = vector.load %arg22[%c1_237, %c0_238, %c0_239] : memref<2x1x32xf32, #tpu.memory_space<vmem>>, vector<1x1x32xf32>
    %434 = vector.shape_cast %433 : vector<1x1x32xf32> to vector<1x32xf32>
    %c1_240 = arith.constant 1 : index
    %c0_241 = arith.constant 0 : index
    %c0_242 = arith.constant 0 : index
    %435 = vector.load %arg23[%c1_240, %c0_241, %c0_242] : memref<2x1x32xf32, #tpu.memory_space<vmem>>, vector<1x1x32xf32>
    %436 = vector.shape_cast %435 : vector<1x1x32xf32> to vector<1x32xf32>
    %cst_243 = arith.constant dense<0.000000e+00> : vector<16xf32>
    %437 = vector.multi_reduction <add>, %432, %cst_243 [1] : vector<16x32xf32> to vector<16xf32>
    %438 = vector.shape_cast %437 : vector<16xf32> to vector<16x1xf32>
    %cst_244 = arith.constant 3.200000e+01 : f32
    %439 = vector.broadcast %cst_244 : f32 to vector<16x1xf32>
    %440 = arith.divf %438, %439 : vector<16x1xf32>
    %441 = vector.broadcast %440 : vector<16x1xf32> to vector<16x32xf32>
    %442 = arith.subf %432, %441 : vector<16x32xf32>
    %443 = arith.mulf %442, %442 : vector<16x32xf32>
    %cst_245 = arith.constant dense<0.000000e+00> : vector<16xf32>
    %444 = vector.multi_reduction <add>, %443, %cst_245 [1] : vector<16x32xf32> to vector<16xf32>
    %445 = vector.shape_cast %444 : vector<16xf32> to vector<16x1xf32>
    %cst_246 = arith.constant 3.200000e+01 : f32
    %446 = vector.broadcast %cst_246 : f32 to vector<16x1xf32>
    %447 = arith.divf %445, %446 : vector<16x1xf32>
    %448 = vector.broadcast %440 : vector<16x1xf32> to vector<16x32xf32>
    %449 = arith.subf %432, %448 : vector<16x32xf32>
    %cst_247 = arith.constant 9.99999996E-13 : f32
    %450 = vector.broadcast %cst_247 : f32 to vector<16x1xf32>
    %451 = arith.addf %447, %450 : vector<16x1xf32>
    %452 = math.rsqrt %451 : vector<16x1xf32>
    %453 = vector.broadcast %452 : vector<16x1xf32> to vector<16x32xf32>
    %454 = arith.mulf %449, %453 : vector<16x32xf32>
    %455 = vector.broadcast %434 : vector<1x32xf32> to vector<16x32xf32>
    %456 = arith.mulf %454, %455 : vector<16x32xf32>
    %457 = vector.broadcast %436 : vector<1x32xf32> to vector<16x32xf32>
    %458 = arith.addf %456, %457 : vector<16x32xf32>
    %459 = vector.extract_strided_slice %458 {offsets = [0, 0], sizes = [1, 32], strides = [1, 1]} : vector<16x32xf32> to vector<1x32xf32>
    %460 = vector.extract_strided_slice %458 {offsets = [8, 0], sizes = [1, 32], strides = [1, 1]} : vector<16x32xf32> to vector<1x32xf32>
    %461 = tpu.concatenate %459, %460 in 0 : vector<1x32xf32>, vector<1x32xf32> -> vector<2x32xf32>
    %c0_248 = arith.constant 0 : index
    %c0_249 = arith.constant 0 : index
    %462 = vector.load %arg24[%c0_248, %c0_249] : memref<32x32xbf16, #tpu.memory_space<vmem>>, vector<32x32xbf16>
    %463 = arith.truncf %461 : vector<2x32xf32> to vector<2x32xbf16>
    %cst_250 = arith.constant dense<0.000000e+00> : vector<2x32xf32>
    %464 = tpu.matmul %463, %462, %cst_250 {dimension_numbers = #tpu.dot_dimension_numbers<[1], [0], [0], [1], [0, 0, 1, 1], [], []>} : vector<2x32xbf16>, vector<32x32xbf16>, vector<2x32xf32> -> vector<2x32xf32>
    %c0_251 = arith.constant 0 : index
    %c0_252 = arith.constant 0 : index
    %465 = vector.load %arg25[%c0_251, %c0_252] : memref<1x32xf32, #tpu.memory_space<vmem>>, vector<1x32xf32>
    %466 = vector.broadcast %465 : vector<1x32xf32> to vector<2x32xf32>
    %467 = arith.addf %464, %466 : vector<2x32xf32>
    %468 = math.tanh %467 : vector<2x32xf32>
    %c0_253 = arith.constant 0 : index
    %c0_254 = arith.constant 0 : index
    %469 = vector.load %arg26[%c0_253, %c0_254] : memref<32x128xbf16, #tpu.memory_space<vmem>>, vector<32x128xbf16>
    %470 = arith.truncf %468 : vector<2x32xf32> to vector<2x32xbf16>
    %cst_255 = arith.constant dense<0.000000e+00> : vector<2x128xf32>
    %471 = tpu.matmul %470, %469, %cst_255 {dimension_numbers = #tpu.dot_dimension_numbers<[1], [0], [0], [1], [0, 0, 1, 1], [], []>} : vector<2x32xbf16>, vector<32x128xbf16>, vector<2x128xf32> -> vector<2x128xf32>
    %c0_256 = arith.constant 0 : index
    %c0_257 = arith.constant 0 : index
    %472 = vector.load %arg27[%c0_256, %c0_257] : memref<1x128xf32, #tpu.memory_space<vmem>>, vector<1x128xf32>
    %473 = vector.broadcast %472 : vector<1x128xf32> to vector<2x128xf32>
    %474 = arith.addf %471, %473 : vector<2x128xf32>
    %475 = vector.extract_strided_slice %474 {offsets = [0, 0], sizes = [2, 3], strides = [1, 1]} : vector<2x128xf32> to vector<2x3xf32>
    %c0_258 = arith.constant 0 : index
    %c0_259 = arith.constant 0 : index
    %476 = vector.load %arg28[%c0_258, %c0_259] : memref<2x3xf32, #tpu.memory_space<vmem>>, vector<2x3xf32>
    tpu.vector_store %arg28[%c0_258, %c0_259], %475 {strides = array<i32>} : memref<2x3xf32, #tpu.memory_space<vmem>>, vector<2x3xf32>,
    %477 = tpu.iota {dimensions = array<i32: 1>} : vector<2x128xi32>
    %c3_i32_260 = arith.constant 3 : i32
    %478 = vector.broadcast %c3_i32_260 : i32 to vector<2x128xi32>
    %479 = arith.cmpi slt, %477, %478 : vector<2x128xi32>
    %cst_261 = arith.constant -1.000000e+30 : f32
    %480 = vector.broadcast %cst_261 : f32 to vector<2x128xf32>
    %481 = arith.select %479, %474, %480 : vector<2x128xi1>, vector<2x128xf32>
    %cst_262 = arith.constant dense<0xFF800000> : vector<2xf32>
    %482 = vector.multi_reduction <maximumf>, %481, %cst_262 [1] : vector<2x128xf32> to vector<2xf32>
    %483 = vector.shape_cast %482 : vector<2xf32> to vector<2x1xf32>
    %484 = vector.broadcast %483 : vector<2x1xf32> to vector<2x128xf32>
    %485 = arith.subf %474, %484 : vector<2x128xf32>
    %486 = math.exp %485 : vector<2x128xf32>
    %cst_263 = arith.constant 0.000000e+00 : f32
    %487 = vector.broadcast %cst_263 : f32 to vector<2x128xf32>
    %488 = arith.select %479, %486, %487 : vector<2x128xi1>, vector<2x128xf32>
    %cst_264 = arith.constant dense<0.000000e+00> : vector<2xf32>
    %489 = vector.multi_reduction <add>, %488, %cst_264 [1] : vector<2x128xf32> to vector<2xf32>
    %490 = vector.shape_cast %489 : vector<2xf32> to vector<2x1xf32>
    %491 = math.log %490 : vector<2x1xf32>
    %492 = arith.addf %483, %491 : vector<2x1xf32>
    %493 = vector.broadcast %492 : vector<2x1xf32> to vector<2x128xf32>
    %494 = arith.subf %474, %493 : vector<2x128xf32>
    %cst_265 = arith.constant 0.000000e+00 : f32
    %495 = vector.broadcast %cst_265 : f32 to vector<1x1xf32>
    %496 = vector.extract_strided_slice %477 {offsets = [0, 0], sizes = [1, 128], strides = [1, 1]} : vector<2x128xi32> to vector<1x128xi32>
    %c0_266 = arith.constant 0 : index
    %497 = memref.load %arg2[%c0_266] : memref<2xi32, #tpu.memory_space<smem>>
    %498 = vector.broadcast %497 : i32 to vector<1x128xi32>
    %499 = arith.cmpi eq, %496, %498 : vector<1x128xi32>
    %500 = vector.extract_strided_slice %494 {offsets = [0, 0], sizes = [1, 128], strides = [1, 1]} : vector<2x128xf32> to vector<1x128xf32>
    %cst_267 = arith.constant 0.000000e+00 : f32
    %501 = vector.broadcast %cst_267 : f32 to vector<1x128xf32>
    %502 = arith.select %499, %500, %501 : vector<1x128xi1>, vector<1x128xf32>
    %cst_268 = arith.constant dense<0.000000e+00> : vector<1xf32>
    %503 = vector.multi_reduction <add>, %502, %cst_268 [1] : vector<1x128xf32> to vector<1xf32>
    %504 = vector.shape_cast %503 : vector<1xf32> to vector<1x1xf32>
    %505 = arith.addf %495, %504 : vector<1x1xf32>
    %506 = vector.extract_strided_slice %477 {offsets = [1, 0], sizes = [1, 128], strides = [1, 1]} : vector<2x128xi32> to vector<1x128xi32>
    %c1_269 = arith.constant 1 : index
    %507 = memref.load %arg2[%c1_269] : memref<2xi32, #tpu.memory_space<smem>>
    %508 = vector.broadcast %507 : i32 to vector<1x128xi32>
    %509 = arith.cmpi eq, %506, %508 : vector<1x128xi32>
    %510 = vector.extract_strided_slice %494 {offsets = [1, 0], sizes = [1, 128], strides = [1, 1]} : vector<2x128xf32> to vector<1x128xf32>
    %cst_270 = arith.constant 0.000000e+00 : f32
    %511 = vector.broadcast %cst_270 : f32 to vector<1x128xf32>
    %512 = arith.select %509, %510, %511 : vector<1x128xi1>, vector<1x128xf32>
    %cst_271 = arith.constant dense<0.000000e+00> : vector<1xf32>
    %513 = vector.multi_reduction <add>, %512, %cst_271 [1] : vector<1x128xf32> to vector<1xf32>
    %514 = vector.shape_cast %513 : vector<1xf32> to vector<1x1xf32>
    %515 = arith.addf %505, %514 : vector<1x1xf32>
    %cst_272 = arith.constant 0.000000e+00 : f32
    %516 = vector.broadcast %cst_272 : f32 to vector<1x1xf32>
    %517 = arith.subf %516, %515 : vector<1x1xf32>
    %cst_273 = arith.constant 5.000000e-01 : f32
    %518 = vector.broadcast %cst_273 : f32 to vector<1x1xf32>
    %519 = arith.mulf %517, %518 : vector<1x1xf32>
    %c0_274 = arith.constant 0 : index
    %c0_275 = arith.constant 0 : index
    %520 = vector.load %arg29[%c0_274, %c0_275] : memref<1x1xf32, #tpu.memory_space<vmem>>, vector<1x1xf32>
    tpu.vector_store %arg29[%c0_274, %c0_275], %519 {strides = array<i32>} : memref<1x1xf32, #tpu.memory_space<vmem>>, vector<1x1xf32>,
    return
  }
  func.func @transform_0(%arg0: i32, %arg1: memref<16xi32, #tpu.memory_space<smem>>, %arg2: memref<2xi32, #tpu.memory_space<smem>>) -> (i32, i32) {
    %c0_i32 = arith.constant 0 : i32
    %c0_i32_0 = arith.constant 0 : i32
    %c0_i32_1 = arith.constant 0 : i32
    return %c0_i32, %c0_i32_0 : i32, i32
  }
  func.func @transform_1(%arg0: i32, %arg1: memref<16xi32, #tpu.memory_space<smem>>, %arg2: memref<2xi32, #tpu.memory_space<smem>>) -> (i32, i32, i32) {
    %c0_i32 = arith.constant 0 : i32
    %c0_i32_0 = arith.constant 0 : i32
    %c0_i32_1 = arith.constant 0 : i32
    %c0_i32_2 = arith.constant 0 : i32
    return %c0_i32, %c0_i32_0, %c0_i32_1 : i32, i32, i32
  }
  func.func @transform_2(%arg0: i32, %arg1: memref<16xi32, #tpu.memory_space<smem>>, %arg2: memref<2xi32, #tpu.memory_space<smem>>) -> (i32, i32) {
    %c0_i32 = arith.constant 0 : i32
    %c0_i32_0 = arith.constant 0 : i32
    %c0_i32_1 = arith.constant 0 : i32
    return %c0_i32, %c0_i32_0 : i32, i32
  }
  func.func @transform_3(%arg0: i32, %arg1: memref<16xi32, #tpu.memory_space<smem>>, %arg2: memref<2xi32, #tpu.memory_space<smem>>) -> (i32, i32) {
    %c0_i32 = arith.constant 0 : i32
    %c0_i32_0 = arith.constant 0 : i32
    %c0_i32_1 = arith.constant 0 : i32
    return %c0_i32, %c0_i32_0 : i32, i32
  }
  func.func @transform_4(%arg0: i32, %arg1: memref<16xi32, #tpu.memory_space<smem>>, %arg2: memref<2xi32, #tpu.memory_space<smem>>) -> (i32, i32) {
    %c0_i32 = arith.constant 0 : i32
    %c0_i32_0 = arith.constant 0 : i32
    %c0_i32_1 = arith.constant 0 : i32
    return %c0_i32, %c0_i32_0 : i32, i32
  }
  func.func @transform_5(%arg0: i32, %arg1: memref<16xi32, #tpu.memory_space<smem>>, %arg2: memref<2xi32, #tpu.memory_space<smem>>) -> (i32, i32, i32) {
    %c0_i32 = arith.constant 0 : i32
    %c0_i32_0 = arith.constant 0 : i32
    %c0_i32_1 = arith.constant 0 : i32
    %c0_i32_2 = arith.constant 0 : i32
    return %c0_i32, %c0_i32_0, %c0_i32_1 : i32, i32, i32
  }
  func.func @transform_6(%arg0: i32, %arg1: memref<16xi32, #tpu.memory_space<smem>>, %arg2: memref<2xi32, #tpu.memory_space<smem>>) -> (i32, i32, i32) {
    %c0_i32 = arith.constant 0 : i32
    %c0_i32_0 = arith.constant 0 : i32
    %c0_i32_1 = arith.constant 0 : i32
    %c0_i32_2 = arith.constant 0 : i32
    return %c0_i32, %c0_i32_0, %c0_i32_1 : i32, i32, i32
  }
  func.func @transform_7(%arg0: i32, %arg1: memref<16xi32, #tpu.memory_space<smem>>, %arg2: memref<2xi32, #tpu.memory_space<smem>>) -> (i32, i32, i32) {
    %c0_i32 = arith.constant 0 : i32
    %c0_i32_0 = arith.constant 0 : i32
    %c0_i32_1 = arith.constant 0 : i32
    %c0_i32_2 = arith.constant 0 : i32
    return %c0_i32, %c0_i32_0, %c0_i32_1 : i32, i32, i32
  }
  func.func @transform_8(%arg0: i32, %arg1: memref<16xi32, #tpu.memory_space<smem>>, %arg2: memref<2xi32, #tpu.memory_space<smem>>) -> (i32, i32, i32) {
    %c0_i32 = arith.constant 0 : i32
    %c0_i32_0 = arith.constant 0 : i32
    %c0_i32_1 = arith.constant 0 : i32
    %c0_i32_2 = arith.constant 0 : i32
    return %c0_i32, %c0_i32_0, %c0_i32_1 : i32, i32, i32
  }
  func.func @transform_9(%arg0: i32, %arg1: memref<16xi32, #tpu.memory_space<smem>>, %arg2: memref<2xi32, #tpu.memory_space<smem>>) -> (i32, i32, i32) {
    %c0_i32 = arith.constant 0 : i32
    %c0_i32_0 = arith.constant 0 : i32
    %c0_i32_1 = arith.constant 0 : i32
    %c0_i32_2 = arith.constant 0 : i32
    return %c0_i32, %c0_i32_0, %c0_i32_1 : i32, i32, i32
  }
  func.func @transform_10(%arg0: i32, %arg1: memref<16xi32, #tpu.memory_space<smem>>, %arg2: memref<2xi32, #tpu.memory_space<smem>>) -> (i32, i32, i32) {
    %c0_i32 = arith.constant 0 : i32
    %c0_i32_0 = arith.constant 0 : i32
    %c0_i32_1 = arith.constant 0 : i32
    %c0_i32_2 = arith.constant 0 : i32
    return %c0_i32, %c0_i32_0, %c0_i32_1 : i32, i32, i32
  }
  func.func @transform_11(%arg0: i32, %arg1: memref<16xi32, #tpu.memory_space<smem>>, %arg2: memref<2xi32, #tpu.memory_space<smem>>) -> (i32, i32, i32) {
    %c0_i32 = arith.constant 0 : i32
    %c0_i32_0 = arith.constant 0 : i32
    %c0_i32_1 = arith.constant 0 : i32
    %c0_i32_2 = arith.constant 0 : i32
    return %c0_i32, %c0_i32_0, %c0_i32_1 : i32, i32, i32
  }
  func.func @transform_12(%arg0: i32, %arg1: memref<16xi32, #tpu.memory_space<smem>>, %arg2: memref<2xi32, #tpu.memory_space<smem>>) -> (i32, i32, i32) {
    %c0_i32 = arith.constant 0 : i32
    %c0_i32_0 = arith.constant 0 : i32
    %c0_i32_1 = arith.constant 0 : i32
    %c0_i32_2 = arith.constant 0 : i32
    return %c0_i32, %c0_i32_0, %c0_i32_1 : i32, i32, i32
  }
  func.func @transform_13(%arg0: i32, %arg1: memref<16xi32, #tpu.memory_space<smem>>, %arg2: memref<2xi32, #tpu.memory_space<smem>>) -> (i32, i32, i32) {
    %c0_i32 = arith.constant 0 : i32
    %c0_i32_0 = arith.constant 0 : i32
    %c0_i32_1 = arith.constant 0 : i32
    %c0_i32_2 = arith.constant 0 : i32
    return %c0_i32, %c0_i32_0, %c0_i32_1 : i32, i32, i32
  }
  func.func @transform_14(%arg0: i32, %arg1: memref<16xi32, #tpu.memory_space<smem>>, %arg2: memref<2xi32, #tpu.memory_space<smem>>) -> (i32, i32, i32) {
    %c0_i32 = arith.constant 0 : i32
    %c0_i32_0 = arith.constant 0 : i32
    %c0_i32_1 = arith.constant 0 : i32
    %c0_i32_2 = arith.constant 0 : i32
    return %c0_i32, %c0_i32_0, %c0_i32_1 : i32, i32, i32
  }
  func.func @transform_15(%arg0: i32, %arg1: memref<16xi32, #tpu.memory_space<smem>>, %arg2: memref<2xi32, #tpu.memory_space<smem>>) -> (i32, i32, i32) {
    %c0_i32 = arith.constant 0 : i32
    %c0_i32_0 = arith.constant 0 : i32
    %c0_i32_1 = arith.constant 0 : i32
    %c0_i32_2 = arith.constant 0 : i32
    return %c0_i32, %c0_i32_0, %c0_i32_1 : i32, i32, i32
  }
  func.func @transform_16(%arg0: i32, %arg1: memref<16xi32, #tpu.memory_space<smem>>, %arg2: memref<2xi32, #tpu.memory_space<smem>>) -> (i32, i32, i32) {
    %c0_i32 = arith.constant 0 : i32
    %c0_i32_0 = arith.constant 0 : i32
    %c0_i32_1 = arith.constant 0 : i32
    %c0_i32_2 = arith.constant 0 : i32
    return %c0_i32, %c0_i32_0, %c0_i32_1 : i32, i32, i32
  }
  func.func @transform_17(%arg0: i32, %arg1: memref<16xi32, #tpu.memory_space<smem>>, %arg2: memref<2xi32, #tpu.memory_space<smem>>) -> (i32, i32, i32) {
    %c0_i32 = arith.constant 0 : i32
    %c0_i32_0 = arith.constant 0 : i32
    %c0_i32_1 = arith.constant 0 : i32
    %c0_i32_2 = arith.constant 0 : i32
    return %c0_i32, %c0_i32_0, %c0_i32_1 : i32, i32, i32
  }
  func.func @transform_18(%arg0: i32, %arg1: memref<16xi32, #tpu.memory_space<smem>>, %arg2: memref<2xi32, #tpu.memory_space<smem>>) -> (i32, i32, i32) {
    %c0_i32 = arith.constant 0 : i32
    %c0_i32_0 = arith.constant 0 : i32
    %c0_i32_1 = arith.constant 0 : i32
    %c0_i32_2 = arith.constant 0 : i32
    return %c0_i32, %c0_i32_0, %c0_i32_1 : i32, i32, i32
  }
  func.func @transform_19(%arg0: i32, %arg1: memref<16xi32, #tpu.memory_space<smem>>, %arg2: memref<2xi32, #tpu.memory_space<smem>>) -> (i32, i32, i32) {
    %c0_i32 = arith.constant 0 : i32
    %c0_i32_0 = arith.constant 0 : i32
    %c0_i32_1 = arith.constant 0 : i32
    %c0_i32_2 = arith.constant 0 : i32
    return %c0_i32, %c0_i32_0, %c0_i32_1 : i32, i32, i32
  }
  func.func @transform_20(%arg0: i32, %arg1: memref<16xi32, #tpu.memory_space<smem>>, %arg2: memref<2xi32, #tpu.memory_space<smem>>) -> (i32, i32, i32) {
    %c0_i32 = arith.constant 0 : i32
    %c0_i32_0 = arith.constant 0 : i32
    %c0_i32_1 = arith.constant 0 : i32
    %c0_i32_2 = arith.constant 0 : i32
    return %c0_i32, %c0_i32_0, %c0_i32_1 : i32, i32, i32
  }
  func.func @transform_21(%arg0: i32, %arg1: memref<16xi32, #tpu.memory_space<smem>>, %arg2: memref<2xi32, #tpu.memory_space<smem>>) -> (i32, i32) {
    %c0_i32 = arith.constant 0 : i32
    %c0_i32_0 = arith.constant 0 : i32
    %c0_i32_1 = arith.constant 0 : i32
    return %c0_i32, %c0_i32_0 : i32, i32
  }
  func.func @transform_22(%arg0: i32, %arg1: memref<16xi32, #tpu.memory_space<smem>>, %arg2: memref<2xi32, #tpu.memory_space<smem>>) -> (i32, i32) {
    %c0_i32 = arith.constant 0 : i32
    %c0_i32_0 = arith.constant 0 : i32
    %c0_i32_1 = arith.constant 0 : i32
    return %c0_i32, %c0_i32_0 : i32, i32
  }
  func.func @transform_23(%arg0: i32, %arg1: memref<16xi32, #tpu.memory_space<smem>>, %arg2: memref<2xi32, #tpu.memory_space<smem>>) -> (i32, i32) {
    %c0_i32 = arith.constant 0 : i32
    %c0_i32_0 = arith.constant 0 : i32
    %c0_i32_1 = arith.constant 0 : i32
    return %c0_i32, %c0_i32_0 : i32, i32
  }
  func.func @transform_24(%arg0: i32, %arg1: memref<16xi32, #tpu.memory_space<smem>>, %arg2: memref<2xi32, #tpu.memory_space<smem>>) -> (i32, i32) {
    %c0_i32 = arith.constant 0 : i32
    %c0_i32_0 = arith.constant 0 : i32
    %c0_i32_1 = arith.constant 0 : i32
    return %c0_i32, %c0_i32_0 : i32, i32
  }
  func.func @transform_25(%arg0: i32, %arg1: memref<16xi32, #tpu.memory_space<smem>>, %arg2: memref<2xi32, #tpu.memory_space<smem>>) -> (i32, i32) {
    %c0_i32 = arith.constant 0 : i32
    %c0_i32_0 = arith.constant 0 : i32
    %c0_i32_1 = arith.constant 0 : i32
    return %c0_i32, %c0_i32_0 : i32, i32
  }
  func.func @transform_26(%arg0: i32, %arg1: memref<16xi32, #tpu.memory_space<smem>>, %arg2: memref<2xi32, #tpu.memory_space<smem>>) -> (i32, i32) {
    %c0_i32 = arith.constant 0 : i32
    %c0_i32_0 = arith.constant 0 : i32
    %c0_i32_1 = arith.constant 0 : i32
    return %c0_i32, %c0_i32_0 : i32, i32
  }
}

</mosaic_0001>

<llo_original>
// kernel: vefk_transformer_forward.1
$region0: #{vefk_transformer_forward.1}
  #allocation0 [shape = 'u32[]', space=smem, size = 0x4, offset = 0x4, fixed_abs, tag = 'smem constant byte address 0x4 - core index']
  #allocation1 [shape = 'u32[144,128]{1,0:T(1,128)}', space=vmem, size = 0x12000, scoped, tag = 'internal scratch']
  #allocation2 [shape = 's32[1]{0}', space=sflag, size = 0x4, scoped, tag = 'scoped memory for vefk_transformer_forward.1']
  #allocation3 [shape = 'u8[512]{0}', space=smem, size = 0x200, scoped, tag = 'prefetched SMEM operand 0']
  #allocation4 [shape = 'u8[512]{0}', space=smem, size = 0x200, scoped, tag = 'prefetched SMEM operand 1']
  %s0 = inlined_call_operand.vmem [shape: s32[16], index: 0, kind: input, shape index: {}]
  %s1 = inlined_call_operand.vmem [shape: s32[2], index: 1, kind: input, shape index: {}]
  %s2 = inlined_call_operand.vmem [shape: s32[1,16], index: 2, kind: input, shape index: {}]
  %s3 = inlined_call_operand.vmem [shape: f32[100,1,32], index: 3, kind: input, shape index: {}]
  %s4 = inlined_call_operand.vmem [shape: f32[8,32], index: 4, kind: input, shape index: {}]
  %s5 = inlined_call_operand.vmem [shape: f32[1,32], index: 5, kind: input, shape index: {}]
  %s6 = inlined_call_operand.vmem [shape: f32[1,32], index: 6, kind: input, shape index: {}]
  %s7 = inlined_call_operand.vmem [shape: bf16[2,32,32], index: 7, kind: input, shape index: {}]
  %s8 = inlined_call_operand.vmem [shape: f32[2,1,32], index: 8, kind: input, shape index: {}]
  %s9 = inlined_call_operand.vmem [shape: bf16[2,32,32], index: 9, kind: input, shape index: {}]
  %s10 = inlined_call_operand.vmem [shape: f32[2,1,32], index: 10, kind: input, shape index: {}]
  %s11 = inlined_call_operand.vmem [shape: bf16[2,32,32], index: 11, kind: input, shape index: {}]
  %s12 = inlined_call_operand.vmem [shape: f32[2,1,32], index: 12, kind: input, shape index: {}]
  %s13 = inlined_call_operand.vmem [shape: bf16[2,32,32], index: 13, kind: input, shape index: {}]
  %s14 = inlined_call_operand.vmem [shape: f32[2,1,32], index: 14, kind: input, shape index: {}]
  %s15 = inlined_call_operand.vmem [shape: f32[2,1,32], index: 15, kind: input, shape index: {}]
  %s16 = inlined_call_operand.vmem [shape: f32[2,1,32], index: 16, kind: input, shape index: {}]
  %s17 = inlined_call_operand.vmem [shape: bf16[2,32,64], index: 17, kind: input, shape index: {}]
  %s18 = inlined_call_operand.hbm [shape: f32[2,1,64], index: 18, kind: input, shape index: {}]
  %s19 = inlined_call_operand.vmem [shape: bf16[2,64,32], index: 19, kind: input, shape index: {}]
  %s20 = inlined_call_operand.hbm [shape: f32[2,1,32], index: 20, kind: input, shape index: {}]
  %s21 = inlined_call_operand.vmem [shape: f32[2,1,32], index: 21, kind: input, shape index: {}]
  %s22 = inlined_call_operand.vmem [shape: f32[2,1,32], index: 22, kind: input, shape index: {}]
  %s23 = inlined_call_operand.vmem [shape: bf16[32,32], index: 23, kind: input, shape index: {}]
  %s24 = inlined_call_operand.vmem [shape: f32[1,32], index: 24, kind: input, shape index: {}]
  %s25 = inlined_call_operand.vmem [shape: bf16[32,128], index: 25, kind: input, shape index: {}]
  %s26 = inlined_call_operand.vmem [shape: f32[1,128], index: 26, kind: input, shape index: {}]
  %s27 = inlined_call_operand.hbm [shape: f32[2,3], index: 27, kind: output, shape index: {0}]
  %s28 = inlined_call_operand.hbm [shape: f32[1,1], index: 28, kind: output, shape index: {1}]
  %29 = xla_tuple %s27, %s28
  %s30 = sld [smem:[#allocation0]]
  $region126: #{vefk_transformer_forward.1} parent=0
    _
  %s32 = ssub.s32 1, %s30
  %s33 = scalar_select 0, %s32, %s30
  %s34 = sshll.u32 %s0, 4
  %s35 = int_to_ptr.vmem [resolvable:$true] %s34
  %37 = dma.vmem_to_smem %s35, 16, [#allocation3], [#allocation2]
  %s38 = sshll.u32 %s1, 4
  %s39 = int_to_ptr.vmem [resolvable:$true] %s38
  %41 = dma.vmem_to_smem %s39, 16, [#allocation4], [#allocation2]
  %42 = dma.done [#allocation2], 32
  %43 = sfence
  $region1: #{vefk_transformer_forward.1} parent=0
    #allocation5 [shape = 'u8[1024]{0}', space=vmem, size = 0x400, scoped, tag = 'input window, operand 18, single buffered']
    #allocation6 [shape = 's32[1]{0}', space=sflag, size = 0x4, scoped, tag = 'scoped memory for vefk_transformer_forward.1']
    #allocation7 [shape = 's32[1]{0}', space=sflag, size = 0x4, scoped, tag = 'scoped memory for vefk_transformer_forward.1']
    #allocation8 [shape = 'u8[1024]{0}', space=vmem, size = 0x400, scoped, tag = 'input window, operand 20, single buffered']
    #allocation9 [shape = 's32[1]{0}', space=sflag, size = 0x4, scoped, tag = 'scoped memory for vefk_transformer_forward.1']
    #allocation10 [shape = 'u8[1024]{0}', space=vmem, size = 0x400, scoped, tag = 'output window, operand 0, single buffered']
    #allocation11 [shape = 'u8[512]{0}', space=vmem, size = 0x400, scoped, tag = 'output window, operand 1, single buffered']
    #allocation12 [shape = 's32[1]{0}', space=sflag, size = 0x4, scoped, tag = 'scoped memory for vefk_transformer_forward.1']
    %44 = vsyncpa [#allocation6], 0
    %45 = vsyncpa [#allocation9], 0
    %46 = vsyncpa [#allocation7], 0
    %47 = vsyncpa [#allocation12], 0
    // Predicated region
    $region2: #{vefk_transformer_forward.1} parent=1 // pred_check
      _
    $region3: #{vefk_transformer_forward.1} parent=1 // pred_check_branch
      %49 = sbr.rel (0) target = $region5
    $region4: #{vefk_transformer_forward.1} parent=1 // pred_region
      _
    $region5: #{vefk_transformer_forward.1} parent=1 // pred_fallthru
      _
    // Predicated region
    $region6: #{vefk_transformer_forward.1} parent=1 // pred_check
      _
    $region7: #{vefk_transformer_forward.1} parent=1 // pred_check_branch
      %51 = sbr.rel (0) target = $region9
    $region8: #{vefk_transformer_forward.1} parent=1 // pred_region
      _
    $region9: #{vefk_transformer_forward.1} parent=1 // pred_fallthru
      _
    // Predicated region
    $region10: #{vefk_transformer_forward.1} parent=1 // pred_check
      _
    $region11: #{vefk_transformer_forward.1} parent=1 // pred_check_branch
      %53 = sbr.rel (0) target = $region13
    $region12: #{vefk_transformer_forward.1} parent=1 // pred_region
      _
    $region13: #{vefk_transformer_forward.1} parent=1 // pred_fallthru
      _
    // Predicated region
    $region14: #{vefk_transformer_forward.1} parent=1 // pred_check
      _
    $region15: #{vefk_transformer_forward.1} parent=1 // pred_check_branch
      %55 = sbr.rel (0) target = $region17
    $region16: #{vefk_transformer_forward.1} parent=1 // pred_region
      _
    $region17: #{vefk_transformer_forward.1} parent=1 // pred_fallthru
      _
    // Predicated region
    $region18: #{vefk_transformer_forward.1} parent=1 // pred_check
      _
    $region19: #{vefk_transformer_forward.1} parent=1 // pred_check_branch
      %57 = sbr.rel (0) target = $region21
    $region20: #{vefk_transformer_forward.1} parent=1 // pred_region
      _
    $region21: #{vefk_transformer_forward.1} parent=1 // pred_fallthru
      _
    // Predicated region
    $region22: #{vefk_transformer_forward.1} parent=1 // pred_check
      _
    $region23: #{vefk_transformer_forward.1} parent=1 // pred_check_branch
      %59 = sbr.rel (0) target = $region25
    $region24: #{vefk_transformer_forward.1} parent=1 // pred_region
      _
    $region25: #{vefk_transformer_forward.1} parent=1 // pred_fallthru
      _
    // Predicated region
    $region26: #{vefk_transformer_forward.1} parent=1 // pred_check
      _
    $region27: #{vefk_transformer_forward.1} parent=1 // pred_check_branch
      %61 = sbr.rel (0) target = $region29
    $region28: #{vefk_transformer_forward.1} parent=1 // pred_region
      _
    $region29: #{vefk_transformer_forward.1} parent=1 // pred_fallthru
      _
    // Predicated region
    $region30: #{vefk_transformer_forward.1} parent=1 // pred_check
      _
    $region31: #{vefk_transformer_forward.1} parent=1 // pred_check_branch
      %63 = sbr.rel (0) target = $region33
    $region32: #{vefk_transformer_forward.1} parent=1 // pred_region
      _
    $region33: #{vefk_transformer_forward.1} parent=1 // pred_fallthru
      _
    // Predicated region
    $region34: #{vefk_transformer_forward.1} parent=1 // pred_check
      _
    $region35: #{vefk_transformer_forward.1} parent=1 // pred_check_branch
      %65 = sbr.rel (0) target = $region37
    $region36: #{vefk_transformer_forward.1} parent=1 // pred_region
      _
    $region37: #{vefk_transformer_forward.1} parent=1 // pred_fallthru
      _
    // Predicated region
    $region38: #{vefk_transformer_forward.1} parent=1 // pred_check
      _
    $region39: #{vefk_transformer_forward.1} parent=1 // pred_check_branch
      %67 = sbr.rel (0) target = $region41
    $region40: #{vefk_transformer_forward.1} parent=1 // pred_region
      _
    $region41: #{vefk_transformer_forward.1} parent=1 // pred_fallthru
      _
    // Predicated region
    $region42: #{vefk_transformer_forward.1} parent=1 // pred_check
      _
    $region43: #{vefk_transformer_forward.1} parent=1 // pred_check_branch
      %69 = sbr.rel (0) target = $region45
    $region44: #{vefk_transformer_forward.1} parent=1 // pred_region
      _
    $region45: #{vefk_transformer_forward.1} parent=1 // pred_fallthru
      _
    // Predicated region
    $region46: #{vefk_transformer_forward.1} parent=1 // pred_check
      _
    $region47: #{vefk_transformer_forward.1} parent=1 // pred_check_branch
      %71 = sbr.rel (0) target = $region49
    $region48: #{vefk_transformer_forward.1} parent=1 // pred_region
      _
    $region49: #{vefk_transformer_forward.1} parent=1 // pred_fallthru
      _
    // Predicated region
    $region50: #{vefk_transformer_forward.1} parent=1 // pred_check
      _
    $region51: #{vefk_transformer_forward.1} parent=1 // pred_check_branch
      %73 = sbr.rel (0) target = $region53
    $region52: #{vefk_transformer_forward.1} parent=1 // pred_region
      _
    $region53: #{vefk_transformer_forward.1} parent=1 // pred_fallthru
      _
    // Predicated region
    $region54: #{vefk_transformer_forward.1} parent=1 // pred_check
      _
    $region55: #{vefk_transformer_forward.1} parent=1 // pred_check_branch
      %75 = sbr.rel (0) target = $region57
    $region56: #{vefk_transformer_forward.1} parent=1 // pred_region
      _
    $region57: #{vefk_transformer_forward.1} parent=1 // pred_fallthru
      _
    // Predicated region
    $region58: #{vefk_transformer_forward.1} parent=1 // pred_check
      _
    $region59: #{vefk_transformer_forward.1} parent=1 // pred_check_branch
      %77 = sbr.rel (0) target = $region61
    $region60: #{vefk_transformer_forward.1} parent=1 // pred_region
      _
    $region61: #{vefk_transformer_forward.1} parent=1 // pred_fallthru
      _
    // Predicated region
    $region62: #{vefk_transformer_forward.1} parent=1 // pred_check
      _
    $region63: #{vefk_transformer_forward.1} parent=1 // pred_check_branch
      %79 = sbr.rel (0) target = $region65
    $region64: #{vefk_transformer_forward.1} parent=1 // pred_region
      _
    $region65: #{vefk_transformer_forward.1} parent=1 // pred_fallthru
      _
    // Predicated region
    $region66: #{vefk_transformer_forward.1} parent=1 // pred_check
      _
    $region67: #{vefk_transformer_forward.1} parent=1 // pred_check_branch
      %81 = sbr.rel (0) target = $region69
    $region68: #{vefk_transformer_forward.1} parent=1 // pred_region
      %s83 = ssub.s32 32, 32
      %84 = vsyncadd [#allocation6], %s83
      %s85 = sshll.u32 [#allocation5], 4
      %s86 = int_to_ptr.vmem [resolvable:$true] %s85
      %91 = dma.hbm_to_vmem [thread:$0]  %s18, 32, %s86, [#allocation6], 16, 16, 1
    $region69: #{vefk_transformer_forward.1} parent=1 // pred_fallthru
      _
    // Predicated region
    $region70: #{vefk_transformer_forward.1} parent=1 // pred_check
      _
    $region71: #{vefk_transformer_forward.1} parent=1 // pred_check_branch
      %93 = sbr.rel (0) target = $region73
    $region72: #{vefk_transformer_forward.1} parent=1 // pred_region
      _
    $region73: #{vefk_transformer_forward.1} parent=1 // pred_fallthru
      _
    // Predicated region
    $region74: #{vefk_transformer_forward.1} parent=1 // pred_check
      _
    $region75: #{vefk_transformer_forward.1} parent=1 // pred_check_branch
      %95 = sbr.rel (0) target = $region77
    $region76: #{vefk_transformer_forward.1} parent=1 // pred_region
      %s97 = ssub.s32 32, 32
      %98 = vsyncadd [#allocation9], %s97
      %s99 = sshll.u32 [#allocation8], 4
      %s100 = int_to_ptr.vmem [resolvable:$true] %s99
      %105 = dma.hbm_to_vmem [thread:$0]  %s20, 32, %s100, [#allocation9], 16, 16, 1
    $region77: #{vefk_transformer_forward.1} parent=1 // pred_fallthru
      _
    // Predicated region
    $region78: #{vefk_transformer_forward.1} parent=1 // pred_check
      _
    $region79: #{vefk_transformer_forward.1} parent=1 // pred_check_branch
      %107 = sbr.rel (0) target = $region81
    $region80: #{vefk_transformer_forward.1} parent=1 // pred_region
      _
    $region81: #{vefk_transformer_forward.1} parent=1 // pred_fallthru
      _
    // Predicated region
    $region82: #{vefk_transformer_forward.1} parent=1 // pred_check
      _
    $region83: #{vefk_transformer_forward.1} parent=1 // pred_check_branch
      %109 = sbr.rel (0) target = $region85
    $region84: #{vefk_transformer_forward.1} parent=1 // pred_region
      _
    $region85: #{vefk_transformer_forward.1} parent=1 // pred_fallthru
      _
    // Predicated region
    $region86: #{vefk_transformer_forward.1} parent=1 // pred_check
      _
    $region87: #{vefk_transformer_forward.1} parent=1 // pred_check_branch
      %111 = sbr.rel (0) target = $region89
    $region88: #{vefk_transformer_forward.1} parent=1 // pred_region
      _
    $region89: #{vefk_transformer_forward.1} parent=1 // pred_fallthru
      _
    // Predicated region
    $region90: #{vefk_transformer_forward.1} parent=1 // pred_check
      _
    $region91: #{vefk_transformer_forward.1} parent=1 // pred_check_branch
      %113 = sbr.rel (0) target = $region93
    $region92: #{vefk_transformer_forward.1} parent=1 // pred_region
      _
    $region93: #{vefk_transformer_forward.1} parent=1 // pred_fallthru
      _
    // Predicated region
    $region94: #{vefk_transformer_forward.1} parent=1 // pred_check
      _
    $region95: #{vefk_transformer_forward.1} parent=1 // pred_check_branch
      %115 = sbr.rel (0) target = $region97
    $region96: #{vefk_transformer_forward.1} parent=1 // pred_region
      _
    $region97: #{vefk_transformer_forward.1} parent=1 // pred_fallthru
      _
    // Predicated region
    $region98: #{vefk_transformer_forward.1} parent=1 // pred_check
      _
    $region99: #{vefk_transformer_forward.1} parent=1 // pred_check_branch
      %117 = sbr.rel (0) target = $region101
    $region100: #{vefk_transformer_forward.1} parent=1 // pred_region
      _
    $region101: #{vefk_transformer_forward.1} parent=1 // pred_fallthru
      _
    // Predicated region
    $region102: #{vefk_transformer_forward.1} parent=1 // pred_check
      _
    $region103: #{vefk_transformer_forward.1} parent=1 // pred_check_branch
      %119 = sbr.rel (0) target = $region105
    $region104: #{vefk_transformer_forward.1} parent=1 // pred_region
      %120 = dma.done [#allocation6], 32
    $region105: #{vefk_transformer_forward.1} parent=1 // pred_fallthru
      _
    // Predicated region
    $region106: #{vefk_transformer_forward.1} parent=1 // pred_check
      _
    $region107: #{vefk_transformer_forward.1} parent=1 // pred_check_branch
      %122 = sbr.rel (0) target = $region109
    $region108: #{vefk_transformer_forward.1} parent=1 // pred_region
      %123 = dma.done [#allocation9], 32
    $region109: #{vefk_transformer_forward.1} parent=1 // pred_fallthru
      _
    %s125 = sld [smem:[#allocation3]]
    %s126 = scalar_lea.vmem %s3, %s125
    %v127 = vld [vmem:[%s126] sm:$0x1]
    %s128 = sld [smem:[#allocation3 + $0x1]]
    %s129 = scalar_lea.vmem %s3, %s128
    %v130 = vld [vmem:[%s129] sm:$0x1]
    %s131 = sld [smem:[#allocation3 + $0x2]]
    %s132 = scalar_lea.vmem %s3, %s131
    %v133 = vld [vmem:[%s132] sm:$0x1]
    %s134 = sld [smem:[#allocation3 + $0x3]]
    %s135 = scalar_lea.vmem %s3, %s134
    %v136 = vld [vmem:[%s135] sm:$0x1]
    %s137 = sld [smem:[#allocation3 + $0x4]]
    %s138 = scalar_lea.vmem %s3, %s137
    %v139 = vld [vmem:[%s138] sm:$0x1]
    %s140 = sld [smem:[#allocation3 + $0x5]]
    %s141 = scalar_lea.vmem %s3, %s140
    %v142 = vld [vmem:[%s141] sm:$0x1]
    %s143 = sld [smem:[#allocation3 + $0x6]]
    %s144 = scalar_lea.vmem %s3, %s143
    %v145 = vld [vmem:[%s144] sm:$0x1]
    %s146 = sld [smem:[#allocation3 + $0x7]]
    %s147 = scalar_lea.vmem %s3, %s146
    %v148 = vld [vmem:[%s147] sm:$0x1]
    %s149 = sld [smem:[#allocation3 + $0x8]]
    %s150 = scalar_lea.vmem %s3, %s149
    %v151 = vld [vmem:[%s150] sm:$0x1]
    %s152 = sld [smem:[#allocation3 + $0x9]]
    %s153 = scalar_lea.vmem %s3, %s152
    %v154 = vld [vmem:[%s153] sm:$0x1]
    %s155 = sld [smem:[#allocation3 + $0xa]]
    %s156 = scalar_lea.vmem %s3, %s155
    %v157 = vld [vmem:[%s156] sm:$0x1]
    %s158 = sld [smem:[#allocation3 + $0xb]]
    %s159 = scalar_lea.vmem %s3, %s158
    %v160 = vld [vmem:[%s159] sm:$0x1]
    %s161 = sld [smem:[#allocation3 + $0xc]]
    %s162 = scalar_lea.vmem %s3, %s161
    %v163 = vld [vmem:[%s162] sm:$0x1]
    %s164 = sld [smem:[#allocation3 + $0xd]]
    %s165 = scalar_lea.vmem %s3, %s164
    %v166 = vld [vmem:[%s165] sm:$0x1]
    %s167 = sld [smem:[#allocation3 + $0xe]]
    %s168 = scalar_lea.vmem %s3, %s167
    %v169 = vld [vmem:[%s168] sm:$0x1]
    %s170 = sld [smem:[#allocation3 + $0xf]]
    %s171 = scalar_lea.vmem %s3, %s170
    %v172 = vld [vmem:[%s171] sm:$0x1]
    %v174 = vlaneseq
    %v175 = vshrl.u32 %v174, 7
    %v176 = vsub.s32 0, %v175
    %v177 = vrot.slane %v130, %v176
    %v180 = vlaneseq
    %v181 = vshrl.u32 %v180, 7
    %v182 = vsub.s32 0, %v181
    %v183 = vrot.slane %v133, %v182
    %v186 = vlaneseq
    %v187 = vshrl.u32 %v186, 7
    %v188 = vsub.s32 0, %v187
    %v189 = vrot.slane %v136, %v188
    %v192 = vlaneseq
    %v193 = vshrl.u32 %v192, 7
    %v194 = vsub.s32 0, %v193
    %v195 = vrot.slane %v139, %v194
    %v198 = vlaneseq
    %v199 = vshrl.u32 %v198, 7
    %v200 = vsub.s32 0, %v199
    %v201 = vrot.slane %v142, %v200
    %v204 = vlaneseq
    %v205 = vshrl.u32 %v204, 7
    %v206 = vsub.s32 0, %v205
    %v207 = vrot.slane %v145, %v206
    %v210 = vlaneseq
    %v211 = vshrl.u32 %v210, 7
    %v212 = vsub.s32 0, %v211
    %v213 = vrot.slane %v148, %v212
    %v216 = vlaneseq
    %v217 = vshrl.u32 %v216, 7
    %v218 = vsub.s32 0, %v217
    %v219 = vrot.slane %v154, %v218
    %v222 = vlaneseq
    %v223 = vshrl.u32 %v222, 7
    %v224 = vsub.s32 0, %v223
    %v225 = vrot.slane %v157, %v224
    %v228 = vlaneseq
    %v229 = vshrl.u32 %v228, 7
    %v230 = vsub.s32 0, %v229
    %v231 = vrot.slane %v160, %v230
    %v234 = vlaneseq
    %v235 = vshrl.u32 %v234, 7
    %v236 = vsub.s32 0, %v235
    %v237 = vrot.slane %v163, %v236
    %v240 = vlaneseq
    %v241 = vshrl.u32 %v240, 7
    %v242 = vsub.s32 0, %v241
    %v243 = vrot.slane %v166, %v242
    %v246 = vlaneseq
    %v247 = vshrl.u32 %v246, 7
    %v248 = vsub.s32 0, %v247
    %v249 = vrot.slane %v169, %v248
    %v252 = vlaneseq
    %v253 = vshrl.u32 %v252, 7
    %v254 = vsub.s32 0, %v253
    %v255 = vrot.slane %v172, %v254
    %vm257 = vcmask 1040384
    %v258 = vsel %vm257, %v127, %v177
    %vm259 = vcmask 1041408
    %v260 = vsel %vm259, %v258, %v183
    %vm261 = vcmask 1042432
    %v262 = vsel %vm261, %v260, %v189
    %vm263 = vcmask 1043456
    %v264 = vsel %vm263, %v262, %v195
    %vm265 = vcmask 1044480
    %v266 = vsel %vm265, %v264, %v201
    %vm267 = vcmask 1045504
    %v268 = vsel %vm267, %v266, %v207
    %vm269 = vcmask 1046528
    %v270 = vsel %vm269, %v268, %v213
    %v271 = vsel %vm257, %v151, %v219
    %v272 = vsel %vm259, %v271, %v225
    %v273 = vsel %vm261, %v272, %v231
    %v274 = vsel %vm263, %v273, %v237
    %v275 = vsel %vm265, %v274, %v243
    %v276 = vsel %vm267, %v275, %v249
    %v277 = vsel %vm269, %v276, %v255
    %v278 = vld [vmem:[%s4] sm:$0xff]
    %v279 = vadd.f32 %v270, %v278
    %v280 = vadd.f32 %v277, %v278
    %v281 = vld [vmem:[%s5] sm:$0x1]
    %v282 = vld [vmem:[%s6] sm:$0x1]
    %vm283 = vcmask 261120
    %v284 = vsel %vm283, %v279, 0.0
    %285 = vadd.xlane.f32.xlu0 %v284
    %v286 = vpop.xlane.xlu0 %285
    %v287 = vsel %vm283, %v280, 0.0
    %288 = vadd.xlane.f32.xlu0 %v287
    %v289 = vpop.xlane.xlu0 %288
    %v290 = vrcp.pop 32.0
    %v291 = vmul.f32 %v286, %v290
    %v292 = vmul.f32 %v289, %v290
    %v293 = vsub.f32 %v279, %v291
    %v294 = vsub.f32 %v280, %v292
    %v295 = vmul.f32 %v293, %v293
    %v296 = vmul.f32 %v294, %v294
    %v297 = vsel %vm283, %v295, 0.0
    %298 = vadd.xlane.f32.xlu0 %v297
    %v299 = vpop.xlane.xlu0 %298
    %v300 = vsel %vm283, %v296, 0.0
    %301 = vadd.xlane.f32.xlu0 %v300
    %v302 = vpop.xlane.xlu0 %301
    %v303 = vmul.f32 %v299, %v290
    %v304 = vmul.f32 %v302, %v290
    %v305 = vadd.f32 %v303, 1e-12
    %v306 = vadd.f32 %v304, 1e-12
    %v307 = vrsqrt.pop %v305
    %v308 = vrsqrt.pop %v306
    %v309 = vmul.f32 %v293, %v307
    %v310 = vmul.f32 %v294, %v308
    %v312 = vlaneseq
    %v313 = vshrl.u32 %v312, 7
    %v314 = vsub.s32 0, %v313
    %v315 = vrot.slane %v281, %v314
    %v317 = vmul.f32 %v309, %v315
    %v318 = vmul.f32 %v310, %v315
    %v320 = vlaneseq
    %v321 = vshrl.u32 %v320, 7
    %v322 = vsub.s32 0, %v321
    %v323 = vrot.slane %v282, %v322
    %v325 = vadd.f32 %v317, %v323
    %v326 = vadd.f32 %v318, %v323
    %v327 = vlaneseq
    %v328 = vshrl.u32 %v327, 7
    %v329 = vadd.s32 %v328, 8
    %v330 = vlaneseq
    %v331 = vand.u32 %v330, 127
    %v332 = vshra.s32 %v328, 3
    %v333 = vshra.s32 %v329, 3
    %v334 = vshra.s32 %v331, 3
    %vm335 = vcmp.eq.s32.totalorder %v332, %v334
    %vm336 = vcmp.eq.s32.totalorder %v333, %v334
    %vm337 = vcmp.le.s32.totalorder %v331, %v328
    %vm338 = vcmp.le.s32.totalorder %v331, %v329
    %vm339 = vmand %vm335, %vm337
    %vm340 = vmand %vm336, %vm338
    %v341 = vld [vmem:[%s2] sm:$0x1]
    %vm342 = vcmp.gt.s32.totalorder %v341, 0
    %v343 = vsel %vm342, 1, 0
    %v344 = vlaneseq
    %v345 = vshrl.u32 %v344, 7
    %v346 = vsub.s32 0, %v345
    %v347 = vrot.slane %v343, %v346
    %vm348 = vcmp.eq.s32.totalorder %v347, 1
    %vm349 = vmand %vm339, %vm348
    %vm350 = vmand %vm340, %vm348
    %v351 = vsel %vm349, 0.0, -1e+09
    %v352 = vsel %vm350, 0.0, -1e+09
    %v353 = vpack.c.bf16 %v326, %v325
    %v354 = vld [vmem:[%s7] sm:$0xf]
    %v355 = vld [vmem:[%s7 + $0x4] sm:$0xf]
    %v356 = vld [vmem:[%s7 + $0x8] sm:$0xf]
    %v357 = vld [vmem:[%s7 + $0xc] sm:$0xf]
    %v358 = vld [vmem:[%s8] sm:$0x1]
    %v360 = vlaneseq
    %v361 = vshrl.u32 %v360, 7
    %v362 = vsub.s32 0, %v361
    %v363 = vrot.slane %v358, %v362
    %v369 = vunpack.c.l.b16 %v354
    %v370 = vunpack.c.l.b16 %v355
    %v371 = vunpack.c.l.b16 %v356
    %v372 = vunpack.c.l.b16 %v357
    %v373 = vpack.c.b16 %v370, %v369
    %v374 = vpack.c.b16 %v372, %v371
    %v378 = vsel %vm283, %v353, 0
    %380 = vmatprep.subr.bf16.mxu0 0
    %381 = vmatpush1.bf16.msra.mxu0 %v373
    %382 = vmatprep.subr.bf16.mxu0 0
    %383 = vmatpush1.bf16.msra.mxu0 %v374
    %384 = vmatprep.subr.bf16.mxu0 0
    %385 = vmatpush1.bf16.msra.mxu0 0
    %386 = vmatprep.subr.bf16.mxu0 0
    %387 = vmatpush1.bf16.msra.mxu0 0
    %388 = vmatprep.subr.bf16.mxu0 0
    %389 = vmatpush1.bf16.msra.mxu0 0
    %390 = vmatprep.subr.bf16.mxu0 0
    %391 = vmatpush1.bf16.msra.mxu0 0
    %392 = vmatprep.subr.bf16.mxu0 0
    %393 = vmatpush1.bf16.msra.mxu0 0
    %394 = vmatprep.subr.bf16.mxu0 0
    %395 = vmatpush1.bf16.msra.mxu0 0
    %396 = vmatprep.subr.bf16.mxu0 0
    %397 = vmatpush1.bf16.msra.mxu0 0
    %398 = vmatprep.subr.bf16.mxu0 0
    %399 = vmatpush1.bf16.msra.mxu0 0
    %400 = vmatprep.subr.bf16.mxu0 0
    %401 = vmatpush1.bf16.msra.mxu0 0
    %402 = vmatprep.subr.bf16.mxu0 0
    %403 = vmatpush1.bf16.msra.mxu0 0
    %404 = vmatprep.subr.bf16.mxu0 0
    %405 = vmatpush1.bf16.msra.mxu0 0
    %406 = vmatprep.subr.bf16.mxu0 0
    %407 = vmatpush1.bf16.msra.mxu0 0
    %408 = vmatprep.subr.bf16.mxu0 0
    %409 = vmatpush1.bf16.msra.mxu0 0
    %410 = vmatprep.subr.bf16.mxu0 0
    %411 = vmatpush1.bf16.msra.mxu0 0
    %412 = vmatprep.mubr.bf16.mxu0 0
    %413 = vmatmul.mubr.bf16.gmra.mrb[0].mxu0 %v378
    %v414 = vpop.f32.mrb[0].mxu0
    %v415 = vadd.f32 %v363, %v414
    %v416 = vpop.f32.mrb[0].mxu0
    %v417 = vpop.f32.mrb[0].mxu0
    %v418 = vadd.f32 %v363, %v417
    %v419 = vpop.f32.mrb[0].mxu0
    %420 = vdwg.mxu0
    %v421 = vld [vmem:[%s9] sm:$0xf]
    %v422 = vld [vmem:[%s9 + $0x4] sm:$0xf]
    %v423 = vld [vmem:[%s9 + $0x8] sm:$0xf]
    %v424 = vld [vmem:[%s9 + $0xc] sm:$0xf]
    %v425 = vld [vmem:[%s10] sm:$0x1]
    %v427 = vlaneseq
    %v428 = vshrl.u32 %v427, 7
    %v429 = vsub.s32 0, %v428
    %v430 = vrot.slane %v425, %v429
    %v436 = vunpack.c.l.b16 %v421
    %v437 = vunpack.c.l.b16 %v422
    %v438 = vunpack.c.l.b16 %v423
    %v439 = vunpack.c.l.b16 %v424
    %v440 = vpack.c.b16 %v437, %v436
    %v441 = vpack.c.b16 %v439, %v438
    %444 = vmatprep.subr.bf16.mxu0 0
    %445 = vmatpush1.bf16.msra.mxu0 %v440
    %446 = vmatprep.subr.bf16.mxu0 0
    %447 = vmatpush1.bf16.msra.mxu0 %v441
    %448 = vmatprep.subr.bf16.mxu0 0
    %449 = vmatpush1.bf16.msra.mxu0 0
    %450 = vmatprep.subr.bf16.mxu0 0
    %451 = vmatpush1.bf16.msra.mxu0 0
    %452 = vmatprep.subr.bf16.mxu0 0
    %453 = vmatpush1.bf16.msra.mxu0 0
    %454 = vmatprep.subr.bf16.mxu0 0
    %455 = vmatpush1.bf16.msra.mxu0 0
    %456 = vmatprep.subr.bf16.mxu0 0
    %457 = vmatpush1.bf16.msra.mxu0 0
    %458 = vmatprep.subr.bf16.mxu0 0
    %459 = vmatpush1.bf16.msra.mxu0 0
    %460 = vmatprep.subr.bf16.mxu0 0
    %461 = vmatpush1.bf16.msra.mxu0 0
    %462 = vmatprep.subr.bf16.mxu0 0
    %463 = vmatpush1.bf16.msra.mxu0 0
    %464 = vmatprep.subr.bf16.mxu0 0
    %465 = vmatpush1.bf16.msra.mxu0 0
    %466 = vmatprep.subr.bf16.mxu0 0
    %467 = vmatpush1.bf16.msra.mxu0 0
    %468 = vmatprep.subr.bf16.mxu0 0
    %469 = vmatpush1.bf16.msra.mxu0 0
    %470 = vmatprep.subr.bf16.mxu0 0
    %471 = vmatpush1.bf16.msra.mxu0 0
    %472 = vmatprep.subr.bf16.mxu0 0
    %473 = vmatpush1.bf16.msra.mxu0 0
    %474 = vmatprep.subr.bf16.mxu0 0
    %475 = vmatpush1.bf16.msra.mxu0 0
    %476 = vmatprep.mubr.bf16.mxu0 0
    %477 = vmatmul.mubr.bf16.gmra.mrb[0].mxu0 %v378
    %v478 = vpop.f32.mrb[0].mxu0
    %v479 = vadd.f32 %v430, %v478
    %v480 = vpop.f32.mrb[0].mxu0
    %v481 = vpop.f32.mrb[0].mxu0
    %v482 = vadd.f32 %v430, %v481
    %v483 = vpop.f32.mrb[0].mxu0
    %484 = vdwg.mxu0
    %v485 = vld [vmem:[%s11] sm:$0xf]
    %v486 = vld [vmem:[%s11 + $0x4] sm:$0xf]
    %v487 = vld [vmem:[%s11 + $0x8] sm:$0xf]
    %v488 = vld [vmem:[%s11 + $0xc] sm:$0xf]
    %v489 = vld [vmem:[%s12] sm:$0x1]
    %v491 = vlaneseq
    %v492 = vshrl.u32 %v491, 7
    %v493 = vsub.s32 0, %v492
    %v494 = vrot.slane %v489, %v493
    %v500 = vunpack.c.l.b16 %v485
    %v501 = vunpack.c.l.b16 %v486
    %v502 = vunpack.c.l.b16 %v487
    %v503 = vunpack.c.l.b16 %v488
    %v504 = vpack.c.b16 %v501, %v500
    %v505 = vpack.c.b16 %v503, %v502
    %508 = vmatprep.subr.bf16.mxu0 0
    %509 = vmatpush1.bf16.msra.mxu0 %v504
    %510 = vmatprep.subr.bf16.mxu0 0
    %511 = vmatpush1.bf16.msra.mxu0 %v505
    %512 = vmatprep.subr.bf16.mxu0 0
    %513 = vmatpush1.bf16.msra.mxu0 0
    %514 = vmatprep.subr.bf16.mxu0 0
    %515 = vmatpush1.bf16.msra.mxu0 0
    %516 = vmatprep.subr.bf16.mxu0 0
    %517 = vmatpush1.bf16.msra.mxu0 0
    %518 = vmatprep.subr.bf16.mxu0 0
    %519 = vmatpush1.bf16.msra.mxu0 0
    %520 = vmatprep.subr.bf16.mxu0 0
    %521 = vmatpush1.bf16.msra.mxu0 0
    %522 = vmatprep.subr.bf16.mxu0 0
    %523 = vmatpush1.bf16.msra.mxu0 0
    %524 = vmatprep.subr.bf16.mxu0 0
    %525 = vmatpush1.bf16.msra.mxu0 0
    %526 = vmatprep.subr.bf16.mxu0 0
    %527 = vmatpush1.bf16.msra.mxu0 0
    %528 = vmatprep.subr.bf16.mxu0 0
    %529 = vmatpush1.bf16.msra.mxu0 0
    %530 = vmatprep.subr.bf16.mxu0 0
    %531 = vmatpush1.bf16.msra.mxu0 0
    %532 = vmatprep.subr.bf16.mxu0 0
    %533 = vmatpush1.bf16.msra.mxu0 0
    %534 = vmatprep.subr.bf16.mxu0 0
    %535 = vmatpush1.bf16.msra.mxu0 0
    %536 = vmatprep.subr.bf16.mxu0 0
    %537 = vmatpush1.bf16.msra.mxu0 0
    %538 = vmatprep.subr.bf16.mxu0 0
    %539 = vmatpush1.bf16.msra.mxu0 0
    %540 = vmatprep.mubr.bf16.mxu0 0
    %541 = vmatmul.mubr.bf16.gmra.mrb[0].mxu0 %v378
    %v542 = vpop.f32.mrb[0].mxu0
    %v543 = vadd.f32 %v494, %v542
    %v544 = vpop.f32.mrb[0].mxu0
    %v545 = vpop.f32.mrb[0].mxu0
    %v546 = vadd.f32 %v494, %v545
    %v547 = vpop.f32.mrb[0].mxu0
    %548 = vdwg.mxu0
    %v549 = vpack.c.bf16 %v418, %v415
    %v550 = vpack.c.bf16 %v482, %v479
    %vm551 = vcmask 130048
    %v553 = vsel %vm551, %v549, 0
    %v556 = vsel %vm551, %v550, 0
    %558 = vmatprep.subr.bf16.mxu0 0
    %559 = vmatpush1.bf16.xpose.msra.mxu0 %v556
    %560 = vmatprep.subr.bf16.mxu0 0
    %561 = vmatpush1.bf16.xpose.msra.mxu0 0
    %562 = vmatprep.subr.bf16.mxu0 0
    %563 = vmatpush1.bf16.xpose.msra.mxu0 0
    %564 = vmatprep.subr.bf16.mxu0 0
    %565 = vmatpush1.bf16.xpose.msra.mxu0 0
    %566 = vmatprep.subr.bf16.mxu0 0
    %567 = vmatpush1.bf16.xpose.msra.mxu0 0
    %568 = vmatprep.subr.bf16.mxu0 0
    %569 = vmatpush1.bf16.xpose.msra.mxu0 0
    %570 = vmatprep.subr.bf16.mxu0 0
    %571 = vmatpush1.bf16.xpose.msra.mxu0 0
    %572 = vmatprep.subr.bf16.mxu0 0
    %573 = vmatpush1.bf16.xpose.msra.mxu0 0
    %574 = vmatprep.subr.bf16.mxu0 0
    %575 = vmatpush1.bf16.xpose.msra.mxu0 0
    %576 = vmatprep.subr.bf16.mxu0 0
    %577 = vmatpush1.bf16.xpose.msra.mxu0 0
    %578 = vmatprep.subr.bf16.mxu0 0
    %579 = vmatpush1.bf16.xpose.msra.mxu0 0
    %580 = vmatprep.subr.bf16.mxu0 0
    %581 = vmatpush1.bf16.xpose.msra.mxu0 0
    %582 = vmatprep.subr.bf16.mxu0 0
    %583 = vmatpush1.bf16.xpose.msra.mxu0 0
    %584 = vmatprep.subr.bf16.mxu0 0
    %585 = vmatpush1.bf16.xpose.msra.mxu0 0
    %586 = vmatprep.subr.bf16.mxu0 0
    %587 = vmatpush1.bf16.xpose.msra.mxu0 0
    %588 = vmatprep.subr.bf16.mxu0 0
    %589 = vmatpush1.bf16.xpose.msra.mxu0 0
    %590 = vmatprep.mubr.bf16.mxu0 0
    %591 = vmatmul.mubr.bf16.gmra.mrb[0].mxu0 %v553
    %v592 = vpop.f32.mrb[0].mxu0
    %v593 = vadd.f32 %v351, %v592
    %v594 = vpop.f32.mrb[0].mxu0
    %v595 = vpop.f32.mrb[0].mxu0
    %v596 = vadd.f32 %v352, %v595
    %v597 = vpop.f32.mrb[0].mxu0
    %598 = vdwg.mxu0
    %v599 = vsel %vm551, %v593, -inf
    %600 = vmax.xlane.f32.xlu0 %v599
    %v601 = vpop.xlane.xlu0 %600
    %v602 = vsel %vm551, %v596, -inf
    %603 = vmax.xlane.f32.xlu0 %v602
    %v604 = vpop.xlane.xlu0 %603
    %v605 = vsub.f32 %v593, %v601
    %v606 = vsub.f32 %v596, %v604
    %v607 = vmul.f32 %v605, 1.442695
    %v608 = vpow.pop %v607
    %v609 = vmul.f32 %v606, 1.442695
    %v610 = vpow.pop %v609
    %v611 = vsel %vm551, %v608, 0.0
    %612 = vadd.xlane.f32.xlu0 %v611
    %v613 = vpop.xlane.xlu0 %612
    %v614 = vsel %vm551, %v610, 0.0
    %615 = vadd.xlane.f32.xlu0 %v614
    %v616 = vpop.xlane.xlu0 %615
    %v617 = vrcp.pop %v613
    %v618 = vrcp.pop %v616
    %v619 = vmul.f32 %v608, %v617
    %v620 = vmul.f32 %v610, %v618
    %v621 = vpack.c.bf16 %v620, %v619
    %v622 = vpack.c.bf16 %v546, %v543
    %v624 = vsel %vm551, %v621, 0
    %626 = vmatprep.subr.bf16.mxu0 0
    %627 = vmatpush1.bf16.msra.mxu0 %v622
    %628 = vmatprep.subr.bf16.mxu0 0
    %629 = vmatpush1.bf16.msra.mxu0 0
    %630 = vmatprep.subr.bf16.mxu0 0
    %631 = vmatpush1.bf16.msra.mxu0 0
    %632 = vmatprep.subr.bf16.mxu0 0
    %633 = vmatpush1.bf16.msra.mxu0 0
    %634 = vmatprep.subr.bf16.mxu0 0
    %635 = vmatpush1.bf16.msra.mxu0 0
    %636 = vmatprep.subr.bf16.mxu0 0
    %637 = vmatpush1.bf16.msra.mxu0 0
    %638 = vmatprep.subr.bf16.mxu0 0
    %639 = vmatpush1.bf16.msra.mxu0 0
    %640 = vmatprep.subr.bf16.mxu0 0
    %641 = vmatpush1.bf16.msra.mxu0 0
    %642 = vmatprep.subr.bf16.mxu0 0
    %643 = vmatpush1.bf16.msra.mxu0 0
    %644 = vmatprep.subr.bf16.mxu0 0
    %645 = vmatpush1.bf16.msra.mxu0 0
    %646 = vmatprep.subr.bf16.mxu0 0
    %647 = vmatpush1.bf16.msra.mxu0 0
    %648 = vmatprep.subr.bf16.mxu0 0
    %649 = vmatpush1.bf16.msra.mxu0 0
    %650 = vmatprep.subr.bf16.mxu0 0
    %651 = vmatpush1.bf16.msra.mxu0 0
    %652 = vmatprep.subr.bf16.mxu0 0
    %653 = vmatpush1.bf16.msra.mxu0 0
    %654 = vmatprep.subr.bf16.mxu0 0
    %655 = vmatpush1.bf16.msra.mxu0 0
    %656 = vmatprep.subr.bf16.mxu0 0
    %657 = vmatpush1.bf16.msra.mxu0 0
    %658 = vmatprep.mubr.bf16.mxu0 0
    %659 = vmatmul.mubr.bf16.gmra.mrb[0].mxu0 %v624
    %v660 = vpop.f32.mrb[0].mxu0
    %v661 = vadd.f32 0.0, %v660
    %v662 = vpop.f32.mrb[0].mxu0
    %v663 = vpop.f32.mrb[0].mxu0
    %v664 = vadd.f32 0.0, %v663
    %v665 = vpop.f32.mrb[0].mxu0
    %666 = vdwg.mxu0
    %v667 = vld [vmem:[%s13] sm:$0xf]
    %v668 = vld [vmem:[%s13 + $0x4] sm:$0xf]
    %v669 = vpack.c.bf16 %v664, %v661
    %670 = vrot.lane.b32.xlu0 %v373, 112
    %v671 = vpop.permute.xlu0 %670
    %672 = vrot.lane.b32.xlu0 %v374, 112
    %v673 = vpop.permute.xlu0 %672
    %676 = vrot.lane.b32.xlu0 %v363, 112
    %v677 = vpop.permute.xlu0 %676
    %679 = vmatprep.subr.bf16.mxu0 0
    %680 = vmatpush1.bf16.msra.mxu0 %v671
    %681 = vmatprep.subr.bf16.mxu0 0
    %682 = vmatpush1.bf16.msra.mxu0 %v673
    %683 = vmatprep.subr.bf16.mxu0 0
    %684 = vmatpush1.bf16.msra.mxu0 0
    %685 = vmatprep.subr.bf16.mxu0 0
    %686 = vmatpush1.bf16.msra.mxu0 0
    %687 = vmatprep.subr.bf16.mxu0 0
    %688 = vmatpush1.bf16.msra.mxu0 0
    %689 = vmatprep.subr.bf16.mxu0 0
    %690 = vmatpush1.bf16.msra.mxu0 0
    %691 = vmatprep.subr.bf16.mxu0 0
    %692 = vmatpush1.bf16.msra.mxu0 0
    %693 = vmatprep.subr.bf16.mxu0 0
    %694 = vmatpush1.bf16.msra.mxu0 0
    %695 = vmatprep.subr.bf16.mxu0 0
    %696 = vmatpush1.bf16.msra.mxu0 0
    %697 = vmatprep.subr.bf16.mxu0 0
    %698 = vmatpush1.bf16.msra.mxu0 0
    %699 = vmatprep.subr.bf16.mxu0 0
    %700 = vmatpush1.bf16.msra.mxu0 0
    %701 = vmatprep.subr.bf16.mxu0 0
    %702 = vmatpush1.bf16.msra.mxu0 0
    %703 = vmatprep.subr.bf16.mxu0 0
    %704 = vmatpush1.bf16.msra.mxu0 0
    %705 = vmatprep.subr.bf16.mxu0 0
    %706 = vmatpush1.bf16.msra.mxu0 0
    %707 = vmatprep.subr.bf16.mxu0 0
    %708 = vmatpush1.bf16.msra.mxu0 0
    %709 = vmatprep.subr.bf16.mxu0 0
    %710 = vmatpush1.bf16.msra.mxu0 0
    %711 = vmatprep.mubr.bf16.mxu0 0
    %712 = vmatmul.mubr.bf16.gmra.mrb[0].mxu0 %v378
    %v713 = vpop.f32.mrb[0].mxu0
    %v714 = vadd.f32 %v677, %v713
    %v715 = vpop.f32.mrb[0].mxu0
    %v716 = vpop.f32.mrb[0].mxu0
    %v717 = vadd.f32 %v677, %v716
    %v718 = vpop.f32.mrb[0].mxu0
    %719 = vdwg.mxu0
    %720 = vrot.lane.b32.xlu0 %v440, 112
    %v721 = vpop.permute.xlu0 %720
    %722 = vrot.lane.b32.xlu0 %v441, 112
    %v723 = vpop.permute.xlu0 %722
    %726 = vrot.lane.b32.xlu0 %v430, 112
    %v727 = vpop.permute.xlu0 %726
    %729 = vmatprep.subr.bf16.mxu0 0
    %730 = vmatpush1.bf16.msra.mxu0 %v721
    %731 = vmatprep.subr.bf16.mxu0 0
    %732 = vmatpush1.bf16.msra.mxu0 %v723
    %733 = vmatprep.subr.bf16.mxu0 0
    %734 = vmatpush1.bf16.msra.mxu0 0
    %735 = vmatprep.subr.bf16.mxu0 0
    %736 = vmatpush1.bf16.msra.mxu0 0
    %737 = vmatprep.subr.bf16.mxu0 0
    %738 = vmatpush1.bf16.msra.mxu0 0
    %739 = vmatprep.subr.bf16.mxu0 0
    %740 = vmatpush1.bf16.msra.mxu0 0
    %741 = vmatprep.subr.bf16.mxu0 0
    %742 = vmatpush1.bf16.msra.mxu0 0
    %743 = vmatprep.subr.bf16.mxu0 0
    %744 = vmatpush1.bf16.msra.mxu0 0
    %745 = vmatprep.subr.bf16.mxu0 0
    %746 = vmatpush1.bf16.msra.mxu0 0
    %747 = vmatprep.subr.bf16.mxu0 0
    %748 = vmatpush1.bf16.msra.mxu0 0
    %749 = vmatprep.subr.bf16.mxu0 0
    %750 = vmatpush1.bf16.msra.mxu0 0
    %751 = vmatprep.subr.bf16.mxu0 0
    %752 = vmatpush1.bf16.msra.mxu0 0
    %753 = vmatprep.subr.bf16.mxu0 0
    %754 = vmatpush1.bf16.msra.mxu0 0
    %755 = vmatprep.subr.bf16.mxu0 0
    %756 = vmatpush1.bf16.msra.mxu0 0
    %757 = vmatprep.subr.bf16.mxu0 0
    %758 = vmatpush1.bf16.msra.mxu0 0
    %759 = vmatprep.subr.bf16.mxu0 0
    %760 = vmatpush1.bf16.msra.mxu0 0
    %761 = vmatprep.mubr.bf16.mxu0 0
    %762 = vmatmul.mubr.bf16.gmra.mrb[0].mxu0 %v378
    %v763 = vpop.f32.mrb[0].mxu0
    %v764 = vadd.f32 %v727, %v763
    %v765 = vpop.f32.mrb[0].mxu0
    %v766 = vpop.f32.mrb[0].mxu0
    %v767 = vadd.f32 %v727, %v766
    %v768 = vpop.f32.mrb[0].mxu0
    %769 = vdwg.mxu0
    %770 = vrot.lane.b32.xlu0 %v504, 112
    %v771 = vpop.permute.xlu0 %770
    %772 = vrot.lane.b32.xlu0 %v505, 112
    %v773 = vpop.permute.xlu0 %772
    %776 = vrot.lane.b32.xlu0 %v494, 112
    %v777 = vpop.permute.xlu0 %776
    %779 = vmatprep.subr.bf16.mxu0 0
    %780 = vmatpush1.bf16.msra.mxu0 %v771
    %781 = vmatprep.subr.bf16.mxu0 0
    %782 = vmatpush1.bf16.msra.mxu0 %v773
    %783 = vmatprep.subr.bf16.mxu0 0
    %784 = vmatpush1.bf16.msra.mxu0 0
    %785 = vmatprep.subr.bf16.mxu0 0
    %786 = vmatpush1.bf16.msra.mxu0 0
    %787 = vmatprep.subr.bf16.mxu0 0
    %788 = vmatpush1.bf16.msra.mxu0 0
    %789 = vmatprep.subr.bf16.mxu0 0
    %790 = vmatpush1.bf16.msra.mxu0 0
    %791 = vmatprep.subr.bf16.mxu0 0
    %792 = vmatpush1.bf16.msra.mxu0 0
    %793 = vmatprep.subr.bf16.mxu0 0
    %794 = vmatpush1.bf16.msra.mxu0 0
    %795 = vmatprep.subr.bf16.mxu0 0
    %796 = vmatpush1.bf16.msra.mxu0 0
    %797 = vmatprep.subr.bf16.mxu0 0
    %798 = vmatpush1.bf16.msra.mxu0 0
    %799 = vmatprep.subr.bf16.mxu0 0
    %800 = vmatpush1.bf16.msra.mxu0 0
    %801 = vmatprep.subr.bf16.mxu0 0
    %802 = vmatpush1.bf16.msra.mxu0 0
    %803 = vmatprep.subr.bf16.mxu0 0
    %804 = vmatpush1.bf16.msra.mxu0 0
    %805 = vmatprep.subr.bf16.mxu0 0
    %806 = vmatpush1.bf16.msra.mxu0 0
    %807 = vmatprep.subr.bf16.mxu0 0
    %808 = vmatpush1.bf16.msra.mxu0 0
    %809 = vmatprep.subr.bf16.mxu0 0
    %810 = vmatpush1.bf16.msra.mxu0 0
    %811 = vmatprep.mubr.bf16.mxu0 0
    %812 = vmatmul.mubr.bf16.gmra.mrb[0].mxu0 %v378
    %v813 = vpop.f32.mrb[0].mxu0
    %v814 = vadd.f32 %v777, %v813
    %v815 = vpop.f32.mrb[0].mxu0
    %v816 = vpop.f32.mrb[0].mxu0
    %v817 = vadd.f32 %v777, %v816
    %v818 = vpop.f32.mrb[0].mxu0
    %819 = vdwg.mxu0
    %v820 = vpack.c.bf16 %v717, %v714
    %v821 = vpack.c.bf16 %v767, %v764
    %v823 = vsel %vm551, %v820, 0
    %v826 = vsel %vm551, %v821, 0
    %828 = vmatprep.subr.bf16.mxu0 0
    %829 = vmatpush1.bf16.xpose.msra.mxu0 %v826
    %830 = vmatprep.subr.bf16.mxu0 0
    %831 = vmatpush1.bf16.xpose.msra.mxu0 0
    %832 = vmatprep.subr.bf16.mxu0 0
    %833 = vmatpush1.bf16.xpose.msra.mxu0 0
    %834 = vmatprep.subr.bf16.mxu0 0
    %835 = vmatpush1.bf16.xpose.msra.mxu0 0
    %836 = vmatprep.subr.bf16.mxu0 0
    %837 = vmatpush1.bf16.xpose.msra.mxu0 0
    %838 = vmatprep.subr.bf16.mxu0 0
    %839 = vmatpush1.bf16.xpose.msra.mxu0 0
    %840 = vmatprep.subr.bf16.mxu0 0
    %841 = vmatpush1.bf16.xpose.msra.mxu0 0
    %842 = vmatprep.subr.bf16.mxu0 0
    %843 = vmatpush1.bf16.xpose.msra.mxu0 0
    %844 = vmatprep.subr.bf16.mxu0 0
    %845 = vmatpush1.bf16.xpose.msra.mxu0 0
    %846 = vmatprep.subr.bf16.mxu0 0
    %847 = vmatpush1.bf16.xpose.msra.mxu0 0
    %848 = vmatprep.subr.bf16.mxu0 0
    %849 = vmatpush1.bf16.xpose.msra.mxu0 0
    %850 = vmatprep.subr.bf16.mxu0 0
    %851 = vmatpush1.bf16.xpose.msra.mxu0 0
    %852 = vmatprep.subr.bf16.mxu0 0
    %853 = vmatpush1.bf16.xpose.msra.mxu0 0
    %854 = vmatprep.subr.bf16.mxu0 0
    %855 = vmatpush1.bf16.xpose.msra.mxu0 0
    %856 = vmatprep.subr.bf16.mxu0 0
    %857 = vmatpush1.bf16.xpose.msra.mxu0 0
    %858 = vmatprep.subr.bf16.mxu0 0
    %859 = vmatpush1.bf16.xpose.msra.mxu0 0
    %860 = vmatprep.mubr.bf16.mxu0 0
    %861 = vmatmul.mubr.bf16.gmra.mrb[0].mxu0 %v823
    %v862 = vpop.f32.mrb[0].mxu0
    %v863 = vadd.f32 %v351, %v862
    %v864 = vpop.f32.mrb[0].mxu0
    %v865 = vpop.f32.mrb[0].mxu0
    %v866 = vadd.f32 %v352, %v865
    %v867 = vpop.f32.mrb[0].mxu0
    %868 = vdwg.mxu0
    %v869 = vsel %vm551, %v863, -inf
    %870 = vmax.xlane.f32.xlu0 %v869
    %v871 = vpop.xlane.xlu0 %870
    %v872 = vsel %vm551, %v866, -inf
    %873 = vmax.xlane.f32.xlu0 %v872
    %v874 = vpop.xlane.xlu0 %873
    %v875 = vsub.f32 %v863, %v871
    %v876 = vsub.f32 %v866, %v874
    %v877 = vmul.f32 %v875, 1.442695
    %v878 = vpow.pop %v877
    %v879 = vmul.f32 %v876, 1.442695
    %v880 = vpow.pop %v879
    %v881 = vsel %vm551, %v878, 0.0
    %882 = vadd.xlane.f32.xlu0 %v881
    %v883 = vpop.xlane.xlu0 %882
    %v884 = vsel %vm551, %v880, 0.0
    %885 = vadd.xlane.f32.xlu0 %v884
    %v886 = vpop.xlane.xlu0 %885
    %v887 = vrcp.pop %v883
    %v888 = vrcp.pop %v886
    %v889 = vmul.f32 %v878, %v887
    %v890 = vmul.f32 %v880, %v888
    %v891 = vpack.c.bf16 %v890, %v889
    %v892 = vpack.c.bf16 %v817, %v814
    %v894 = vsel %vm551, %v891, 0
    %896 = vmatprep.subr.bf16.mxu0 0
    %897 = vmatpush1.bf16.msra.mxu0 %v892
    %898 = vmatprep.subr.bf16.mxu0 0
    %899 = vmatpush1.bf16.msra.mxu0 0
    %900 = vmatprep.subr.bf16.mxu0 0
    %901 = vmatpush1.bf16.msra.mxu0 0
    %902 = vmatprep.subr.bf16.mxu0 0
    %903 = vmatpush1.bf16.msra.mxu0 0
    %904 = vmatprep.subr.bf16.mxu0 0
    %905 = vmatpush1.bf16.msra.mxu0 0
    %906 = vmatprep.subr.bf16.mxu0 0
    %907 = vmatpush1.bf16.msra.mxu0 0
    %908 = vmatprep.subr.bf16.mxu0 0
    %909 = vmatpush1.bf16.msra.mxu0 0
    %910 = vmatprep.subr.bf16.mxu0 0
    %911 = vmatpush1.bf16.msra.mxu0 0
    %912 = vmatprep.subr.bf16.mxu0 0
    %913 = vmatpush1.bf16.msra.mxu0 0
    %914 = vmatprep.subr.bf16.mxu0 0
    %915 = vmatpush1.bf16.msra.mxu0 0
    %916 = vmatprep.subr.bf16.mxu0 0
    %917 = vmatpush1.bf16.msra.mxu0 0
    %918 = vmatprep.subr.bf16.mxu0 0
    %919 = vmatpush1.bf16.msra.mxu0 0
    %920 = vmatprep.subr.bf16.mxu0 0
    %921 = vmatpush1.bf16.msra.mxu0 0
    %922 = vmatprep.subr.bf16.mxu0 0
    %923 = vmatpush1.bf16.msra.mxu0 0
    %924 = vmatprep.subr.bf16.mxu0 0
    %925 = vmatpush1.bf16.msra.mxu0 0
    %926 = vmatprep.subr.bf16.mxu0 0
    %927 = vmatpush1.bf16.msra.mxu0 0
    %928 = vmatprep.mubr.bf16.mxu0 0
    %929 = vmatmul.mubr.bf16.gmra.mrb[0].mxu0 %v894
    %v930 = vpop.f32.mrb[0].mxu0
    %v931 = vadd.f32 0.0, %v930
    %v932 = vpop.f32.mrb[0].mxu0
    %v933 = vpop.f32.mrb[0].mxu0
    %v934 = vadd.f32 0.0, %v933
    %v935 = vpop.f32.mrb[0].mxu0
    %936 = vdwg.mxu0
    %v937 = vld [vmem:[%s13 + $0x8] sm:$0xf]
    %v938 = vld [vmem:[%s13 + $0xc] sm:$0xf]
    %v939 = vpack.c.bf16 %v934, %v931
    %v942 = vunpack.c.l.b16 %v937
    %v943 = vunpack.c.l.b16 %v938
    %v944 = vpack.c.b16 %v943, %v942
    %v947 = vsel %vm551, %v939, 0
    %949 = vmatprep.subr.bf16.mxu0 0
    %950 = vmatpush1.bf16.msra.mxu0 %v944
    %951 = vmatprep.subr.bf16.mxu0 0
    %952 = vmatpush1.bf16.msra.mxu0 0
    %953 = vmatprep.subr.bf16.mxu0 0
    %954 = vmatpush1.bf16.msra.mxu0 0
    %955 = vmatprep.subr.bf16.mxu0 0
    %956 = vmatpush1.bf16.msra.mxu0 0
    %957 = vmatprep.subr.bf16.mxu0 0
    %958 = vmatpush1.bf16.msra.mxu0 0
    %959 = vmatprep.subr.bf16.mxu0 0
    %960 = vmatpush1.bf16.msra.mxu0 0
    %961 = vmatprep.subr.bf16.mxu0 0
    %962 = vmatpush1.bf16.msra.mxu0 0
    %963 = vmatprep.subr.bf16.mxu0 0
    %964 = vmatpush1.bf16.msra.mxu0 0
    %965 = vmatprep.subr.bf16.mxu0 0
    %966 = vmatpush1.bf16.msra.mxu0 0
    %967 = vmatprep.subr.bf16.mxu0 0
    %968 = vmatpush1.bf16.msra.mxu0 0
    %969 = vmatprep.subr.bf16.mxu0 0
    %970 = vmatpush1.bf16.msra.mxu0 0
    %971 = vmatprep.subr.bf16.mxu0 0
    %972 = vmatpush1.bf16.msra.mxu0 0
    %973 = vmatprep.subr.bf16.mxu0 0
    %974 = vmatpush1.bf16.msra.mxu0 0
    %975 = vmatprep.subr.bf16.mxu0 0
    %976 = vmatpush1.bf16.msra.mxu0 0
    %977 = vmatprep.subr.bf16.mxu0 0
    %978 = vmatpush1.bf16.msra.mxu0 0
    %979 = vmatprep.subr.bf16.mxu0 0
    %980 = vmatpush1.bf16.msra.mxu0 0
    %981 = vmatprep.mubr.bf16.mxu0 0
    %982 = vmatmul.mubr.bf16.gmra.mrb[0].mxu0 %v947
    %v983 = vpop.f32.mrb[0].mxu0
    %v984 = vadd.f32 0.0, %v983
    %v985 = vpop.f32.mrb[0].mxu0
    %v986 = vpop.f32.mrb[0].mxu0
    %v987 = vadd.f32 0.0, %v986
    %v988 = vpop.f32.mrb[0].mxu0
    %989 = vdwg.mxu0
    %v992 = vunpack.c.l.b16 %v667
    %v993 = vunpack.c.l.b16 %v668
    %v994 = vpack.c.b16 %v993, %v992
    %v997 = vsel %vm551, %v669, 0
    %999 = vmatprep.subr.bf16.mxu0 0
    %1000 = vmatpush1.bf16.msra.mxu0 %v994
    %1001 = vmatprep.subr.bf16.mxu0 0
    %1002 = vmatpush1.bf16.msra.mxu0 0
    %1003 = vmatprep.subr.bf16.mxu0 0
    %1004 = vmatpush1.bf16.msra.mxu0 0
    %1005 = vmatprep.subr.bf16.mxu0 0
    %1006 = vmatpush1.bf16.msra.mxu0 0
    %1007 = vmatprep.subr.bf16.mxu0 0
    %1008 = vmatpush1.bf16.msra.mxu0 0
    %1009 = vmatprep.subr.bf16.mxu0 0
    %1010 = vmatpush1.bf16.msra.mxu0 0
    %1011 = vmatprep.subr.bf16.mxu0 0
    %1012 = vmatpush1.bf16.msra.mxu0 0
    %1013 = vmatprep.subr.bf16.mxu0 0
    %1014 = vmatpush1.bf16.msra.mxu0 0
    %1015 = vmatprep.subr.bf16.mxu0 0
    %1016 = vmatpush1.bf16.msra.mxu0 0
    %1017 = vmatprep.subr.bf16.mxu0 0
    %1018 = vmatpush1.bf16.msra.mxu0 0
    %1019 = vmatprep.subr.bf16.mxu0 0
    %1020 = vmatpush1.bf16.msra.mxu0 0
    %1021 = vmatprep.subr.bf16.mxu0 0
    %1022 = vmatpush1.bf16.msra.mxu0 0
    %1023 = vmatprep.subr.bf16.mxu0 0
    %1024 = vmatpush1.bf16.msra.mxu0 0
    %1025 = vmatprep.subr.bf16.mxu0 0
    %1026 = vmatpush1.bf16.msra.mxu0 0
    %1027 = vmatprep.subr.bf16.mxu0 0
    %1028 = vmatpush1.bf16.msra.mxu0 0
    %1029 = vmatprep.subr.bf16.mxu0 0
    %1030 = vmatpush1.bf16.msra.mxu0 0
    %1031 = vmatprep.mubr.bf16.mxu0 0
    %1032 = vmatmul.mubr.bf16.gmra.mrb[0].mxu0 %v997
    %v1033 = vpop.f32.mrb[0].mxu0
    %v1034 = vadd.f32 %v984, %v1033
    %v1035 = vpop.f32.mrb[0].mxu0
    %v1036 = vpop.f32.mrb[0].mxu0
    %v1037 = vadd.f32 %v987, %v1036
    %v1038 = vpop.f32.mrb[0].mxu0
    %1039 = vdwg.mxu0
    %v1040 = vld [vmem:[%s14] sm:$0x1]
    %v1042 = vlaneseq
    %v1043 = vshrl.u32 %v1042, 7
    %v1044 = vsub.s32 0, %v1043
    %v1045 = vrot.slane %v1040, %v1044
    %v1047 = vadd.f32 %v1034, %v1045
    %v1048 = vadd.f32 %v1037, %v1045
    %v1049 = vadd.f32 %v325, %v1047
    %v1050 = vadd.f32 %v326, %v1048
    %v1051 = vld [vmem:[%s15] sm:$0x1]
    %v1052 = vld [vmem:[%s16] sm:$0x1]
    %v1053 = vsel %vm283, %v1049, 0.0
    %1054 = vadd.xlane.f32.xlu0 %v1053
    %v1055 = vpop.xlane.xlu0 %1054
    %v1056 = vsel %vm283, %v1050, 0.0
    %1057 = vadd.xlane.f32.xlu0 %v1056
    %v1058 = vpop.xlane.xlu0 %1057
    %v1059 = vmul.f32 %v1055, %v290
    %v1060 = vmul.f32 %v1058, %v290
    %v1061 = vsub.f32 %v1049, %v1059
    %v1062 = vsub.f32 %v1050, %v1060
    %v1063 = vmul.f32 %v1061, %v1061
    %v1064 = vmul.f32 %v1062, %v1062
    %v1065 = vsel %vm283, %v1063, 0.0
    %1066 = vadd.xlane.f32.xlu0 %v1065
    %v1067 = vpop.xlane.xlu0 %1066
    %v1068 = vsel %vm283, %v1064, 0.0
    %1069 = vadd.xlane.f32.xlu0 %v1068
    %v1070 = vpop.xlane.xlu0 %1069
    %v1071 = vmul.f32 %v1067, %v290
    %v1072 = vmul.f32 %v1070, %v290
    %v1073 = vadd.f32 %v1071, 1e-12
    %v1074 = vadd.f32 %v1072, 1e-12
    %v1075 = vrsqrt.pop %v1073
    %v1076 = vrsqrt.pop %v1074
    %v1077 = vmul.f32 %v1061, %v1075
    %v1078 = vmul.f32 %v1062, %v1076
    %v1080 = vlaneseq
    %v1081 = vshrl.u32 %v1080, 7
    %v1082 = vsub.s32 0, %v1081
    %v1083 = vrot.slane %v1051, %v1082
    %v1085 = vmul.f32 %v1077, %v1083
    %v1086 = vmul.f32 %v1078, %v1083
    %v1088 = vlaneseq
    %v1089 = vshrl.u32 %v1088, 7
    %v1090 = vsub.s32 0, %v1089
    %v1091 = vrot.slane %v1052, %v1090
    %v1093 = vadd.f32 %v1085, %v1091
    %v1094 = vadd.f32 %v1086, %v1091
    %v1095 = vld [vmem:[%s17] sm:$0xf]
    %v1096 = vld [vmem:[%s17 + $0x4] sm:$0xf]
    %v1097 = vld [vmem:[%s17 + $0x8] sm:$0xf]
    %v1098 = vld [vmem:[%s17 + $0xc] sm:$0xf]
    %v1099 = vpack.c.bf16 %v1094, %v1093
    %v1100 = vld [vmem:[#allocation5] sm:$0x1]
    %v1102 = vlaneseq
    %v1103 = vshrl.u32 %v1102, 7
    %v1104 = vsub.s32 0, %v1103
    %v1105 = vrot.slane %v1100, %v1104
    %v1111 = vunpack.c.l.b16 %v1095
    %v1112 = vunpack.c.l.b16 %v1096
    %v1113 = vunpack.c.l.b16 %v1097
    %v1114 = vunpack.c.l.b16 %v1098
    %v1115 = vpack.c.b16 %v1112, %v1111
    %v1116 = vpack.c.b16 %v1114, %v1113
    %v1120 = vsel %vm283, %v1099, 0
    %1122 = vmatprep.subr.bf16.mxu0 0
    %1123 = vmatpush1.bf16.msra.mxu0 %v1115
    %1124 = vmatprep.subr.bf16.mxu0 0
    %1125 = vmatpush1.bf16.msra.mxu0 %v1116
    %1126 = vmatprep.subr.bf16.mxu0 0
    %1127 = vmatpush1.bf16.msra.mxu0 0
    %1128 = vmatprep.subr.bf16.mxu0 0
    %1129 = vmatpush1.bf16.msra.mxu0 0
    %1130 = vmatprep.subr.bf16.mxu0 0
    %1131 = vmatpush1.bf16.msra.mxu0 0
    %1132 = vmatprep.subr.bf16.mxu0 0
    %1133 = vmatpush1.bf16.msra.mxu0 0
    %1134 = vmatprep.subr.bf16.mxu0 0
    %1135 = vmatpush1.bf16.msra.mxu0 0
    %1136 = vmatprep.subr.bf16.mxu0 0
    %1137 = vmatpush1.bf16.msra.mxu0 0
    %1138 = vmatprep.subr.bf16.mxu0 0
    %1139 = vmatpush1.bf16.msra.mxu0 0
    %1140 = vmatprep.subr.bf16.mxu0 0
    %1141 = vmatpush1.bf16.msra.mxu0 0
    %1142 = vmatprep.subr.bf16.mxu0 0
    %1143 = vmatpush1.bf16.msra.mxu0 0
    %1144 = vmatprep.subr.bf16.mxu0 0
    %1145 = vmatpush1.bf16.msra.mxu0 0
    %1146 = vmatprep.subr.bf16.mxu0 0
    %1147 = vmatpush1.bf16.msra.mxu0 0
    %1148 = vmatprep.subr.bf16.mxu0 0
    %1149 = vmatpush1.bf16.msra.mxu0 0
    %1150 = vmatprep.subr.bf16.mxu0 0
    %1151 = vmatpush1.bf16.msra.mxu0 0
    %1152 = vmatprep.subr.bf16.mxu0 0
    %1153 = vmatpush1.bf16.msra.mxu0 0
    %1154 = vmatprep.mubr.bf16.mxu0 0
    %1155 = vmatmul.mubr.bf16.gmra.mrb[0].mxu0 %v1120
    %v1156 = vpop.f32.mrb[0].mxu0
    %v1157 = vadd.f32 %v1105, %v1156
    %v1158 = vpop.f32.mrb[0].mxu0
    %v1159 = vpop.f32.mrb[0].mxu0
    %v1160 = vadd.f32 %v1105, %v1159
    %v1161 = vpop.f32.mrb[0].mxu0
    %1162 = vdwg.mxu0
    %v1163 = vmul.f32 %v1157, %v1157
    %v1164 = vmul.f32 %v1160, %v1160
    %v1165 = vmul.f32 %v1157, %v1163
    %v1166 = vmul.f32 %v1160, %v1164
    %v1167 = vmul.f32 %v1165, 0.044715
    %v1168 = vmul.f32 %v1166, 0.044715
    %v1169 = vadd.f32 %v1157, %v1167
    %v1170 = vadd.f32 %v1160, %v1168
    %v1171 = vmul.f32 %v1169, 0.7978846
    %v1172 = vmul.f32 %v1170, 0.7978846
    %v1173 = vtanh.pop %v1171
    %v1174 = vtanh.pop %v1172
    %v1175 = vadd.f32 %v1173, 1.0
    %v1176 = vadd.f32 %v1174, 1.0
    %v1177 = vmul.f32 %v1175, 0.5
    %v1178 = vmul.f32 %v1176, 0.5
    %v1179 = vmul.f32 %v1157, %v1177
    %v1180 = vmul.f32 %v1160, %v1178
    %v1181 = vld [vmem:[%s19] sm:$0xf]
    %v1182 = vld [vmem:[%s19 + $0x4] sm:$0xf]
    %v1183 = vld [vmem:[%s19 + $0x8] sm:$0xf]
    %v1184 = vld [vmem:[%s19 + $0xc] sm:$0xf]
    %v1185 = vld [vmem:[%s19 + $0x10] sm:$0xf]
    %v1186 = vld [vmem:[%s19 + $0x14] sm:$0xf]
    %v1187 = vld [vmem:[%s19 + $0x18] sm:$0xf]
    %v1188 = vld [vmem:[%s19 + $0x1c] sm:$0xf]
    %v1189 = vpack.c.bf16 %v1180, %v1179
    %v1190 = vld [vmem:[#allocation8] sm:$0x1]
    %v1192 = vlaneseq
    %v1193 = vshrl.u32 %v1192, 7
    %v1194 = vsub.s32 0, %v1193
    %v1195 = vrot.slane %v1190, %v1194
    %v1205 = vunpack.c.l.b16 %v1181
    %v1206 = vunpack.c.l.b16 %v1182
    %v1207 = vunpack.c.l.b16 %v1183
    %v1208 = vunpack.c.l.b16 %v1184
    %v1209 = vunpack.c.l.b16 %v1185
    %v1210 = vunpack.c.l.b16 %v1186
    %v1211 = vunpack.c.l.b16 %v1187
    %v1212 = vunpack.c.l.b16 %v1188
    %v1213 = vpack.c.b16 %v1206, %v1205
    %v1214 = vpack.c.b16 %v1208, %v1207
    %v1215 = vpack.c.b16 %v1210, %v1209
    %v1216 = vpack.c.b16 %v1212, %v1211
    %vm1221 = vcmask 523264
    %v1223 = vsel %vm1221, %v1189, 0
    %1225 = vmatprep.subr.bf16.mxu0 0
    %1226 = vmatpush1.bf16.msra.mxu0 %v1213
    %1227 = vmatprep.subr.bf16.mxu0 0
    %1228 = vmatpush1.bf16.msra.mxu0 %v1214
    %1229 = vmatprep.subr.bf16.mxu0 0
    %1230 = vmatpush1.bf16.msra.mxu0 %v1215
    %1231 = vmatprep.subr.bf16.mxu0 0
    %1232 = vmatpush1.bf16.msra.mxu0 %v1216
    %1233 = vmatprep.subr.bf16.mxu0 0
    %1234 = vmatpush1.bf16.msra.mxu0 0
    %1235 = vmatprep.subr.bf16.mxu0 0
    %1236 = vmatpush1.bf16.msra.mxu0 0
    %1237 = vmatprep.subr.bf16.mxu0 0
    %1238 = vmatpush1.bf16.msra.mxu0 0
    %1239 = vmatprep.subr.bf16.mxu0 0
    %1240 = vmatpush1.bf16.msra.mxu0 0
    %1241 = vmatprep.subr.bf16.mxu0 0
    %1242 = vmatpush1.bf16.msra.mxu0 0
    %1243 = vmatprep.subr.bf16.mxu0 0
    %1244 = vmatpush1.bf16.msra.mxu0 0
    %1245 = vmatprep.subr.bf16.mxu0 0
    %1246 = vmatpush1.bf16.msra.mxu0 0
    %1247 = vmatprep.subr.bf16.mxu0 0
    %1248 = vmatpush1.bf16.msra.mxu0 0
    %1249 = vmatprep.subr.bf16.mxu0 0
    %1250 = vmatpush1.bf16.msra.mxu0 0
    %1251 = vmatprep.subr.bf16.mxu0 0
    %1252 = vmatpush1.bf16.msra.mxu0 0
    %1253 = vmatprep.subr.bf16.mxu0 0
    %1254 = vmatpush1.bf16.msra.mxu0 0
    %1255 = vmatprep.subr.bf16.mxu0 0
    %1256 = vmatpush1.bf16.msra.mxu0 0
    %1257 = vmatprep.mubr.bf16.mxu0 0
    %1258 = vmatmul.mubr.bf16.gmra.mrb[0].mxu0 %v1223
    %v1259 = vpop.f32.mrb[0].mxu0
    %v1260 = vadd.f32 %v1195, %v1259
    %v1261 = vpop.f32.mrb[0].mxu0
    %v1262 = vpop.f32.mrb[0].mxu0
    %v1263 = vadd.f32 %v1195, %v1262
    %v1264 = vpop.f32.mrb[0].mxu0
    %1265 = vdwg.mxu0
    %v1266 = vadd.f32 %v1093, %v1260
    %v1267 = vadd.f32 %v1094, %v1263
    %v1268 = vld [vmem:[%s21] sm:$0x1]
    %v1269 = vld [vmem:[%s22] sm:$0x1]
    %v1270 = vsel %vm283, %v1266, 0.0
    %1271 = vadd.xlane.f32.xlu0 %v1270
    %v1272 = vpop.xlane.xlu0 %1271
    %v1273 = vsel %vm283, %v1267, 0.0
    %1274 = vadd.xlane.f32.xlu0 %v1273
    %v1275 = vpop.xlane.xlu0 %1274
    %v1276 = vmul.f32 %v1272, %v290
    %v1277 = vmul.f32 %v1275, %v290
    %v1278 = vsub.f32 %v1266, %v1276
    %v1279 = vsub.f32 %v1267, %v1277
    %v1280 = vmul.f32 %v1278, %v1278
    %v1281 = vmul.f32 %v1279, %v1279
    %v1282 = vsel %vm283, %v1280, 0.0
    %1283 = vadd.xlane.f32.xlu0 %v1282
    %v1284 = vpop.xlane.xlu0 %1283
    %v1285 = vsel %vm283, %v1281, 0.0
    %1286 = vadd.xlane.f32.xlu0 %v1285
    %v1287 = vpop.xlane.xlu0 %1286
    %v1288 = vmul.f32 %v1284, %v290
    %v1289 = vmul.f32 %v1287, %v290
    %v1290 = vadd.f32 %v1288, 1e-12
    %v1291 = vadd.f32 %v1289, 1e-12
    %v1292 = vrsqrt.pop %v1290
    %v1293 = vrsqrt.pop %v1291
    %v1294 = vmul.f32 %v1278, %v1292
    %v1295 = vmul.f32 %v1279, %v1293
    %v1297 = vlaneseq
    %v1298 = vshrl.u32 %v1297, 7
    %v1299 = vsub.s32 0, %v1298
    %v1300 = vrot.slane %v1268, %v1299
    %v1302 = vmul.f32 %v1294, %v1300
    %v1303 = vmul.f32 %v1295, %v1300
    %v1305 = vlaneseq
    %v1306 = vshrl.u32 %v1305, 7
    %v1307 = vsub.s32 0, %v1306
    %v1308 = vrot.slane %v1269, %v1307
    %v1310 = vadd.f32 %v1302, %v1308
    %v1311 = vadd.f32 %v1303, %v1308
    %v1312 = vpack.c.bf16 %v1311, %v1310
    %s1313 = scalar_lea.vmem %s7, 16
    %v1314 = vld [vmem:[%s1313] sm:$0xf]
    %v1315 = vld [vmem:[%s1313 + $0x4] sm:$0xf]
    %v1316 = vld [vmem:[%s1313 + $0x8] sm:$0xf]
    %v1317 = vld [vmem:[%s1313 + $0xc] sm:$0xf]
    %s1318 = scalar_lea.vmem %s8, 1
    %v1319 = vld [vmem:[%s1318] sm:$0x1]
    %v1321 = vlaneseq
    %v1322 = vshrl.u32 %v1321, 7
    %v1323 = vsub.s32 0, %v1322
    %v1324 = vrot.slane %v1319, %v1323
    %v1330 = vunpack.c.l.b16 %v1314
    %v1331 = vunpack.c.l.b16 %v1315
    %v1332 = vunpack.c.l.b16 %v1316
    %v1333 = vunpack.c.l.b16 %v1317
    %v1334 = vpack.c.b16 %v1331, %v1330
    %v1335 = vpack.c.b16 %v1333, %v1332
    %v1339 = vsel %vm283, %v1312, 0
    %1341 = vmatprep.subr.bf16.mxu0 0
    %1342 = vmatpush1.bf16.msra.mxu0 %v1334
    %1343 = vmatprep.subr.bf16.mxu0 0
    %1344 = vmatpush1.bf16.msra.mxu0 %v1335
    %1345 = vmatprep.subr.bf16.mxu0 0
    %1346 = vmatpush1.bf16.msra.mxu0 0
    %1347 = vmatprep.subr.bf16.mxu0 0
    %1348 = vmatpush1.bf16.msra.mxu0 0
    %1349 = vmatprep.subr.bf16.mxu0 0
    %1350 = vmatpush1.bf16.msra.mxu0 0
    %1351 = vmatprep.subr.bf16.mxu0 0
    %1352 = vmatpush1.bf16.msra.mxu0 0
    %1353 = vmatprep.subr.bf16.mxu0 0
    %1354 = vmatpush1.bf16.msra.mxu0 0
    %1355 = vmatprep.subr.bf16.mxu0 0
    %1356 = vmatpush1.bf16.msra.mxu0 0
    %1357 = vmatprep.subr.bf16.mxu0 0
    %1358 = vmatpush1.bf16.msra.mxu0 0
    %1359 = vmatprep.subr.bf16.mxu0 0
    %1360 = vmatpush1.bf16.msra.mxu0 0
    %1361 = vmatprep.subr.bf16.mxu0 0
    %1362 = vmatpush1.bf16.msra.mxu0 0
    %1363 = vmatprep.subr.bf16.mxu0 0
    %1364 = vmatpush1.bf16.msra.mxu0 0
    %1365 = vmatprep.subr.bf16.mxu0 0
    %1366 = vmatpush1.bf16.msra.mxu0 0
    %1367 = vmatprep.subr.bf16.mxu0 0
    %1368 = vmatpush1.bf16.msra.mxu0 0
    %1369 = vmatprep.subr.bf16.mxu0 0
    %1370 = vmatpush1.bf16.msra.mxu0 0
    %1371 = vmatprep.subr.bf16.mxu0 0
    %1372 = vmatpush1.bf16.msra.mxu0 0
    %1373 = vmatprep.mubr.bf16.mxu0 0
    %1374 = vmatmul.mubr.bf16.gmra.mrb[0].mxu0 %v1339
    %v1375 = vpop.f32.mrb[0].mxu0
    %v1376 = vadd.f32 %v1324, %v1375
    %v1377 = vpop.f32.mrb[0].mxu0
    %v1378 = vpop.f32.mrb[0].mxu0
    %v1379 = vadd.f32 %v1324, %v1378
    %v1380 = vpop.f32.mrb[0].mxu0
    %1381 = vdwg.mxu0
    %s1382 = scalar_lea.vmem %s9, 16
    %v1383 = vld [vmem:[%s1382] sm:$0xf]
    %v1384 = vld [vmem:[%s1382 + $0x4] sm:$0xf]
    %v1385 = vld [vmem:[%s1382 + $0x8] sm:$0xf]
    %v1386 = vld [vmem:[%s1382 + $0xc] sm:$0xf]
    %s1387 = scalar_lea.vmem %s10, 1
    %v1388 = vld [vmem:[%s1387] sm:$0x1]
    %v1390 = vlaneseq
    %v1391 = vshrl.u32 %v1390, 7
    %v1392 = vsub.s32 0, %v1391
    %v1393 = vrot.slane %v1388, %v1392
    %v1399 = vunpack.c.l.b16 %v1383
    %v1400 = vunpack.c.l.b16 %v1384
    %v1401 = vunpack.c.l.b16 %v1385
    %v1402 = vunpack.c.l.b16 %v1386
    %v1403 = vpack.c.b16 %v1400, %v1399
    %v1404 = vpack.c.b16 %v1402, %v1401
    %1407 = vmatprep.subr.bf16.mxu0 0
    %1408 = vmatpush1.bf16.msra.mxu0 %v1403
    %1409 = vmatprep.subr.bf16.mxu0 0
    %1410 = vmatpush1.bf16.msra.mxu0 %v1404
    %1411 = vmatprep.subr.bf16.mxu0 0
    %1412 = vmatpush1.bf16.msra.mxu0 0
    %1413 = vmatprep.subr.bf16.mxu0 0
    %1414 = vmatpush1.bf16.msra.mxu0 0
    %1415 = vmatprep.subr.bf16.mxu0 0
    %1416 = vmatpush1.bf16.msra.mxu0 0
    %1417 = vmatprep.subr.bf16.mxu0 0
    %1418 = vmatpush1.bf16.msra.mxu0 0
    %1419 = vmatprep.subr.bf16.mxu0 0
    %1420 = vmatpush1.bf16.msra.mxu0 0
    %1421 = vmatprep.subr.bf16.mxu0 0
    %1422 = vmatpush1.bf16.msra.mxu0 0
    %1423 = vmatprep.subr.bf16.mxu0 0
    %1424 = vmatpush1.bf16.msra.mxu0 0
    %1425 = vmatprep.subr.bf16.mxu0 0
    %1426 = vmatpush1.bf16.msra.mxu0 0
    %1427 = vmatprep.subr.bf16.mxu0 0
    %1428 = vmatpush1.bf16.msra.mxu0 0
    %1429 = vmatprep.subr.bf16.mxu0 0
    %1430 = vmatpush1.bf16.msra.mxu0 0
    %1431 = vmatprep.subr.bf16.mxu0 0
    %1432 = vmatpush1.bf16.msra.mxu0 0
    %1433 = vmatprep.subr.bf16.mxu0 0
    %1434 = vmatpush1.bf16.msra.mxu0 0
    %1435 = vmatprep.subr.bf16.mxu0 0
    %1436 = vmatpush1.bf16.msra.mxu0 0
    %1437 = vmatprep.subr.bf16.mxu0 0
    %1438 = vmatpush1.bf16.msra.mxu0 0
    %1439 = vmatprep.mubr.bf16.mxu0 0
    %1440 = vmatmul.mubr.bf16.gmra.mrb[0].mxu0 %v1339
    %v1441 = vpop.f32.mrb[0].mxu0
    %v1442 = vadd.f32 %v1393, %v1441
    %v1443 = vpop.f32.mrb[0].mxu0
    %v1444 = vpop.f32.mrb[0].mxu0
    %v1445 = vadd.f32 %v1393, %v1444
    %v1446 = vpop.f32.mrb[0].mxu0
    %1447 = vdwg.mxu0
    %s1448 = scalar_lea.vmem %s11, 16
    %v1449 = vld [vmem:[%s1448] sm:$0xf]
    %v1450 = vld [vmem:[%s1448 + $0x4] sm:$0xf]
    %v1451 = vld [vmem:[%s1448 + $0x8] sm:$0xf]
    %v1452 = vld [vmem:[%s1448 + $0xc] sm:$0xf]
    %s1453 = scalar_lea.vmem %s12, 1
    %v1454 = vld [vmem:[%s1453] sm:$0x1]
    %v1456 = vlaneseq
    %v1457 = vshrl.u32 %v1456, 7
    %v1458 = vsub.s32 0, %v1457
    %v1459 = vrot.slane %v1454, %v1458
    %v1465 = vunpack.c.l.b16 %v1449
    %v1466 = vunpack.c.l.b16 %v1450
    %v1467 = vunpack.c.l.b16 %v1451
    %v1468 = vunpack.c.l.b16 %v1452
    %v1469 = vpack.c.b16 %v1466, %v1465
    %v1470 = vpack.c.b16 %v1468, %v1467
    %1473 = vmatprep.subr.bf16.mxu0 0
    %1474 = vmatpush1.bf16.msra.mxu0 %v1469
    %1475 = vmatprep.subr.bf16.mxu0 0
    %1476 = vmatpush1.bf16.msra.mxu0 %v1470
    %1477 = vmatprep.subr.bf16.mxu0 0
    %1478 = vmatpush1.bf16.msra.mxu0 0
    %1479 = vmatprep.subr.bf16.mxu0 0
    %1480 = vmatpush1.bf16.msra.mxu0 0
    %1481 = vmatprep.subr.bf16.mxu0 0
    %1482 = vmatpush1.bf16.msra.mxu0 0
    %1483 = vmatprep.subr.bf16.mxu0 0
    %1484 = vmatpush1.bf16.msra.mxu0 0
    %1485 = vmatprep.subr.bf16.mxu0 0
    %1486 = vmatpush1.bf16.msra.mxu0 0
    %1487 = vmatprep.subr.bf16.mxu0 0
    %1488 = vmatpush1.bf16.msra.mxu0 0
    %1489 = vmatprep.subr.bf16.mxu0 0
    %1490 = vmatpush1.bf16.msra.mxu0 0
    %1491 = vmatprep.subr.bf16.mxu0 0
    %1492 = vmatpush1.bf16.msra.mxu0 0
    %1493 = vmatprep.subr.bf16.mxu0 0
    %1494 = vmatpush1.bf16.msra.mxu0 0
    %1495 = vmatprep.subr.bf16.mxu0 0
    %1496 = vmatpush1.bf16.msra.mxu0 0
    %1497 = vmatprep.subr.bf16.mxu0 0
    %1498 = vmatpush1.bf16.msra.mxu0 0
    %1499 = vmatprep.subr.bf16.mxu0 0
    %1500 = vmatpush1.bf16.msra.mxu0 0
    %1501 = vmatprep.subr.bf16.mxu0 0
    %1502 = vmatpush1.bf16.msra.mxu0 0
    %1503 = vmatprep.subr.bf16.mxu0 0
    %1504 = vmatpush1.bf16.msra.mxu0 0
    %1505 = vmatprep.mubr.bf16.mxu0 0
    %1506 = vmatmul.mubr.bf16.gmra.mrb[0].mxu0 %v1339
    %v1507 = vpop.f32.mrb[0].mxu0
    %v1508 = vadd.f32 %v1459, %v1507
    %v1509 = vpop.f32.mrb[0].mxu0
    %v1510 = vpop.f32.mrb[0].mxu0
    %v1511 = vadd.f32 %v1459, %v1510
    %v1512 = vpop.f32.mrb[0].mxu0
    %1513 = vdwg.mxu0
    %v1514 = vpack.c.bf16 %v1379, %v1376
    %v1515 = vpack.c.bf16 %v1445, %v1442
    %v1517 = vsel %vm551, %v1514, 0
    %v1520 = vsel %vm551, %v1515, 0
    %1522 = vmatprep.subr.bf16.mxu0 0
    %1523 = vmatpush1.bf16.xpose.msra.mxu0 %v1520
    %1524 = vmatprep.subr.bf16.mxu0 0
    %1525 = vmatpush1.bf16.xpose.msra.mxu0 0
    %1526 = vmatprep.subr.bf16.mxu0 0
    %1527 = vmatpush1.bf16.xpose.msra.mxu0 0
    %1528 = vmatprep.subr.bf16.mxu0 0
    %1529 = vmatpush1.bf16.xpose.msra.mxu0 0
    %1530 = vmatprep.subr.bf16.mxu0 0
    %1531 = vmatpush1.bf16.xpose.msra.mxu0 0
    %1532 = vmatprep.subr.bf16.mxu0 0
    %1533 = vmatpush1.bf16.xpose.msra.mxu0 0
    %1534 = vmatprep.subr.bf16.mxu0 0
    %1535 = vmatpush1.bf16.xpose.msra.mxu0 0
    %1536 = vmatprep.subr.bf16.mxu0 0
    %1537 = vmatpush1.bf16.xpose.msra.mxu0 0
    %1538 = vmatprep.subr.bf16.mxu0 0
    %1539 = vmatpush1.bf16.xpose.msra.mxu0 0
    %1540 = vmatprep.subr.bf16.mxu0 0
    %1541 = vmatpush1.bf16.xpose.msra.mxu0 0
    %1542 = vmatprep.subr.bf16.mxu0 0
    %1543 = vmatpush1.bf16.xpose.msra.mxu0 0
    %1544 = vmatprep.subr.bf16.mxu0 0
    %1545 = vmatpush1.bf16.xpose.msra.mxu0 0
    %1546 = vmatprep.subr.bf16.mxu0 0
    %1547 = vmatpush1.bf16.xpose.msra.mxu0 0
    %1548 = vmatprep.subr.bf16.mxu0 0
    %1549 = vmatpush1.bf16.xpose.msra.mxu0 0
    %1550 = vmatprep.subr.bf16.mxu0 0
    %1551 = vmatpush1.bf16.xpose.msra.mxu0 0
    %1552 = vmatprep.subr.bf16.mxu0 0
    %1553 = vmatpush1.bf16.xpose.msra.mxu0 0
    %1554 = vmatprep.mubr.bf16.mxu0 0
    %1555 = vmatmul.mubr.bf16.gmra.mrb[0].mxu0 %v1517
    %v1556 = vpop.f32.mrb[0].mxu0
    %v1557 = vadd.f32 %v351, %v1556
    %v1558 = vpop.f32.mrb[0].mxu0
    %v1559 = vpop.f32.mrb[0].mxu0
    %v1560 = vadd.f32 %v352, %v1559
    %v1561 = vpop.f32.mrb[0].mxu0
    %1562 = vdwg.mxu0
    %v1563 = vsel %vm551, %v1557, -inf
    %1564 = vmax.xlane.f32.xlu0 %v1563
    %v1565 = vpop.xlane.xlu0 %1564
    %v1566 = vsel %vm551, %v1560, -inf
    %1567 = vmax.xlane.f32.xlu0 %v1566
    %v1568 = vpop.xlane.xlu0 %1567
    %v1569 = vsub.f32 %v1557, %v1565
    %v1570 = vsub.f32 %v1560, %v1568
    %v1571 = vmul.f32 %v1569, 1.442695
    %v1572 = vpow.pop %v1571
    %v1573 = vmul.f32 %v1570, 1.442695
    %v1574 = vpow.pop %v1573
    %v1575 = vsel %vm551, %v1572, 0.0
    %1576 = vadd.xlane.f32.xlu0 %v1575
    %v1577 = vpop.xlane.xlu0 %1576
    %v1578 = vsel %vm551, %v1574, 0.0
    %1579 = vadd.xlane.f32.xlu0 %v1578
    %v1580 = vpop.xlane.xlu0 %1579
    %v1581 = vrcp.pop %v1577
    %v1582 = vrcp.pop %v1580
    %v1583 = vmul.f32 %v1572, %v1581
    %v1584 = vmul.f32 %v1574, %v1582
    %v1585 = vpack.c.bf16 %v1584, %v1583
    %v1586 = vpack.c.bf16 %v1511, %v1508
    %v1588 = vsel %vm551, %v1585, 0
    %1590 = vmatprep.subr.bf16.mxu0 0
    %1591 = vmatpush1.bf16.msra.mxu0 %v1586
    %1592 = vmatprep.subr.bf16.mxu0 0
    %1593 = vmatpush1.bf16.msra.mxu0 0
    %1594 = vmatprep.subr.bf16.mxu0 0
    %1595 = vmatpush1.bf16.msra.mxu0 0
    %1596 = vmatprep.subr.bf16.mxu0 0
    %1597 = vmatpush1.bf16.msra.mxu0 0
    %1598 = vmatprep.subr.bf16.mxu0 0
    %1599 = vmatpush1.bf16.msra.mxu0 0
    %1600 = vmatprep.subr.bf16.mxu0 0
    %1601 = vmatpush1.bf16.msra.mxu0 0
    %1602 = vmatprep.subr.bf16.mxu0 0
    %1603 = vmatpush1.bf16.msra.mxu0 0
    %1604 = vmatprep.subr.bf16.mxu0 0
    %1605 = vmatpush1.bf16.msra.mxu0 0
    %1606 = vmatprep.subr.bf16.mxu0 0
    %1607 = vmatpush1.bf16.msra.mxu0 0
    %1608 = vmatprep.subr.bf16.mxu0 0
    %1609 = vmatpush1.bf16.msra.mxu0 0
    %1610 = vmatprep.subr.bf16.mxu0 0
    %1611 = vmatpush1.bf16.msra.mxu0 0
    %1612 = vmatprep.subr.bf16.mxu0 0
    %1613 = vmatpush1.bf16.msra.mxu0 0
    %1614 = vmatprep.subr.bf16.mxu0 0
    %1615 = vmatpush1.bf16.msra.mxu0 0
    %1616 = vmatprep.subr.bf16.mxu0 0
    %1617 = vmatpush1.bf16.msra.mxu0 0
    %1618 = vmatprep.subr.bf16.mxu0 0
    %1619 = vmatpush1.bf16.msra.mxu0 0
    %1620 = vmatprep.subr.bf16.mxu0 0
    %1621 = vmatpush1.bf16.msra.mxu0 0
    %1622 = vmatprep.mubr.bf16.mxu0 0
    %1623 = vmatmul.mubr.bf16.gmra.mrb[0].mxu0 %v1588
    %v1624 = vpop.f32.mrb[0].mxu0
    %v1625 = vadd.f32 0.0, %v1624
    %v1626 = vpop.f32.mrb[0].mxu0
    %v1627 = vpop.f32.mrb[0].mxu0
    %v1628 = vadd.f32 0.0, %v1627
    %v1629 = vpop.f32.mrb[0].mxu0
    %1630 = vdwg.mxu0
    %s1631 = scalar_lea.vmem %s13, 16
    %v1632 = vld [vmem:[%s1631] sm:$0xf]
    %v1633 = vld [vmem:[%s1631 + $0x4] sm:$0xf]
    %v1634 = vpack.c.bf16 %v1628, %v1625
    %1635 = vrot.lane.b32.xlu0 %v1334, 112
    %v1636 = vpop.permute.xlu0 %1635
    %1637 = vrot.lane.b32.xlu0 %v1335, 112
    %v1638 = vpop.permute.xlu0 %1637
    %1641 = vrot.lane.b32.xlu0 %v1324, 112
    %v1642 = vpop.permute.xlu0 %1641
    %1644 = vmatprep.subr.bf16.mxu0 0
    %1645 = vmatpush1.bf16.msra.mxu0 %v1636
    %1646 = vmatprep.subr.bf16.mxu0 0
    %1647 = vmatpush1.bf16.msra.mxu0 %v1638
    %1648 = vmatprep.subr.bf16.mxu0 0
    %1649 = vmatpush1.bf16.msra.mxu0 0
    %1650 = vmatprep.subr.bf16.mxu0 0
    %1651 = vmatpush1.bf16.msra.mxu0 0
    %1652 = vmatprep.subr.bf16.mxu0 0
    %1653 = vmatpush1.bf16.msra.mxu0 0
    %1654 = vmatprep.subr.bf16.mxu0 0
    %1655 = vmatpush1.bf16.msra.mxu0 0
    %1656 = vmatprep.subr.bf16.mxu0 0
    %1657 = vmatpush1.bf16.msra.mxu0 0
    %1658 = vmatprep.subr.bf16.mxu0 0
    %1659 = vmatpush1.bf16.msra.mxu0 0
    %1660 = vmatprep.subr.bf16.mxu0 0
    %1661 = vmatpush1.bf16.msra.mxu0 0
    %1662 = vmatprep.subr.bf16.mxu0 0
    %1663 = vmatpush1.bf16.msra.mxu0 0
    %1664 = vmatprep.subr.bf16.mxu0 0
    %1665 = vmatpush1.bf16.msra.mxu0 0
    %1666 = vmatprep.subr.bf16.mxu0 0
    %1667 = vmatpush1.bf16.msra.mxu0 0
    %1668 = vmatprep.subr.bf16.mxu0 0
    %1669 = vmatpush1.bf16.msra.mxu0 0
    %1670 = vmatprep.subr.bf16.mxu0 0
    %1671 = vmatpush1.bf16.msra.mxu0 0
    %1672 = vmatprep.subr.bf16.mxu0 0
    %1673 = vmatpush1.bf16.msra.mxu0 0
    %1674 = vmatprep.subr.bf16.mxu0 0
    %1675 = vmatpush1.bf16.msra.mxu0 0
    %1676 = vmatprep.mubr.bf16.mxu0 0
    %1677 = vmatmul.mubr.bf16.gmra.mrb[0].mxu0 %v1339
    %v1678 = vpop.f32.mrb[0].mxu0
    %v1679 = vadd.f32 %v1642, %v1678
    %v1680 = vpop.f32.mrb[0].mxu0
    %v1681 = vpop.f32.mrb[0].mxu0
    %v1682 = vadd.f32 %v1642, %v1681
    %v1683 = vpop.f32.mrb[0].mxu0
    %1684 = vdwg.mxu0
    %1685 = vrot.lane.b32.xlu0 %v1403, 112
    %v1686 = vpop.permute.xlu0 %1685
    %1687 = vrot.lane.b32.xlu0 %v1404, 112
    %v1688 = vpop.permute.xlu0 %1687
    %1691 = vrot.lane.b32.xlu0 %v1393, 112
    %v1692 = vpop.permute.xlu0 %1691
    %1694 = vmatprep.subr.bf16.mxu0 0
    %1695 = vmatpush1.bf16.msra.mxu0 %v1686
    %1696 = vmatprep.subr.bf16.mxu0 0
    %1697 = vmatpush1.bf16.msra.mxu0 %v1688
    %1698 = vmatprep.subr.bf16.mxu0 0
    %1699 = vmatpush1.bf16.msra.mxu0 0
    %1700 = vmatprep.subr.bf16.mxu0 0
    %1701 = vmatpush1.bf16.msra.mxu0 0
    %1702 = vmatprep.subr.bf16.mxu0 0
    %1703 = vmatpush1.bf16.msra.mxu0 0
    %1704 = vmatprep.subr.bf16.mxu0 0
    %1705 = vmatpush1.bf16.msra.mxu0 0
    %1706 = vmatprep.subr.bf16.mxu0 0
    %1707 = vmatpush1.bf16.msra.mxu0 0
    %1708 = vmatprep.subr.bf16.mxu0 0
    %1709 = vmatpush1.bf16.msra.mxu0 0
    %1710 = vmatprep.subr.bf16.mxu0 0
    %1711 = vmatpush1.bf16.msra.mxu0 0
    %1712 = vmatprep.subr.bf16.mxu0 0
    %1713 = vmatpush1.bf16.msra.mxu0 0
    %1714 = vmatprep.subr.bf16.mxu0 0
    %1715 = vmatpush1.bf16.msra.mxu0 0
    %1716 = vmatprep.subr.bf16.mxu0 0
    %1717 = vmatpush1.bf16.msra.mxu0 0
    %1718 = vmatprep.subr.bf16.mxu0 0
    %1719 = vmatpush1.bf16.msra.mxu0 0
    %1720 = vmatprep.subr.bf16.mxu0 0
    %1721 = vmatpush1.bf16.msra.mxu0 0
    %1722 = vmatprep.subr.bf16.mxu0 0
    %1723 = vmatpush1.bf16.msra.mxu0 0
    %1724 = vmatprep.subr.bf16.mxu0 0
    %1725 = vmatpush1.bf16.msra.mxu0 0
    %1726 = vmatprep.mubr.bf16.mxu0 0
    %1727 = vmatmul.mubr.bf16.gmra.mrb[0].mxu0 %v1339
    %v1728 = vpop.f32.mrb[0].mxu0
    %v1729 = vadd.f32 %v1692, %v1728
    %v1730 = vpop.f32.mrb[0].mxu0
    %v1731 = vpop.f32.mrb[0].mxu0
    %v1732 = vadd.f32 %v1692, %v1731
    %v1733 = vpop.f32.mrb[0].mxu0
    %1734 = vdwg.mxu0
    %1735 = vrot.lane.b32.xlu0 %v1469, 112
    %v1736 = vpop.permute.xlu0 %1735
    %1737 = vrot.lane.b32.xlu0 %v1470, 112
    %v1738 = vpop.permute.xlu0 %1737
    %1741 = vrot.lane.b32.xlu0 %v1459, 112
    %v1742 = vpop.permute.xlu0 %1741
    %1744 = vmatprep.subr.bf16.mxu0 0
    %1745 = vmatpush1.bf16.msra.mxu0 %v1736
    %1746 = vmatprep.subr.bf16.mxu0 0
    %1747 = vmatpush1.bf16.msra.mxu0 %v1738
    %1748 = vmatprep.subr.bf16.mxu0 0
    %1749 = vmatpush1.bf16.msra.mxu0 0
    %1750 = vmatprep.subr.bf16.mxu0 0
    %1751 = vmatpush1.bf16.msra.mxu0 0
    %1752 = vmatprep.subr.bf16.mxu0 0
    %1753 = vmatpush1.bf16.msra.mxu0 0
    %1754 = vmatprep.subr.bf16.mxu0 0
    %1755 = vmatpush1.bf16.msra.mxu0 0
    %1756 = vmatprep.subr.bf16.mxu0 0
    %1757 = vmatpush1.bf16.msra.mxu0 0
    %1758 = vmatprep.subr.bf16.mxu0 0
    %1759 = vmatpush1.bf16.msra.mxu0 0
    %1760 = vmatprep.subr.bf16.mxu0 0
    %1761 = vmatpush1.bf16.msra.mxu0 0
    %1762 = vmatprep.subr.bf16.mxu0 0
    %1763 = vmatpush1.bf16.msra.mxu0 0
    %1764 = vmatprep.subr.bf16.mxu0 0
    %1765 = vmatpush1.bf16.msra.mxu0 0
    %1766 = vmatprep.subr.bf16.mxu0 0
    %1767 = vmatpush1.bf16.msra.mxu0 0
    %1768 = vmatprep.subr.bf16.mxu0 0
    %1769 = vmatpush1.bf16.msra.mxu0 0
    %1770 = vmatprep.subr.bf16.mxu0 0
    %1771 = vmatpush1.bf16.msra.mxu0 0
    %1772 = vmatprep.subr.bf16.mxu0 0
    %1773 = vmatpush1.bf16.msra.mxu0 0
    %1774 = vmatprep.subr.bf16.mxu0 0
    %1775 = vmatpush1.bf16.msra.mxu0 0
    %1776 = vmatprep.mubr.bf16.mxu0 0
    %1777 = vmatmul.mubr.bf16.gmra.mrb[0].mxu0 %v1339
    %v1778 = vpop.f32.mrb[0].mxu0
    %v1779 = vadd.f32 %v1742, %v1778
    %v1780 = vpop.f32.mrb[0].mxu0
    %v1781 = vpop.f32.mrb[0].mxu0
    %v1782 = vadd.f32 %v1742, %v1781
    %v1783 = vpop.f32.mrb[0].mxu0
    %1784 = vdwg.mxu0
    %v1785 = vpack.c.bf16 %v1682, %v1679
    %v1786 = vpack.c.bf16 %v1732, %v1729
    %v1788 = vsel %vm551, %v1785, 0
    %v1791 = vsel %vm551, %v1786, 0
    %1793 = vmatprep.subr.bf16.mxu0 0
    %1794 = vmatpush1.bf16.xpose.msra.mxu0 %v1791
    %1795 = vmatprep.subr.bf16.mxu0 0
    %1796 = vmatpush1.bf16.xpose.msra.mxu0 0
    %1797 = vmatprep.subr.bf16.mxu0 0
    %1798 = vmatpush1.bf16.xpose.msra.mxu0 0
    %1799 = vmatprep.subr.bf16.mxu0 0
    %1800 = vmatpush1.bf16.xpose.msra.mxu0 0
    %1801 = vmatprep.subr.bf16.mxu0 0
    %1802 = vmatpush1.bf16.xpose.msra.mxu0 0
    %1803 = vmatprep.subr.bf16.mxu0 0
    %1804 = vmatpush1.bf16.xpose.msra.mxu0 0
    %1805 = vmatprep.subr.bf16.mxu0 0
    %1806 = vmatpush1.bf16.xpose.msra.mxu0 0
    %1807 = vmatprep.subr.bf16.mxu0 0
    %1808 = vmatpush1.bf16.xpose.msra.mxu0 0
    %1809 = vmatprep.subr.bf16.mxu0 0
    %1810 = vmatpush1.bf16.xpose.msra.mxu0 0
    %1811 = vmatprep.subr.bf16.mxu0 0
    %1812 = vmatpush1.bf16.xpose.msra.mxu0 0
    %1813 = vmatprep.subr.bf16.mxu0 0
    %1814 = vmatpush1.bf16.xpose.msra.mxu0 0
    %1815 = vmatprep.subr.bf16.mxu0 0
    %1816 = vmatpush1.bf16.xpose.msra.mxu0 0
    %1817 = vmatprep.subr.bf16.mxu0 0
    %1818 = vmatpush1.bf16.xpose.msra.mxu0 0
    %1819 = vmatprep.subr.bf16.mxu0 0
    %1820 = vmatpush1.bf16.xpose.msra.mxu0 0
    %1821 = vmatprep.subr.bf16.mxu0 0
    %1822 = vmatpush1.bf16.xpose.msra.mxu0 0
    %1823 = vmatprep.subr.bf16.mxu0 0
    %1824 = vmatpush1.bf16.xpose.msra.mxu0 0
    %1825 = vmatprep.mubr.bf16.mxu0 0
    %1826 = vmatmul.mubr.bf16.gmra.mrb[0].mxu0 %v1788
    %v1827 = vpop.f32.mrb[0].mxu0
    %v1828 = vadd.f32 %v351, %v1827
    %v1829 = vpop.f32.mrb[0].mxu0
    %v1830 = vpop.f32.mrb[0].mxu0
    %v1831 = vadd.f32 %v352, %v1830
    %v1832 = vpop.f32.mrb[0].mxu0
    %1833 = vdwg.mxu0
    %v1834 = vsel %vm551, %v1828, -inf
    %1835 = vmax.xlane.f32.xlu0 %v1834
    %v1836 = vpop.xlane.xlu0 %1835
    %v1837 = vsel %vm551, %v1831, -inf
    %1838 = vmax.xlane.f32.xlu0 %v1837
    %v1839 = vpop.xlane.xlu0 %1838
    %v1840 = vsub.f32 %v1828, %v1836
    %v1841 = vsub.f32 %v1831, %v1839
    %v1842 = vmul.f32 %v1840, 1.442695
    %v1843 = vpow.pop %v1842
    %v1844 = vmul.f32 %v1841, 1.442695
    %v1845 = vpow.pop %v1844
    %v1846 = vsel %vm551, %v1843, 0.0
    %1847 = vadd.xlane.f32.xlu0 %v1846
    %v1848 = vpop.xlane.xlu0 %1847
    %v1849 = vsel %vm551, %v1845, 0.0
    %1850 = vadd.xlane.f32.xlu0 %v1849
    %v1851 = vpop.xlane.xlu0 %1850
    %v1852 = vrcp.pop %v1848
    %v1853 = vrcp.pop %v1851
    %v1854 = vmul.f32 %v1843, %v1852
    %v1855 = vmul.f32 %v1845, %v1853
    %v1856 = vpack.c.bf16 %v1855, %v1854
    %v1857 = vpack.c.bf16 %v1782, %v1779
    %v1859 = vsel %vm551, %v1856, 0
    %1861 = vmatprep.subr.bf16.mxu0 0
    %1862 = vmatpush1.bf16.msra.mxu0 %v1857
    %1863 = vmatprep.subr.bf16.mxu0 0
    %1864 = vmatpush1.bf16.msra.mxu0 0
    %1865 = vmatprep.subr.bf16.mxu0 0
    %1866 = vmatpush1.bf16.msra.mxu0 0
    %1867 = vmatprep.subr.bf16.mxu0 0
    %1868 = vmatpush1.bf16.msra.mxu0 0
    %1869 = vmatprep.subr.bf16.mxu0 0
    %1870 = vmatpush1.bf16.msra.mxu0 0
    %1871 = vmatprep.subr.bf16.mxu0 0
    %1872 = vmatpush1.bf16.msra.mxu0 0
    %1873 = vmatprep.subr.bf16.mxu0 0
    %1874 = vmatpush1.bf16.msra.mxu0 0
    %1875 = vmatprep.subr.bf16.mxu0 0
    %1876 = vmatpush1.bf16.msra.mxu0 0
    %1877 = vmatprep.subr.bf16.mxu0 0
    %1878 = vmatpush1.bf16.msra.mxu0 0
    %1879 = vmatprep.subr.bf16.mxu0 0
    %1880 = vmatpush1.bf16.msra.mxu0 0
    %1881 = vmatprep.subr.bf16.mxu0 0
    %1882 = vmatpush1.bf16.msra.mxu0 0
    %1883 = vmatprep.subr.bf16.mxu0 0
    %1884 = vmatpush1.bf16.msra.mxu0 0
    %1885 = vmatprep.subr.bf16.mxu0 0
    %1886 = vmatpush1.bf16.msra.mxu0 0
    %1887 = vmatprep.subr.bf16.mxu0 0
    %1888 = vmatpush1.bf16.msra.mxu0 0
    %1889 = vmatprep.subr.bf16.mxu0 0
    %1890 = vmatpush1.bf16.msra.mxu0 0
    %1891 = vmatprep.subr.bf16.mxu0 0
    %1892 = vmatpush1.bf16.msra.mxu0 0
    %1893 = vmatprep.mubr.bf16.mxu0 0
    %1894 = vmatmul.mubr.bf16.gmra.mrb[0].mxu0 %v1859
    %v1895 = vpop.f32.mrb[0].mxu0
    %v1896 = vadd.f32 0.0, %v1895
    %v1897 = vpop.f32.mrb[0].mxu0
    %v1898 = vpop.f32.mrb[0].mxu0
    %v1899 = vadd.f32 0.0, %v1898
    %v1900 = vpop.f32.mrb[0].mxu0
    %1901 = vdwg.mxu0
    %v1902 = vld [vmem:[%s1631 + $0x8] sm:$0xf]
    %v1903 = vld [vmem:[%s1631 + $0xc] sm:$0xf]
    %v1904 = vpack.c.bf16 %v1899, %v1896
    %v1907 = vunpack.c.l.b16 %v1902
    %v1908 = vunpack.c.l.b16 %v1903
    %v1909 = vpack.c.b16 %v1908, %v1907
    %v1912 = vsel %vm551, %v1904, 0
    %1914 = vmatprep.subr.bf16.mxu0 0
    %1915 = vmatpush1.bf16.msra.mxu0 %v1909
    %1916 = vmatprep.subr.bf16.mxu0 0
    %1917 = vmatpush1.bf16.msra.mxu0 0
    %1918 = vmatprep.subr.bf16.mxu0 0
    %1919 = vmatpush1.bf16.msra.mxu0 0
    %1920 = vmatprep.subr.bf16.mxu0 0
    %1921 = vmatpush1.bf16.msra.mxu0 0
    %1922 = vmatprep.subr.bf16.mxu0 0
    %1923 = vmatpush1.bf16.msra.mxu0 0
    %1924 = vmatprep.subr.bf16.mxu0 0
    %1925 = vmatpush1.bf16.msra.mxu0 0
    %1926 = vmatprep.subr.bf16.mxu0 0
    %1927 = vmatpush1.bf16.msra.mxu0 0
    %1928 = vmatprep.subr.bf16.mxu0 0
    %1929 = vmatpush1.bf16.msra.mxu0 0
    %1930 = vmatprep.subr.bf16.mxu0 0
    %1931 = vmatpush1.bf16.msra.mxu0 0
    %1932 = vmatprep.subr.bf16.mxu0 0
    %1933 = vmatpush1.bf16.msra.mxu0 0
    %1934 = vmatprep.subr.bf16.mxu0 0
    %1935 = vmatpush1.bf16.msra.mxu0 0
    %1936 = vmatprep.subr.bf16.mxu0 0
    %1937 = vmatpush1.bf16.msra.mxu0 0
    %1938 = vmatprep.subr.bf16.mxu0 0
    %1939 = vmatpush1.bf16.msra.mxu0 0
    %1940 = vmatprep.subr.bf16.mxu0 0
    %1941 = vmatpush1.bf16.msra.mxu0 0
    %1942 = vmatprep.subr.bf16.mxu0 0
    %1943 = vmatpush1.bf16.msra.mxu0 0
    %1944 = vmatprep.subr.bf16.mxu0 0
    %1945 = vmatpush1.bf16.msra.mxu0 0
    %1946 = vmatprep.mubr.bf16.mxu0 0
    %1947 = vmatmul.mubr.bf16.gmra.mrb[0].mxu0 %v1912
    %v1948 = vpop.f32.mrb[0].mxu0
    %v1949 = vadd.f32 0.0, %v1948
    %v1950 = vpop.f32.mrb[0].mxu0
    %v1951 = vpop.f32.mrb[0].mxu0
    %v1952 = vadd.f32 0.0, %v1951
    %v1953 = vpop.f32.mrb[0].mxu0
    %1954 = vdwg.mxu0
    %v1957 = vunpack.c.l.b16 %v1632
    %v1958 = vunpack.c.l.b16 %v1633
    %v1959 = vpack.c.b16 %v1958, %v1957
    %v1962 = vsel %vm551, %v1634, 0
    %1964 = vmatprep.subr.bf16.mxu0 0
    %1965 = vmatpush1.bf16.msra.mxu0 %v1959
    %1966 = vmatprep.subr.bf16.mxu0 0
    %1967 = vmatpush1.bf16.msra.mxu0 0
    %1968 = vmatprep.subr.bf16.mxu0 0
    %1969 = vmatpush1.bf16.msra.mxu0 0
    %1970 = vmatprep.subr.bf16.mxu0 0
    %1971 = vmatpush1.bf16.msra.mxu0 0
    %1972 = vmatprep.subr.bf16.mxu0 0
    %1973 = vmatpush1.bf16.msra.mxu0 0
    %1974 = vmatprep.subr.bf16.mxu0 0
    %1975 = vmatpush1.bf16.msra.mxu0 0
    %1976 = vmatprep.subr.bf16.mxu0 0
    %1977 = vmatpush1.bf16.msra.mxu0 0
    %1978 = vmatprep.subr.bf16.mxu0 0
    %1979 = vmatpush1.bf16.msra.mxu0 0
    %1980 = vmatprep.subr.bf16.mxu0 0
    %1981 = vmatpush1.bf16.msra.mxu0 0
    %1982 = vmatprep.subr.bf16.mxu0 0
    %1983 = vmatpush1.bf16.msra.mxu0 0
    %1984 = vmatprep.subr.bf16.mxu0 0
    %1985 = vmatpush1.bf16.msra.mxu0 0
    %1986 = vmatprep.subr.bf16.mxu0 0
    %1987 = vmatpush1.bf16.msra.mxu0 0
    %1988 = vmatprep.subr.bf16.mxu0 0
    %1989 = vmatpush1.bf16.msra.mxu0 0
    %1990 = vmatprep.subr.bf16.mxu0 0
    %1991 = vmatpush1.bf16.msra.mxu0 0
    %1992 = vmatprep.subr.bf16.mxu0 0
    %1993 = vmatpush1.bf16.msra.mxu0 0
    %1994 = vmatprep.subr.bf16.mxu0 0
    %1995 = vmatpush1.bf16.msra.mxu0 0
    %1996 = vmatprep.mubr.bf16.mxu0 0
    %1997 = vmatmul.mubr.bf16.gmra.mrb[0].mxu0 %v1962
    %v1998 = vpop.f32.mrb[0].mxu0
    %v1999 = vadd.f32 %v1949, %v1998
    %v2000 = vpop.f32.mrb[0].mxu0
    %v2001 = vpop.f32.mrb[0].mxu0
    %v2002 = vadd.f32 %v1952, %v2001
    %v2003 = vpop.f32.mrb[0].mxu0
    %2004 = vdwg.mxu0
    %s2005 = scalar_lea.vmem %s14, 1
    %v2006 = vld [vmem:[%s2005] sm:$0x1]
    %v2008 = vlaneseq
    %v2009 = vshrl.u32 %v2008, 7
    %v2010 = vsub.s32 0, %v2009
    %v2011 = vrot.slane %v2006, %v2010
    %v2013 = vadd.f32 %v1999, %v2011
    %v2014 = vadd.f32 %v2002, %v2011
    %v2015 = vadd.f32 %v1310, %v2013
    %v2016 = vadd.f32 %v1311, %v2014
    %s2017 = scalar_lea.vmem %s15, 1
    %v2018 = vld [vmem:[%s2017] sm:$0x1]
    %s2019 = scalar_lea.vmem %s16, 1
    %v2020 = vld [vmem:[%s2019] sm:$0x1]
    %v2021 = vsel %vm283, %v2015, 0.0
    %2022 = vadd.xlane.f32.xlu0 %v2021
    %v2023 = vpop.xlane.xlu0 %2022
    %v2024 = vsel %vm283, %v2016, 0.0
    %2025 = vadd.xlane.f32.xlu0 %v2024
    %v2026 = vpop.xlane.xlu0 %2025
    %v2027 = vmul.f32 %v2023, %v290
    %v2028 = vmul.f32 %v2026, %v290
    %v2029 = vsub.f32 %v2015, %v2027
    %v2030 = vsub.f32 %v2016, %v2028
    %v2031 = vmul.f32 %v2029, %v2029
    %v2032 = vmul.f32 %v2030, %v2030
    %v2033 = vsel %vm283, %v2031, 0.0
    %2034 = vadd.xlane.f32.xlu0 %v2033
    %v2035 = vpop.xlane.xlu0 %2034
    %v2036 = vsel %vm283, %v2032, 0.0
    %2037 = vadd.xlane.f32.xlu0 %v2036
    %v2038 = vpop.xlane.xlu0 %2037
    %v2039 = vmul.f32 %v2035, %v290
    %v2040 = vmul.f32 %v2038, %v290
    %v2041 = vadd.f32 %v2039, 1e-12
    %v2042 = vadd.f32 %v2040, 1e-12
    %v2043 = vrsqrt.pop %v2041
    %v2044 = vrsqrt.pop %v2042
    %v2045 = vmul.f32 %v2029, %v2043
    %v2046 = vmul.f32 %v2030, %v2044
    %v2048 = vlaneseq
    %v2049 = vshrl.u32 %v2048, 7
    %v2050 = vsub.s32 0, %v2049
    %v2051 = vrot.slane %v2018, %v2050
    %v2053 = vmul.f32 %v2045, %v2051
    %v2054 = vmul.f32 %v2046, %v2051
    %v2056 = vlaneseq
    %v2057 = vshrl.u32 %v2056, 7
    %v2058 = vsub.s32 0, %v2057
    %v2059 = vrot.slane %v2020, %v2058
    %v2061 = vadd.f32 %v2053, %v2059
    %v2062 = vadd.f32 %v2054, %v2059
    %s2063 = scalar_lea.vmem %s17, 16
    %v2064 = vld [vmem:[%s2063] sm:$0xf]
    %v2065 = vld [vmem:[%s2063 + $0x4] sm:$0xf]
    %v2066 = vld [vmem:[%s2063 + $0x8] sm:$0xf]
    %v2067 = vld [vmem:[%s2063 + $0xc] sm:$0xf]
    %v2068 = vpack.c.bf16 %v2062, %v2061
    %s2069 = scalar_lea.vmem [#allocation5], 1
    %v2070 = vld [vmem:[%s2069] sm:$0x1]
    %v2072 = vlaneseq
    %v2073 = vshrl.u32 %v2072, 7
    %v2074 = vsub.s32 0, %v2073
    %v2075 = vrot.slane %v2070, %v2074
    %v2081 = vunpack.c.l.b16 %v2064
    %v2082 = vunpack.c.l.b16 %v2065
    %v2083 = vunpack.c.l.b16 %v2066
    %v2084 = vunpack.c.l.b16 %v2067
    %v2085 = vpack.c.b16 %v2082, %v2081
    %v2086 = vpack.c.b16 %v2084, %v2083
    %v2090 = vsel %vm283, %v2068, 0
    %2092 = vmatprep.subr.bf16.mxu0 0
    %2093 = vmatpush1.bf16.msra.mxu0 %v2085
    %2094 = vmatprep.subr.bf16.mxu0 0
    %2095 = vmatpush1.bf16.msra.mxu0 %v2086
    %2096 = vmatprep.subr.bf16.mxu0 0
    %2097 = vmatpush1.bf16.msra.mxu0 0
    %2098 = vmatprep.subr.bf16.mxu0 0
    %2099 = vmatpush1.bf16.msra.mxu0 0
    %2100 = vmatprep.subr.bf16.mxu0 0
    %2101 = vmatpush1.bf16.msra.mxu0 0
    %2102 = vmatprep.subr.bf16.mxu0 0
    %2103 = vmatpush1.bf16.msra.mxu0 0
    %2104 = vmatprep.subr.bf16.mxu0 0
    %2105 = vmatpush1.bf16.msra.mxu0 0
    %2106 = vmatprep.subr.bf16.mxu0 0
    %2107 = vmatpush1.bf16.msra.mxu0 0
    %2108 = vmatprep.subr.bf16.mxu0 0
    %2109 = vmatpush1.bf16.msra.mxu0 0
    %2110 = vmatprep.subr.bf16.mxu0 0
    %2111 = vmatpush1.bf16.msra.mxu0 0
    %2112 = vmatprep.subr.bf16.mxu0 0
    %2113 = vmatpush1.bf16.msra.mxu0 0
    %2114 = vmatprep.subr.bf16.mxu0 0
    %2115 = vmatpush1.bf16.msra.mxu0 0
    %2116 = vmatprep.subr.bf16.mxu0 0
    %2117 = vmatpush1.bf16.msra.mxu0 0
    %2118 = vmatprep.subr.bf16.mxu0 0
    %2119 = vmatpush1.bf16.msra.mxu0 0
    %2120 = vmatprep.subr.bf16.mxu0 0
    %2121 = vmatpush1.bf16.msra.mxu0 0
    %2122 = vmatprep.subr.bf16.mxu0 0
    %2123 = vmatpush1.bf16.msra.mxu0 0
    %2124 = vmatprep.mubr.bf16.mxu0 0
    %2125 = vmatmul.mubr.bf16.gmra.mrb[0].mxu0 %v2090
    %v2126 = vpop.f32.mrb[0].mxu0
    %v2127 = vadd.f32 %v2075, %v2126
    %v2128 = vpop.f32.mrb[0].mxu0
    %v2129 = vpop.f32.mrb[0].mxu0
    %v2130 = vadd.f32 %v2075, %v2129
    %v2131 = vpop.f32.mrb[0].mxu0
    %2132 = vdwg.mxu0
    %v2133 = vmul.f32 %v2127, %v2127
    %v2134 = vmul.f32 %v2130, %v2130
    %v2135 = vmul.f32 %v2127, %v2133
    %v2136 = vmul.f32 %v2130, %v2134
    %v2137 = vmul.f32 %v2135, 0.044715
    %v2138 = vmul.f32 %v2136, 0.044715
    %v2139 = vadd.f32 %v2127, %v2137
    %v2140 = vadd.f32 %v2130, %v2138
    %v2141 = vmul.f32 %v2139, 0.7978846
    %v2142 = vmul.f32 %v2140, 0.7978846
    %v2143 = vtanh.pop %v2141
    %v2144 = vtanh.pop %v2142
    %v2145 = vadd.f32 %v2143, 1.0
    %v2146 = vadd.f32 %v2144, 1.0
    %v2147 = vmul.f32 %v2145, 0.5
    %v2148 = vmul.f32 %v2146, 0.5
    %v2149 = vmul.f32 %v2127, %v2147
    %v2150 = vmul.f32 %v2130, %v2148
    %s2151 = scalar_lea.vmem %s19, 32
    %v2152 = vld [vmem:[%s2151] sm:$0xf]
    %v2153 = vld [vmem:[%s2151 + $0x4] sm:$0xf]
    %v2154 = vld [vmem:[%s2151 + $0x8] sm:$0xf]
    %v2155 = vld [vmem:[%s2151 + $0xc] sm:$0xf]
    %v2156 = vld [vmem:[%s2151 + $0x10] sm:$0xf]
    %v2157 = vld [vmem:[%s2151 + $0x14] sm:$0xf]
    %v2158 = vld [vmem:[%s2151 + $0x18] sm:$0xf]
    %v2159 = vld [vmem:[%s2151 + $0x1c] sm:$0xf]
    %v2160 = vpack.c.bf16 %v2150, %v2149
    %s2161 = scalar_lea.vmem [#allocation8], 1
    %v2162 = vld [vmem:[%s2161] sm:$0x1]
    %v2164 = vlaneseq
    %v2165 = vshrl.u32 %v2164, 7
    %v2166 = vsub.s32 0, %v2165
    %v2167 = vrot.slane %v2162, %v2166
    %v2177 = vunpack.c.l.b16 %v2152
    %v2178 = vunpack.c.l.b16 %v2153
    %v2179 = vunpack.c.l.b16 %v2154
    %v2180 = vunpack.c.l.b16 %v2155
    %v2181 = vunpack.c.l.b16 %v2156
    %v2182 = vunpack.c.l.b16 %v2157
    %v2183 = vunpack.c.l.b16 %v2158
    %v2184 = vunpack.c.l.b16 %v2159
    %v2185 = vpack.c.b16 %v2178, %v2177
    %v2186 = vpack.c.b16 %v2180, %v2179
    %v2187 = vpack.c.b16 %v2182, %v2181
    %v2188 = vpack.c.b16 %v2184, %v2183
    %v2194 = vsel %vm1221, %v2160, 0
    %2196 = vmatprep.subr.bf16.mxu0 0
    %2197 = vmatpush1.bf16.msra.mxu0 %v2185
    %2198 = vmatprep.subr.bf16.mxu0 0
    %2199 = vmatpush1.bf16.msra.mxu0 %v2186
    %2200 = vmatprep.subr.bf16.mxu0 0
    %2201 = vmatpush1.bf16.msra.mxu0 %v2187
    %2202 = vmatprep.subr.bf16.mxu0 0
    %2203 = vmatpush1.bf16.msra.mxu0 %v2188
    %2204 = vmatprep.subr.bf16.mxu0 0
    %2205 = vmatpush1.bf16.msra.mxu0 0
    %2206 = vmatprep.subr.bf16.mxu0 0
    %2207 = vmatpush1.bf16.msra.mxu0 0
    %2208 = vmatprep.subr.bf16.mxu0 0
    %2209 = vmatpush1.bf16.msra.mxu0 0
    %2210 = vmatprep.subr.bf16.mxu0 0
    %2211 = vmatpush1.bf16.msra.mxu0 0
    %2212 = vmatprep.subr.bf16.mxu0 0
    %2213 = vmatpush1.bf16.msra.mxu0 0
    %2214 = vmatprep.subr.bf16.mxu0 0
    %2215 = vmatpush1.bf16.msra.mxu0 0
    %2216 = vmatprep.subr.bf16.mxu0 0
    %2217 = vmatpush1.bf16.msra.mxu0 0
    %2218 = vmatprep.subr.bf16.mxu0 0
    %2219 = vmatpush1.bf16.msra.mxu0 0
    %2220 = vmatprep.subr.bf16.mxu0 0
    %2221 = vmatpush1.bf16.msra.mxu0 0
    %2222 = vmatprep.subr.bf16.mxu0 0
    %2223 = vmatpush1.bf16.msra.mxu0 0
    %2224 = vmatprep.subr.bf16.mxu0 0
    %2225 = vmatpush1.bf16.msra.mxu0 0
    %2226 = vmatprep.subr.bf16.mxu0 0
    %2227 = vmatpush1.bf16.msra.mxu0 0
    %2228 = vmatprep.mubr.bf16.mxu0 0
    %2229 = vmatmul.mubr.bf16.gmra.mrb[0].mxu0 %v2194
    %v2230 = vpop.f32.mrb[0].mxu0
    %v2231 = vadd.f32 %v2167, %v2230
    %v2232 = vpop.f32.mrb[0].mxu0
    %v2233 = vpop.f32.mrb[0].mxu0
    %v2234 = vadd.f32 %v2167, %v2233
    %v2235 = vpop.f32.mrb[0].mxu0
    %2236 = vdwg.mxu0
    %v2237 = vadd.f32 %v2061, %v2231
    %v2238 = vadd.f32 %v2062, %v2234
    %s2239 = scalar_lea.vmem %s21, 1
    %v2240 = vld [vmem:[%s2239] sm:$0x1]
    %s2241 = scalar_lea.vmem %s22, 1
    %v2242 = vld [vmem:[%s2241] sm:$0x1]
    %v2243 = vsel %vm283, %v2237, 0.0
    %2244 = vadd.xlane.f32.xlu0 %v2243
    %v2245 = vpop.xlane.xlu0 %2244
    %v2246 = vsel %vm283, %v2238, 0.0
    %2247 = vadd.xlane.f32.xlu0 %v2246
    %v2248 = vpop.xlane.xlu0 %2247
    %v2249 = vmul.f32 %v2245, %v290
    %v2250 = vmul.f32 %v2248, %v290
    %v2251 = vsub.f32 %v2237, %v2249
    %v2252 = vsub.f32 %v2238, %v2250
    %v2253 = vmul.f32 %v2251, %v2251
    %v2254 = vmul.f32 %v2252, %v2252
    %v2255 = vsel %vm283, %v2253, 0.0
    %2256 = vadd.xlane.f32.xlu0 %v2255
    %v2257 = vpop.xlane.xlu0 %2256
    %v2258 = vsel %vm283, %v2254, 0.0
    %2259 = vadd.xlane.f32.xlu0 %v2258
    %v2260 = vpop.xlane.xlu0 %2259
    %v2261 = vmul.f32 %v2257, %v290
    %v2262 = vmul.f32 %v2260, %v290
    %v2263 = vadd.f32 %v2261, 1e-12
    %v2264 = vadd.f32 %v2262, 1e-12
    %v2265 = vrsqrt.pop %v2263
    %v2266 = vrsqrt.pop %v2264
    %v2267 = vmul.f32 %v2251, %v2265
    %v2268 = vmul.f32 %v2252, %v2266
    %v2270 = vlaneseq
    %v2271 = vshrl.u32 %v2270, 7
    %v2272 = vsub.s32 0, %v2271
    %v2273 = vrot.slane %v2240, %v2272
    %v2275 = vmul.f32 %v2267, %v2273
    %v2276 = vmul.f32 %v2268, %v2273
    %v2278 = vlaneseq
    %v2279 = vshrl.u32 %v2278, 7
    %v2280 = vsub.s32 0, %v2279
    %v2281 = vrot.slane %v2242, %v2280
    %v2283 = vadd.f32 %v2275, %v2281
    %v2284 = vadd.f32 %v2276, %v2281
    %v2286 = vrot.slane %v2284, 7
    %v2288 = vsel %vm257, %v2283, %v2286
    %v2289 = vld [vmem:[%s23] sm:$0xf]
    %v2290 = vld [vmem:[%s23 + $0x4] sm:$0xf]
    %v2291 = vld [vmem:[%s23 + $0x8] sm:$0xf]
    %v2292 = vld [vmem:[%s23 + $0xc] sm:$0xf]
    %v2293 = vpack.c.bf16 %v2288, %v2288
    %v2294 = vld [vmem:[%s24] sm:$0x1]
    %v2296 = vlaneseq
    %v2297 = vshrl.u32 %v2296, 7
    %v2298 = vsub.s32 0, %v2297
    %v2299 = vrot.slane %v2294, %v2298
    %v2305 = vunpack.c.l.b16 %v2289
    %v2306 = vunpack.c.l.b16 %v2290
    %v2307 = vunpack.c.l.b16 %v2291
    %v2308 = vunpack.c.l.b16 %v2292
    %v2309 = vpack.c.b16 %v2306, %v2305
    %v2310 = vpack.c.b16 %v2308, %v2307
    %v2314 = vsel %vm283, %v2293, 0
    %2316 = vmatprep.subr.bf16.mxu0 0
    %2317 = vmatpush1.bf16.msra.mxu0 %v2309
    %2318 = vmatprep.subr.bf16.mxu0 0
    %2319 = vmatpush1.bf16.msra.mxu0 %v2310
    %2320 = vmatprep.subr.bf16.mxu0 0
    %2321 = vmatpush1.bf16.msra.mxu0 0
    %2322 = vmatprep.subr.bf16.mxu0 0
    %2323 = vmatpush1.bf16.msra.mxu0 0
    %2324 = vmatprep.subr.bf16.mxu0 0
    %2325 = vmatpush1.bf16.msra.mxu0 0
    %2326 = vmatprep.subr.bf16.mxu0 0
    %2327 = vmatpush1.bf16.msra.mxu0 0
    %2328 = vmatprep.subr.bf16.mxu0 0
    %2329 = vmatpush1.bf16.msra.mxu0 0
    %2330 = vmatprep.subr.bf16.mxu0 0
    %2331 = vmatpush1.bf16.msra.mxu0 0
    %2332 = vmatprep.subr.bf16.mxu0 0
    %2333 = vmatpush1.bf16.msra.mxu0 0
    %2334 = vmatprep.subr.bf16.mxu0 0
    %2335 = vmatpush1.bf16.msra.mxu0 0
    %2336 = vmatprep.subr.bf16.mxu0 0
    %2337 = vmatpush1.bf16.msra.mxu0 0
    %2338 = vmatprep.subr.bf16.mxu0 0
    %2339 = vmatpush1.bf16.msra.mxu0 0
    %2340 = vmatprep.subr.bf16.mxu0 0
    %2341 = vmatpush1.bf16.msra.mxu0 0
    %2342 = vmatprep.subr.bf16.mxu0 0
    %2343 = vmatpush1.bf16.msra.mxu0 0
    %2344 = vmatprep.subr.bf16.mxu0 0
    %2345 = vmatpush1.bf16.msra.mxu0 0
    %2346 = vmatprep.subr.bf16.mxu0 0
    %2347 = vmatpush1.bf16.msra.mxu0 0
    %2348 = vmatprep.mubr.bf16.mxu0 0
    %2349 = vmatmul.mubr.bf16.gmra.mrb[0].mxu0 %v2314
    %v2350 = vpop.f32.mrb[0].mxu0
    %v2351 = vadd.f32 %v2299, %v2350
    %v2352 = vpop.f32.mrb[0].mxu0
    %v2353 = vpop.f32.mrb[0].mxu0
    %v2354 = vpop.f32.mrb[0].mxu0
    %2355 = vdwg.mxu0
    %v2356 = vtanh.pop %v2351
    %v2357 = vld [vmem:[%s25] sm:$0xf]
    %v2358 = vld [vmem:[%s25 + $0x4] sm:$0xf]
    %v2359 = vld [vmem:[%s25 + $0x8] sm:$0xf]
    %v2360 = vld [vmem:[%s25 + $0xc] sm:$0xf]
    %v2361 = vpack.c.bf16 %v2356, %v2356
    %v2362 = vld [vmem:[%s26] sm:$0x1]
    %v2364 = vlaneseq
    %v2365 = vshrl.u32 %v2364, 7
    %v2366 = vsub.s32 0, %v2365
    %v2367 = vrot.slane %v2362, %v2366
    %v2373 = vunpack.c.l.b16 %v2357
    %v2374 = vunpack.c.l.b16 %v2358
    %v2375 = vunpack.c.l.b16 %v2359
    %v2376 = vunpack.c.l.b16 %v2360
    %v2377 = vpack.c.b16 %v2374, %v2373
    %v2378 = vpack.c.b16 %v2376, %v2375
    %v2382 = vsel %vm283, %v2361, 0
    %2384 = vmatprep.subr.bf16.mxu0 0
    %2385 = vmatpush1.bf16.msra.mxu0 %v2377
    %2386 = vmatprep.subr.bf16.mxu0 0
    %2387 = vmatpush1.bf16.msra.mxu0 %v2378
    %2388 = vmatprep.subr.bf16.mxu0 0
    %2389 = vmatpush1.bf16.msra.mxu0 0
    %2390 = vmatprep.subr.bf16.mxu0 0
    %2391 = vmatpush1.bf16.msra.mxu0 0
    %2392 = vmatprep.subr.bf16.mxu0 0
    %2393 = vmatpush1.bf16.msra.mxu0 0
    %2394 = vmatprep.subr.bf16.mxu0 0
    %2395 = vmatpush1.bf16.msra.mxu0 0
    %2396 = vmatprep.subr.bf16.mxu0 0
    %2397 = vmatpush1.bf16.msra.mxu0 0
    %2398 = vmatprep.subr.bf16.mxu0 0
    %2399 = vmatpush1.bf16.msra.mxu0 0
    %2400 = vmatprep.subr.bf16.mxu0 0
    %2401 = vmatpush1.bf16.msra.mxu0 0
    %2402 = vmatprep.subr.bf16.mxu0 0
    %2403 = vmatpush1.bf16.msra.mxu0 0
    %2404 = vmatprep.subr.bf16.mxu0 0
    %2405 = vmatpush1.bf16.msra.mxu0 0
    %2406 = vmatprep.subr.bf16.mxu0 0
    %2407 = vmatpush1.bf16.msra.mxu0 0
    %2408 = vmatprep.subr.bf16.mxu0 0
    %2409 = vmatpush1.bf16.msra.mxu0 0
    %2410 = vmatprep.subr.bf16.mxu0 0
    %2411 = vmatpush1.bf16.msra.mxu0 0
    %2412 = vmatprep.subr.bf16.mxu0 0
    %2413 = vmatpush1.bf16.msra.mxu0 0
    %2414 = vmatprep.subr.bf16.mxu0 0
    %2415 = vmatpush1.bf16.msra.mxu0 0
    %2416 = vmatprep.mubr.bf16.mxu0 0
    %2417 = vmatmul.mubr.bf16.gmra.mrb[0].mxu0 %v2382
    %v2418 = vpop.f32.mrb[0].mxu0
    %v2419 = vadd.f32 %v2367, %v2418
    %v2420 = vpop.f32.mrb[0].mxu0
    %v2421 = vpop.f32.mrb[0].mxu0
    %v2422 = vpop.f32.mrb[0].mxu0
    %2423 = vdwg.mxu0
    %vm2424 = vcmask 17408
    %2425 = vst.msk [vmem:[#allocation10] sm:$0x3] %vm2424, %v2419
    %vm2426 = vcmp.lt.s32.totalorder %v331, 3
    %v2427 = vsel %vm2426, %v2419, -1e+30
    %v2428 = vsel %vm259, %v2427, -inf
    %2429 = vmax.xlane.f32.xlu0 %v2428
    %v2430 = vpop.xlane.xlu0 %2429
    %v2431 = vsub.f32 %v2419, %v2430
    %v2432 = vmul.f32 %v2431, 1.442695
    %v2433 = vpow.pop %v2432
    %v2434 = vsel %vm2426, %v2433, 0.0
    %v2435 = vsel %vm259, %v2434, 0.0
    %2436 = vadd.xlane.f32.xlu0 %v2435
    %v2437 = vpop.xlane.xlu0 %2436
    %v2438 = vlog2.pop %v2437
    %v2439 = vmul.f32 %v2438, 0.6931472
    %v2440 = vadd.f32 %v2430, %v2439
    %v2441 = vsub.f32 %v2419, %v2440
    %s2442 = sld [smem:[#allocation4]]
    %v2443 = vstv %s2442
    %vm2444 = vcmp.eq.s32.totalorder %v331, %v2443
    %v2445 = vsel %vm2444, %v2441, 0.0
    %v2446 = vsel %vm257, %v2445, 0.0
    %2447 = vadd.xlane.f32.xlu0 %v2446
    %v2448 = vpop.xlane.xlu0 %2447
    %v2449 = vadd.f32 %v2448, 0.0
    %s2450 = sld [smem:[#allocation4 + $0x1]]
    %v2451 = vstv %s2450
    %vm2452 = vcmp.eq.s32.totalorder %v331, %v2451
    %v2453 = vsel %vm2452, %v2441, 0.0
    %vm2454 = vcmask 1041409
    %v2455 = vsel %vm2454, %v2453, 0.0
    %2456 = vadd.xlane.f32.xlu0 %v2455
    %v2457 = vpop.xlane.xlu0 %2456
    %v2459 = vrot.slane %v2457, 1
    %v2461 = vadd.f32 %v2449, %v2459
    %v2462 = vsub.f32 0.0, %v2461
    %v2463 = vmul.f32 %v2462, 0.5
    %vm2464 = vcmask 0
    %2465 = vst.msk [vmem:[#allocation11] sm:$0x1] %vm2464, %v2463
    // Predicated region
    $region110: #{vefk_transformer_forward.1} parent=1 // pred_check
      _
    $region111: #{vefk_transformer_forward.1} parent=1 // pred_check_branch
      %2467 = sbr.rel (0) target = $region113
    $region112: #{vefk_transformer_forward.1} parent=1 // pred_region
      %s2469 = ssub.s32 32, 32
      %2470 = vsyncadd [#allocation7], %s2469
      %s2472 = sshll.u32 [#allocation10], 4
      %s2473 = int_to_ptr.vmem [resolvable:$true] %s2472
      %2475 = dma.vmem_to_hbm [thread:$0]  %s2473, 32, %s27, [#allocation7]
    $region113: #{vefk_transformer_forward.1} parent=1 // pred_fallthru
      _
    // Predicated region
    $region114: #{vefk_transformer_forward.1} parent=1 // pred_check
      _
    $region115: #{vefk_transformer_forward.1} parent=1 // pred_check_branch
      %2477 = sbr.rel (0) target = $region117
    $region116: #{vefk_transformer_forward.1} parent=1 // pred_region
      %s2479 = ssub.s32 16, 16
      %2480 = vsyncadd [#allocation12], %s2479
      %s2482 = sshll.u32 [#allocation11], 4
      %s2483 = int_to_ptr.vmem [resolvable:$true] %s2482
      %2485 = dma.vmem_to_hbm [thread:$0]  %s2483, 16, %s28, [#allocation12]
    $region117: #{vefk_transformer_forward.1} parent=1 // pred_fallthru
      _
    // Predicated region
    $region118: #{vefk_transformer_forward.1} parent=1 // pred_check
      _
    $region119: #{vefk_transformer_forward.1} parent=1 // pred_check_branch
      %2487 = sbr.rel (0) target = $region121
    $region120: #{vefk_transformer_forward.1} parent=1 // pred_region
      %2488 = dma.done [#allocation7], 32
    $region121: #{vefk_transformer_forward.1} parent=1 // pred_fallthru
      _
    // Predicated region
    $region122: #{vefk_transformer_forward.1} parent=1 // pred_check
      _
    $region123: #{vefk_transformer_forward.1} parent=1 // pred_check_branch
      %2490 = sbr.rel (0) target = $region125
    $region124: #{vefk_transformer_forward.1} parent=1 // pred_region
      %2491 = dma.done [#allocation12], 16
    $region125: #{vefk_transformer_forward.1} parent=1 // pred_fallthru
      _
    %2492 = vsyncpa [#allocation6], 1
    %2493 = vsyncpa [#allocation9], 1
    %2494 = vsyncpa [#allocation7], 1
    %2495 = vsyncpa [#allocation12], 1

</llo_original>
